<compile_context>
chip_gen: v6e
topology: v6e:2x2x1
jax: 0.10.0
libtpu: 0.0.40
codegen_flags: <defaults>
</compile_context>

<pallas_src>
import jax
import jax.numpy as jnp
from jax import lax
from jax.experimental import pallas as pl
from jax.experimental.pallas import tpu as pltpu

_TAR_PAD = 128   # pad the FC target dim to one full lane width


# ----------------------------------------------------------------------------
# Fused kernel: hoisted input projection + LSTM recurrence (both texts) +
# per-step max/avg pooling + feature fusion + final Linear.  Single invocation.
# ----------------------------------------------------------------------------
def _siamese_kernel(emb_ref, wih_ref, whh_ref, b_ref, wfc_ref, bfc_ref,
                    out_ref, xproj_sc, fa_sc, fb_sc):
    H = whh_ref.shape[0]
    B = fa_sc.shape[0]
    S2 = emb_ref.shape[0] // B      # stacked LSTM-batch rows: [text A | text B]
    S = S2 // 2

    # ---- Prologue: hoisted input projection for ALL recurrence steps.
    # One (B*2S, E) @ (E, 4H) bf16 MXU matmul, f32 accumulation, fused LSTM
    # bias folded in.  Removes the per-step [x|h] lane concat and the bias
    # broadcast from the serial recurrence.
    xproj_sc[...] = (
        jnp.dot(emb_ref[...], wih_ref[...], preferred_element_type=jnp.float32)
        + b_ref[...])

    # ---- Serial recurrence over the B steps (axis 0 of the original
    # (B, S, E) input -- PyTorch's default seq-first LSTM convention).
    # Fully static unroll: the whole kernel is one basic block; h/c stay in
    # vregs as loop carries.  For large B, switch to lax.fori_loop(unroll=k).
    h = jnp.zeros((S2, H), jnp.float32)
    c = jnp.zeros((S2, H), jnp.float32)
    for t in range(B):
        gates = xproj_sc[t * S2:(t + 1) * S2, :] + jnp.dot(
            h.astype(jnp.bfloat16), whh_ref[...],
            preferred_element_type=jnp.float32)            # (2S, 4H) f32
        # Gate columns were reordered at parameter-pack time to [i | f | o | g]:
        # one contiguous sigmoid slab + one tanh slab (2 EUP launches, not 4).
        sig = jax.nn.sigmoid(gates[:, :3 * H])
        g = jnp.tanh(gates[:, 3 * H:])
        i = sig[:, :H]
        f = sig[:, H:2 * H]
        o = sig[:, 2 * H:]
        c = f * c + i * g
        h = o * jnp.tanh(c)

        # Per-step max/avg pooling over the S rows of each text; one
        # lane-dense (1, 2H) = (1, 128) row store per text.
        ha = h[:S]
        hb = h[S:]
        fa_sc[t:t + 1, :] = jnp.concatenate(
            [jnp.max(ha, axis=0, keepdims=True),
             jnp.mean(ha, axis=0, keepdims=True)], axis=-1)
        fb_sc[t:t + 1, :] = jnp.concatenate(
            [jnp.max(hb, axis=0, keepdims=True),
             jnp.mean(hb, axis=0, keepdims=True)], axis=-1)

    # ---- Epilogue: feature fusion + Linear.  Dropout(0.5) is identity in
    # eval mode.  The FC target dim is padded to 128 lanes so the matmul N-dim
    # and the output store are not 2-lane degenerate (wrapper slices back).
    fa = fa_sc[...]                                        # (B, 2H)
    fb = fb_sc[...]
    fea_all = jnp.concatenate([fa, fb, jnp.abs(fa - fb), fa * fb], axis=-1)
    out_ref[...] = (
        jnp.dot(fea_all.astype(jnp.bfloat16), wfc_ref[...],
                preferred_element_type=jnp.float32)
        + bfc_ref[...])


def siamese_forward_fused(emb2d, w_ih, w_hh, b_lstm, w_fc_pad, b_fc_pad, B):
    BS2, E = emb2d.shape
    H = w_hh.shape[0]
    H4 = 4 * H
    tar_pad = w_fc_pad.shape[-1]
    return pl.pallas_call(
        _siamese_kernel,
        out_shape=jax.ShapeDtypeStruct((B, tar_pad), jnp.float32),
        grid_spec=pltpu.PrefetchScalarGridSpec(
            num_scalar_prefetch=0,
            grid=(1,),                                     # single invocation
            in_specs=[
                pl.BlockSpec((BS2, E), lambda i: (0, 0)),          # embeddings (bf16)
                pl.BlockSpec((E, H4), lambda i: (0, 0)),           # W_ih (bf16)
                pl.BlockSpec((H, H4), lambda i: (0, 0)),           # W_hh (bf16)
                pl.BlockSpec((1, H4), lambda i: (0, 0)),           # fused LSTM bias (f32)
                pl.BlockSpec((8 * H, tar_pad), lambda i: (0, 0)),  # FC weight (bf16, padded)
                pl.BlockSpec((1, tar_pad), lambda i: (0, 0)),      # FC bias (f32, padded)
            ],
            out_specs=pl.BlockSpec((B, tar_pad), lambda i: (0, 0)),
            scratch_shapes=[
                pltpu.VMEM((BS2, H4), jnp.float32),   # hoisted input projection
                pltpu.VMEM((B, 2 * H), jnp.float32),  # pooled features, text A
                pltpu.VMEM((B, 2 * H), jnp.float32),  # pooled features, text B
            ],
        ),
        compiler_params=pltpu.CompilerParams(
            dimension_semantics=("arbitrary",),       # serial recurrence
            # Everything here is < 1 MiB; the explicit limit just documents
            # headroom for larger E/S/B (v5e/v6e scoped defaults are 16/32 MiB).
            vmem_limit_bytes=32 * 1024 * 1024),
    )(emb2d, w_ih, w_hh, b_lstm, w_fc_pad, b_fc_pad)


# ----------------------------------------------------------------------------
# Parameter packing (kernel layout) and full forward wrapper.
# ----------------------------------------------------------------------------
def _reorder_gates(w, H):
    """Columns [i | f | g | o] (reference order) -> [i | f | o | g] (kernel)."""
    return jnp.concatenate(
        [w[..., :2 * H], w[..., 3 * H:4 * H], w[..., 2 * H:3 * H]], axis=-1)


def _pack_params(params):
    """Kernel-layout params: gate-reordered, bf16 matmul operands, padded FC."""
    H = params["w_hh"].shape[0]
    tar = params["w_fc"].shape[-1]
    w_ih = _reorder_gates(params["w_ih"], H).astype(jnp.bfloat16)
    w_hh = _reorder_gates(params["w_hh"], H).astype(jnp.bfloat16)
    b_lstm = _reorder_gates(params["b_lstm"], H)                        # f32
    w_fc = jnp.pad(params["w_fc"], ((0, 0), (0, _TAR_PAD - tar))).astype(jnp.bfloat16)
    b_fc = jnp.pad(params["b_fc"], ((0, 0), (0, _TAR_PAD - tar)))       # f32
    return w_ih, w_hh, b_lstm, w_fc, b_fc


@jax.jit
def siamese_lstm_forward(text_a, text_b, params):
    # Embedding gather + stacking kept as plain-JAX glue: negligible traffic
    # at these sizes (could move in-kernel via scalar prefetch + Element-
    # indexed BlockSpec at realistic vocab/E/S).
    tar = params["w_fc"].shape[-1]
    emb_a = jnp.take(params["embedding"], text_a, axis=0)      # (B, S, E)
    emb_b = jnp.take(params["embedding"], text_b, axis=0)      # (B, S, E)
    emb_ab = jnp.concatenate([emb_a, emb_b], axis=1)           # (B, 2S, E)
    B, S2, E = emb_ab.shape
    emb2d = emb_ab.reshape(B * S2, E).astype(jnp.bfloat16)     # MXU operand
    w_ih, w_hh, b_lstm, w_fc, b_fc = _pack_params(params)
    out_pad = siamese_forward_fused(emb2d, w_ih, w_hh, b_lstm, w_fc, b_fc, B)
    return out_pad[:, :tar]


# ----------------------------------------------------------------------------
# Pure-JAX reference (same seq/batch-axis convention as the PyTorch code).
# `mm_dtype` lets us mirror the kernel's bf16 matmul operands exactly.
# ----------------------------------------------------------------------------
def _ref_lstm_pool(emb, w_ih, w_hh, b, H, mm_dtype):
    def step(carry, x):
        h, c = carry
        gates = (jnp.dot(x.astype(mm_dtype), w_ih.astype(mm_dtype),
                         preferred_element_type=jnp.float32)
                 + jnp.dot(h.astype(mm_dtype), w_hh.astype(mm_dtype),
                           preferred_element_type=jnp.float32)
                 + b[0])
        i = jax.nn.sigmoid(gates[:, :H])
        f = jax.nn.sigmoid(gates[:, H:2 * H])
        g = jnp.tanh(gates[:, 2 * H:3 * H])
        o = jax.nn.sigmoid(gates[:, 3 * H:])
        c = f * c + i * g
        h = o * jnp.tanh(c)
        return (h, c), h

    N = emb.shape[1]
    init = (jnp.zeros((N, H), jnp.float32), jnp.zeros((N, H), jnp.float32))
    _, hs = lax.scan(step, init, emb)                 # (B, S, H)
    return jnp.concatenate([hs.max(axis=1), hs.mean(axis=1)], axis=1)


def _ref_forward(text_a, text_b, params, mm_dtype=jnp.float32):
    H = params["w_hh"].shape[0]
    emb_a = jnp.take(params["embedding"], text_a, axis=0)
    emb_b = jnp.take(params["embedding"], text_b, axis=0)
    fa = _ref_lstm_pool(emb_a, params["w_ih"], params["w_hh"],
                        params["b_lstm"], H, mm_dtype)
    fb = _ref_lstm_pool(emb_b, params["w_ih"], params["w_hh"],
                        params["b_lstm"], H, mm_dtype)
    fea = jnp.concatenate([fa, fb, jnp.abs(fa - fb), fa * fb], axis=1)
    return (jnp.dot(fea.astype(mm_dtype), params["w_fc"].astype(mm_dtype),
                    preferred_element_type=jnp.float32) + params["b_fc"])


# ----------------------------------------------------------------------------
# Deterministic parameter init + run.
# ----------------------------------------------------------------------------
def init_params(key, vocab, E, H, tar):
    k = 1.0 / jnp.sqrt(H)
    keys = jax.random.split(key, 7)
    return {
        "embedding": jax.random.normal(keys[0], (vocab, E), jnp.float32),
        # LSTM weights stored feature-major (E,4H)/(H,4H); gate column order is
        # the reference [i | f | g | o].  (Real PyTorch checkpoints store
        # (4H,E)/(4H,H) and must be transposed before use.)
        "w_ih": jax.random.uniform(keys[1], (E, 4 * H), jnp.float32, -k, k),
        "w_hh": jax.random.uniform(keys[2], (H, 4 * H), jnp.float32, -k, k),
        # b_ih + b_hh folded into one bias, kept 2D.
        "b_lstm": (jax.random.uniform(keys[3], (1, 4 * H), jnp.float32, -k, k)
                   + jax.random.uniform(keys[4], (1, 4 * H), jnp.float32, -k, k)),
        "w_fc": jax.random.uniform(keys[5], (8 * H, tar), jnp.float32, -k, k),
        "b_fc": jax.random.uniform(keys[6], (1, tar), jnp.float32, -k, k),
    }


if __name__ == "__main__":
    VOCAB, EMBED, HID, TAR = 100, 8, 64, 2
    B, S = 8, 16

    root = jax.random.PRNGKey(0)
    k_tok_a, k_tok_b, k_par = jax.random.split(root, 3)
    text_a = jax.random.randint(k_tok_a, (B, S), 0, VOCAB, dtype=jnp.int32)
    text_b = jax.random.randint(k_tok_b, (B, S), 0, VOCAB, dtype=jnp.int32)
    params = init_params(k_par, VOCAB, EMBED, HID, TAR)

    out = jax.block_until_ready(siamese_lstm_forward(text_a, text_b, params))
    assert out.shape == (B, TAR), out.shape

    # Tight check vs. a reference that mirrors the kernel's bf16 matmul
    # operands (f32 accumulation/state): validates the kernel math exactly.
    ref_bf16 = _ref_forward(text_a, text_b, params, mm_dtype=jnp.bfloat16)
    err_bf16 = float(jnp.max(jnp.abs(out - ref_bf16)))
    assert jnp.allclose(out, ref_bf16, rtol=2e-3, atol=2e-3), f"bf16-ref err {err_bf16}"

    # Loose check vs. the full-f32 reference: bounds the bf16 quantization.
    ref_f32 = _ref_forward(text_a, text_b, params, mm_dtype=jnp.float32)
    err_f32 = float(jnp.max(jnp.abs(out - ref_f32)))
    assert jnp.allclose(out, ref_f32, rtol=5e-2, atol=5e-2), f"f32-ref err {err_f32}"

    print("KERNEL_OK")
</pallas_src>

<mosaic_0001>
module attributes {stable_mosaic.version = 11 : i64} {
  func.func @_siamese_kernel(%arg0: i32, %arg1: memref<256x8xbf16, #tpu.memory_space<vmem>>, %arg2: memref<8x256xbf16, #tpu.memory_space<vmem>>, %arg3: memref<64x256xbf16, #tpu.memory_space<vmem>>, %arg4: memref<1x256xf32, #tpu.memory_space<vmem>>, %arg5: memref<512x128xbf16, #tpu.memory_space<vmem>>, %arg6: memref<1x128xf32, #tpu.memory_space<vmem>>, %arg7: memref<8x128xf32, #tpu.memory_space<vmem>>, %arg8: memref<256x256xf32, #tpu.memory_space<vmem>>, %arg9: memref<8x128xf32, #tpu.memory_space<vmem>>, %arg10: memref<8x128xf32, #tpu.memory_space<vmem>>) attributes {dimension_semantics = [#tpu.dimension_semantics<arbitrary>], iteration_bounds = array<i64: 1>, scalar_prefetch = 0 : i64, scratch_operands = 3 : i64, tpu.core_type = #tpu.core_type<tc>, window_params = [{pipeline_mode = #tpu.pipeline_mode<synchronous>, transform_indices = @transform_0, window_bounds = array<i64: 256, 8>}, {pipeline_mode = #tpu.pipeline_mode<synchronous>, transform_indices = @transform_1, window_bounds = array<i64: 8, 256>}, {pipeline_mode = #tpu.pipeline_mode<synchronous>, transform_indices = @transform_2, window_bounds = array<i64: 64, 256>}, {pipeline_mode = #tpu.pipeline_mode<synchronous>, transform_indices = @transform_3, window_bounds = array<i64: 1, 256>}, {pipeline_mode = #tpu.pipeline_mode<synchronous>, transform_indices = @transform_4, window_bounds = array<i64: 512, 128>}, {pipeline_mode = #tpu.pipeline_mode<synchronous>, transform_indices = @transform_5, window_bounds = array<i64: 1, 128>}, {pipeline_mode = #tpu.pipeline_mode<synchronous>, transform_indices = @transform_6, window_bounds = array<i64: 8, 128>}]} {
    %c0 = arith.constant 0 : index
    %c0_0 = arith.constant 0 : index
    %0 = vector.load %arg1[%c0, %c0_0] : memref<256x8xbf16, #tpu.memory_space<vmem>>, vector<256x8xbf16>
    %c0_1 = arith.constant 0 : index
    %c0_2 = arith.constant 0 : index
    %1 = vector.load %arg2[%c0_1, %c0_2] : memref<8x256xbf16, #tpu.memory_space<vmem>>, vector<8x256xbf16>
    %cst = arith.constant dense<0.000000e+00> : vector<256x256xf32>
    %2 = tpu.matmul %0, %1, %cst {dimension_numbers = #tpu.dot_dimension_numbers<[1], [0], [0], [1], [0, 0, 1, 1], [], []>} : vector<256x8xbf16>, vector<8x256xbf16>, vector<256x256xf32> -> vector<256x256xf32>
    %c0_3 = arith.constant 0 : index
    %c0_4 = arith.constant 0 : index
    %3 = vector.load %arg4[%c0_3, %c0_4] : memref<1x256xf32, #tpu.memory_space<vmem>>, vector<1x256xf32>
    %4 = vector.broadcast %3 : vector<1x256xf32> to vector<256x256xf32>
    %5 = arith.addf %2, %4 : vector<256x256xf32>
    %c0_5 = arith.constant 0 : index
    %c0_6 = arith.constant 0 : index
    %6 = vector.load %arg8[%c0_5, %c0_6] : memref<256x256xf32, #tpu.memory_space<vmem>>, vector<256x256xf32>
    tpu.vector_store %arg8[%c0_5, %c0_6], %5 {strides = array<i32>} : memref<256x256xf32, #tpu.memory_space<vmem>>, vector<256x256xf32>,
    %cst_7 = arith.constant 0.000000e+00 : f32
    %7 = vector.broadcast %cst_7 : f32 to vector<32x64xf32>
    %cst_8 = arith.constant 0.000000e+00 : f32
    %8 = vector.broadcast %cst_8 : f32 to vector<32x64xf32>
    %c0_9 = arith.constant 0 : index
    %c0_10 = arith.constant 0 : index
    %9 = vector.load %arg8[%c0_9, %c0_10] : memref<256x256xf32, #tpu.memory_space<vmem>>, vector<32x256xf32>
    %10 = arith.truncf %7 : vector<32x64xf32> to vector<32x64xbf16>
    %c0_11 = arith.constant 0 : index
    %c0_12 = arith.constant 0 : index
    %11 = vector.load %arg3[%c0_11, %c0_12] : memref<64x256xbf16, #tpu.memory_space<vmem>>, vector<64x256xbf16>
    %cst_13 = arith.constant dense<0.000000e+00> : vector<32x256xf32>
    %12 = tpu.matmul %10, %11, %cst_13 {dimension_numbers = #tpu.dot_dimension_numbers<[1], [0], [0], [1], [0, 0, 1, 1], [], []>} : vector<32x64xbf16>, vector<64x256xbf16>, vector<32x256xf32> -> vector<32x256xf32>
    %13 = arith.addf %9, %12 : vector<32x256xf32>
    %14 = vector.extract_strided_slice %13 {offsets = [0, 0], sizes = [32, 192], strides = [1, 1]} : vector<32x256xf32> to vector<32x192xf32>
    %15 = arith.negf %14 : vector<32x192xf32>
    %16 = math.exp %15 : vector<32x192xf32>
    %cst_14 = arith.constant 1.000000e+00 : f32
    %17 = vector.broadcast %cst_14 : f32 to vector<32x192xf32>
    %18 = arith.addf %17, %16 : vector<32x192xf32>
    %19 = arith.divf %17, %18 : vector<32x192xf32>
    %20 = vector.extract_strided_slice %13 {offsets = [0, 192], sizes = [32, 64], strides = [1, 1]} : vector<32x256xf32> to vector<32x64xf32>
    %21 = math.tanh %20 : vector<32x64xf32>
    %22 = vector.extract_strided_slice %19 {offsets = [0, 0], sizes = [32, 64], strides = [1, 1]} : vector<32x192xf32> to vector<32x64xf32>
    %23 = vector.extract_strided_slice %19 {offsets = [0, 64], sizes = [32, 64], strides = [1, 1]} : vector<32x192xf32> to vector<32x64xf32>
    %24 = vector.extract_strided_slice %19 {offsets = [0, 128], sizes = [32, 64], strides = [1, 1]} : vector<32x192xf32> to vector<32x64xf32>
    %25 = arith.mulf %23, %8 : vector<32x64xf32>
    %26 = arith.mulf %22, %21 : vector<32x64xf32>
    %27 = arith.addf %25, %26 : vector<32x64xf32>
    %28 = math.tanh %27 : vector<32x64xf32>
    %29 = arith.mulf %24, %28 : vector<32x64xf32>
    %30 = vector.extract_strided_slice %29 {offsets = [0, 0], sizes = [16, 64], strides = [1, 1]} : vector<32x64xf32> to vector<16x64xf32>
    %31 = vector.extract_strided_slice %29 {offsets = [16, 0], sizes = [16, 64], strides = [1, 1]} : vector<32x64xf32> to vector<16x64xf32>
    %cst_15 = arith.constant dense<0xFF800000> : vector<64xf32>
    %32 = vector.multi_reduction <maximumf>, %30, %cst_15 [0] : vector<16x64xf32> to vector<64xf32>
    %33 = vector.shape_cast %32 : vector<64xf32> to vector<1x64xf32>
    %cst_16 = arith.constant dense<0.000000e+00> : vector<64xf32>
    %34 = vector.multi_reduction <add>, %30, %cst_16 [0] : vector<16x64xf32> to vector<64xf32>
    %35 = vector.shape_cast %34 : vector<64xf32> to vector<1x64xf32>
    %cst_17 = arith.constant 1.600000e+01 : f32
    %36 = vector.broadcast %cst_17 : f32 to vector<1x64xf32>
    %37 = arith.divf %35, %36 : vector<1x64xf32>
    %38 = tpu.concatenate %33, %37 in 1 : vector<1x64xf32>, vector<1x64xf32> -> vector<1x128xf32>
    %c0_18 = arith.constant 0 : index
    %c0_19 = arith.constant 0 : index
    %39 = vector.load %arg9[%c0_18, %c0_19] : memref<8x128xf32, #tpu.memory_space<vmem>>, vector<1x128xf32>
    tpu.vector_store %arg9[%c0_18, %c0_19], %38 {strides = array<i32>} : memref<8x128xf32, #tpu.memory_space<vmem>>, vector<1x128xf32>,
    %cst_20 = arith.constant dense<0xFF800000> : vector<64xf32>
    %40 = vector.multi_reduction <maximumf>, %31, %cst_20 [0] : vector<16x64xf32> to vector<64xf32>
    %41 = vector.shape_cast %40 : vector<64xf32> to vector<1x64xf32>
    %cst_21 = arith.constant dense<0.000000e+00> : vector<64xf32>
    %42 = vector.multi_reduction <add>, %31, %cst_21 [0] : vector<16x64xf32> to vector<64xf32>
    %43 = vector.shape_cast %42 : vector<64xf32> to vector<1x64xf32>
    %cst_22 = arith.constant 1.600000e+01 : f32
    %44 = vector.broadcast %cst_22 : f32 to vector<1x64xf32>
    %45 = arith.divf %43, %44 : vector<1x64xf32>
    %46 = tpu.concatenate %41, %45 in 1 : vector<1x64xf32>, vector<1x64xf32> -> vector<1x128xf32>
    %c0_23 = arith.constant 0 : index
    %c0_24 = arith.constant 0 : index
    %47 = vector.load %arg10[%c0_23, %c0_24] : memref<8x128xf32, #tpu.memory_space<vmem>>, vector<1x128xf32>
    tpu.vector_store %arg10[%c0_23, %c0_24], %46 {strides = array<i32>} : memref<8x128xf32, #tpu.memory_space<vmem>>, vector<1x128xf32>,
    %c32 = arith.constant 32 : index
    %c0_25 = arith.constant 0 : index
    %48 = vector.load %arg8[%c32, %c0_25] : memref<256x256xf32, #tpu.memory_space<vmem>>, vector<32x256xf32>
    %49 = arith.truncf %29 : vector<32x64xf32> to vector<32x64xbf16>
    %c0_26 = arith.constant 0 : index
    %c0_27 = arith.constant 0 : index
    %50 = vector.load %arg3[%c0_26, %c0_27] : memref<64x256xbf16, #tpu.memory_space<vmem>>, vector<64x256xbf16>
    %cst_28 = arith.constant dense<0.000000e+00> : vector<32x256xf32>
    %51 = tpu.matmul %49, %50, %cst_28 {dimension_numbers = #tpu.dot_dimension_numbers<[1], [0], [0], [1], [0, 0, 1, 1], [], []>} : vector<32x64xbf16>, vector<64x256xbf16>, vector<32x256xf32> -> vector<32x256xf32>
    %52 = arith.addf %48, %51 : vector<32x256xf32>
    %53 = vector.extract_strided_slice %52 {offsets = [0, 0], sizes = [32, 192], strides = [1, 1]} : vector<32x256xf32> to vector<32x192xf32>
    %54 = arith.negf %53 : vector<32x192xf32>
    %55 = math.exp %54 : vector<32x192xf32>
    %cst_29 = arith.constant 1.000000e+00 : f32
    %56 = vector.broadcast %cst_29 : f32 to vector<32x192xf32>
    %57 = arith.addf %56, %55 : vector<32x192xf32>
    %58 = arith.divf %56, %57 : vector<32x192xf32>
    %59 = vector.extract_strided_slice %52 {offsets = [0, 192], sizes = [32, 64], strides = [1, 1]} : vector<32x256xf32> to vector<32x64xf32>
    %60 = math.tanh %59 : vector<32x64xf32>
    %61 = vector.extract_strided_slice %58 {offsets = [0, 0], sizes = [32, 64], strides = [1, 1]} : vector<32x192xf32> to vector<32x64xf32>
    %62 = vector.extract_strided_slice %58 {offsets = [0, 64], sizes = [32, 64], strides = [1, 1]} : vector<32x192xf32> to vector<32x64xf32>
    %63 = vector.extract_strided_slice %58 {offsets = [0, 128], sizes = [32, 64], strides = [1, 1]} : vector<32x192xf32> to vector<32x64xf32>
    %64 = arith.mulf %62, %27 : vector<32x64xf32>
    %65 = arith.mulf %61, %60 : vector<32x64xf32>
    %66 = arith.addf %64, %65 : vector<32x64xf32>
    %67 = math.tanh %66 : vector<32x64xf32>
    %68 = arith.mulf %63, %67 : vector<32x64xf32>
    %69 = vector.extract_strided_slice %68 {offsets = [0, 0], sizes = [16, 64], strides = [1, 1]} : vector<32x64xf32> to vector<16x64xf32>
    %70 = vector.extract_strided_slice %68 {offsets = [16, 0], sizes = [16, 64], strides = [1, 1]} : vector<32x64xf32> to vector<16x64xf32>
    %cst_30 = arith.constant dense<0xFF800000> : vector<64xf32>
    %71 = vector.multi_reduction <maximumf>, %69, %cst_30 [0] : vector<16x64xf32> to vector<64xf32>
    %72 = vector.shape_cast %71 : vector<64xf32> to vector<1x64xf32>
    %cst_31 = arith.constant dense<0.000000e+00> : vector<64xf32>
    %73 = vector.multi_reduction <add>, %69, %cst_31 [0] : vector<16x64xf32> to vector<64xf32>
    %74 = vector.shape_cast %73 : vector<64xf32> to vector<1x64xf32>
    %cst_32 = arith.constant 1.600000e+01 : f32
    %75 = vector.broadcast %cst_32 : f32 to vector<1x64xf32>
    %76 = arith.divf %74, %75 : vector<1x64xf32>
    %77 = tpu.concatenate %72, %76 in 1 : vector<1x64xf32>, vector<1x64xf32> -> vector<1x128xf32>
    %c1 = arith.constant 1 : index
    %c0_33 = arith.constant 0 : index
    %78 = vector.load %arg9[%c1, %c0_33] : memref<8x128xf32, #tpu.memory_space<vmem>>, vector<1x128xf32>
    tpu.vector_store %arg9[%c1, %c0_33], %77 {strides = array<i32>} : memref<8x128xf32, #tpu.memory_space<vmem>>, vector<1x128xf32>,
    %cst_34 = arith.constant dense<0xFF800000> : vector<64xf32>
    %79 = vector.multi_reduction <maximumf>, %70, %cst_34 [0] : vector<16x64xf32> to vector<64xf32>
    %80 = vector.shape_cast %79 : vector<64xf32> to vector<1x64xf32>
    %cst_35 = arith.constant dense<0.000000e+00> : vector<64xf32>
    %81 = vector.multi_reduction <add>, %70, %cst_35 [0] : vector<16x64xf32> to vector<64xf32>
    %82 = vector.shape_cast %81 : vector<64xf32> to vector<1x64xf32>
    %cst_36 = arith.constant 1.600000e+01 : f32
    %83 = vector.broadcast %cst_36 : f32 to vector<1x64xf32>
    %84 = arith.divf %82, %83 : vector<1x64xf32>
    %85 = tpu.concatenate %80, %84 in 1 : vector<1x64xf32>, vector<1x64xf32> -> vector<1x128xf32>
    %c1_37 = arith.constant 1 : index
    %c0_38 = arith.constant 0 : index
    %86 = vector.load %arg10[%c1_37, %c0_38] : memref<8x128xf32, #tpu.memory_space<vmem>>, vector<1x128xf32>
    tpu.vector_store %arg10[%c1_37, %c0_38], %85 {strides = array<i32>} : memref<8x128xf32, #tpu.memory_space<vmem>>, vector<1x128xf32>,
    %c64 = arith.constant 64 : index
    %c0_39 = arith.constant 0 : index
    %87 = vector.load %arg8[%c64, %c0_39] : memref<256x256xf32, #tpu.memory_space<vmem>>, vector<32x256xf32>
    %88 = arith.truncf %68 : vector<32x64xf32> to vector<32x64xbf16>
    %c0_40 = arith.constant 0 : index
    %c0_41 = arith.constant 0 : index
    %89 = vector.load %arg3[%c0_40, %c0_41] : memref<64x256xbf16, #tpu.memory_space<vmem>>, vector<64x256xbf16>
    %cst_42 = arith.constant dense<0.000000e+00> : vector<32x256xf32>
    %90 = tpu.matmul %88, %89, %cst_42 {dimension_numbers = #tpu.dot_dimension_numbers<[1], [0], [0], [1], [0, 0, 1, 1], [], []>} : vector<32x64xbf16>, vector<64x256xbf16>, vector<32x256xf32> -> vector<32x256xf32>
    %91 = arith.addf %87, %90 : vector<32x256xf32>
    %92 = vector.extract_strided_slice %91 {offsets = [0, 0], sizes = [32, 192], strides = [1, 1]} : vector<32x256xf32> to vector<32x192xf32>
    %93 = arith.negf %92 : vector<32x192xf32>
    %94 = math.exp %93 : vector<32x192xf32>
    %cst_43 = arith.constant 1.000000e+00 : f32
    %95 = vector.broadcast %cst_43 : f32 to vector<32x192xf32>
    %96 = arith.addf %95, %94 : vector<32x192xf32>
    %97 = arith.divf %95, %96 : vector<32x192xf32>
    %98 = vector.extract_strided_slice %91 {offsets = [0, 192], sizes = [32, 64], strides = [1, 1]} : vector<32x256xf32> to vector<32x64xf32>
    %99 = math.tanh %98 : vector<32x64xf32>
    %100 = vector.extract_strided_slice %97 {offsets = [0, 0], sizes = [32, 64], strides = [1, 1]} : vector<32x192xf32> to vector<32x64xf32>
    %101 = vector.extract_strided_slice %97 {offsets = [0, 64], sizes = [32, 64], strides = [1, 1]} : vector<32x192xf32> to vector<32x64xf32>
    %102 = vector.extract_strided_slice %97 {offsets = [0, 128], sizes = [32, 64], strides = [1, 1]} : vector<32x192xf32> to vector<32x64xf32>
    %103 = arith.mulf %101, %66 : vector<32x64xf32>
    %104 = arith.mulf %100, %99 : vector<32x64xf32>
    %105 = arith.addf %103, %104 : vector<32x64xf32>
    %106 = math.tanh %105 : vector<32x64xf32>
    %107 = arith.mulf %102, %106 : vector<32x64xf32>
    %108 = vector.extract_strided_slice %107 {offsets = [0, 0], sizes = [16, 64], strides = [1, 1]} : vector<32x64xf32> to vector<16x64xf32>
    %109 = vector.extract_strided_slice %107 {offsets = [16, 0], sizes = [16, 64], strides = [1, 1]} : vector<32x64xf32> to vector<16x64xf32>
    %cst_44 = arith.constant dense<0xFF800000> : vector<64xf32>
    %110 = vector.multi_reduction <maximumf>, %108, %cst_44 [0] : vector<16x64xf32> to vector<64xf32>
    %111 = vector.shape_cast %110 : vector<64xf32> to vector<1x64xf32>
    %cst_45 = arith.constant dense<0.000000e+00> : vector<64xf32>
    %112 = vector.multi_reduction <add>, %108, %cst_45 [0] : vector<16x64xf32> to vector<64xf32>
    %113 = vector.shape_cast %112 : vector<64xf32> to vector<1x64xf32>
    %cst_46 = arith.constant 1.600000e+01 : f32
    %114 = vector.broadcast %cst_46 : f32 to vector<1x64xf32>
    %115 = arith.divf %113, %114 : vector<1x64xf32>
    %116 = tpu.concatenate %111, %115 in 1 : vector<1x64xf32>, vector<1x64xf32> -> vector<1x128xf32>
    %c2 = arith.constant 2 : index
    %c0_47 = arith.constant 0 : index
    %117 = vector.load %arg9[%c2, %c0_47] : memref<8x128xf32, #tpu.memory_space<vmem>>, vector<1x128xf32>
    tpu.vector_store %arg9[%c2, %c0_47], %116 {strides = array<i32>} : memref<8x128xf32, #tpu.memory_space<vmem>>, vector<1x128xf32>,
    %cst_48 = arith.constant dense<0xFF800000> : vector<64xf32>
    %118 = vector.multi_reduction <maximumf>, %109, %cst_48 [0] : vector<16x64xf32> to vector<64xf32>
    %119 = vector.shape_cast %118 : vector<64xf32> to vector<1x64xf32>
    %cst_49 = arith.constant dense<0.000000e+00> : vector<64xf32>
    %120 = vector.multi_reduction <add>, %109, %cst_49 [0] : vector<16x64xf32> to vector<64xf32>
    %121 = vector.shape_cast %120 : vector<64xf32> to vector<1x64xf32>
    %cst_50 = arith.constant 1.600000e+01 : f32
    %122 = vector.broadcast %cst_50 : f32 to vector<1x64xf32>
    %123 = arith.divf %121, %122 : vector<1x64xf32>
    %124 = tpu.concatenate %119, %123 in 1 : vector<1x64xf32>, vector<1x64xf32> -> vector<1x128xf32>
    %c2_51 = arith.constant 2 : index
    %c0_52 = arith.constant 0 : index
    %125 = vector.load %arg10[%c2_51, %c0_52] : memref<8x128xf32, #tpu.memory_space<vmem>>, vector<1x128xf32>
    tpu.vector_store %arg10[%c2_51, %c0_52], %124 {strides = array<i32>} : memref<8x128xf32, #tpu.memory_space<vmem>>, vector<1x128xf32>,
    %c96 = arith.constant 96 : index
    %c0_53 = arith.constant 0 : index
    %126 = vector.load %arg8[%c96, %c0_53] : memref<256x256xf32, #tpu.memory_space<vmem>>, vector<32x256xf32>
    %127 = arith.truncf %107 : vector<32x64xf32> to vector<32x64xbf16>
    %c0_54 = arith.constant 0 : index
    %c0_55 = arith.constant 0 : index
    %128 = vector.load %arg3[%c0_54, %c0_55] : memref<64x256xbf16, #tpu.memory_space<vmem>>, vector<64x256xbf16>
    %cst_56 = arith.constant dense<0.000000e+00> : vector<32x256xf32>
    %129 = tpu.matmul %127, %128, %cst_56 {dimension_numbers = #tpu.dot_dimension_numbers<[1], [0], [0], [1], [0, 0, 1, 1], [], []>} : vector<32x64xbf16>, vector<64x256xbf16>, vector<32x256xf32> -> vector<32x256xf32>
    %130 = arith.addf %126, %129 : vector<32x256xf32>
    %131 = vector.extract_strided_slice %130 {offsets = [0, 0], sizes = [32, 192], strides = [1, 1]} : vector<32x256xf32> to vector<32x192xf32>
    %132 = arith.negf %131 : vector<32x192xf32>
    %133 = math.exp %132 : vector<32x192xf32>
    %cst_57 = arith.constant 1.000000e+00 : f32
    %134 = vector.broadcast %cst_57 : f32 to vector<32x192xf32>
    %135 = arith.addf %134, %133 : vector<32x192xf32>
    %136 = arith.divf %134, %135 : vector<32x192xf32>
    %137 = vector.extract_strided_slice %130 {offsets = [0, 192], sizes = [32, 64], strides = [1, 1]} : vector<32x256xf32> to vector<32x64xf32>
    %138 = math.tanh %137 : vector<32x64xf32>
    %139 = vector.extract_strided_slice %136 {offsets = [0, 0], sizes = [32, 64], strides = [1, 1]} : vector<32x192xf32> to vector<32x64xf32>
    %140 = vector.extract_strided_slice %136 {offsets = [0, 64], sizes = [32, 64], strides = [1, 1]} : vector<32x192xf32> to vector<32x64xf32>
    %141 = vector.extract_strided_slice %136 {offsets = [0, 128], sizes = [32, 64], strides = [1, 1]} : vector<32x192xf32> to vector<32x64xf32>
    %142 = arith.mulf %140, %105 : vector<32x64xf32>
    %143 = arith.mulf %139, %138 : vector<32x64xf32>
    %144 = arith.addf %142, %143 : vector<32x64xf32>
    %145 = math.tanh %144 : vector<32x64xf32>
    %146 = arith.mulf %141, %145 : vector<32x64xf32>
    %147 = vector.extract_strided_slice %146 {offsets = [0, 0], sizes = [16, 64], strides = [1, 1]} : vector<32x64xf32> to vector<16x64xf32>
    %148 = vector.extract_strided_slice %146 {offsets = [16, 0], sizes = [16, 64], strides = [1, 1]} : vector<32x64xf32> to vector<16x64xf32>
    %cst_58 = arith.constant dense<0xFF800000> : vector<64xf32>
    %149 = vector.multi_reduction <maximumf>, %147, %cst_58 [0] : vector<16x64xf32> to vector<64xf32>
    %150 = vector.shape_cast %149 : vector<64xf32> to vector<1x64xf32>
    %cst_59 = arith.constant dense<0.000000e+00> : vector<64xf32>
    %151 = vector.multi_reduction <add>, %147, %cst_59 [0] : vector<16x64xf32> to vector<64xf32>
    %152 = vector.shape_cast %151 : vector<64xf32> to vector<1x64xf32>
    %cst_60 = arith.constant 1.600000e+01 : f32
    %153 = vector.broadcast %cst_60 : f32 to vector<1x64xf32>
    %154 = arith.divf %152, %153 : vector<1x64xf32>
    %155 = tpu.concatenate %150, %154 in 1 : vector<1x64xf32>, vector<1x64xf32> -> vector<1x128xf32>
    %c3 = arith.constant 3 : index
    %c0_61 = arith.constant 0 : index
    %156 = vector.load %arg9[%c3, %c0_61] : memref<8x128xf32, #tpu.memory_space<vmem>>, vector<1x128xf32>
    tpu.vector_store %arg9[%c3, %c0_61], %155 {strides = array<i32>} : memref<8x128xf32, #tpu.memory_space<vmem>>, vector<1x128xf32>,
    %cst_62 = arith.constant dense<0xFF800000> : vector<64xf32>
    %157 = vector.multi_reduction <maximumf>, %148, %cst_62 [0] : vector<16x64xf32> to vector<64xf32>
    %158 = vector.shape_cast %157 : vector<64xf32> to vector<1x64xf32>
    %cst_63 = arith.constant dense<0.000000e+00> : vector<64xf32>
    %159 = vector.multi_reduction <add>, %148, %cst_63 [0] : vector<16x64xf32> to vector<64xf32>
    %160 = vector.shape_cast %159 : vector<64xf32> to vector<1x64xf32>
    %cst_64 = arith.constant 1.600000e+01 : f32
    %161 = vector.broadcast %cst_64 : f32 to vector<1x64xf32>
    %162 = arith.divf %160, %161 : vector<1x64xf32>
    %163 = tpu.concatenate %158, %162 in 1 : vector<1x64xf32>, vector<1x64xf32> -> vector<1x128xf32>
    %c3_65 = arith.constant 3 : index
    %c0_66 = arith.constant 0 : index
    %164 = vector.load %arg10[%c3_65, %c0_66] : memref<8x128xf32, #tpu.memory_space<vmem>>, vector<1x128xf32>
    tpu.vector_store %arg10[%c3_65, %c0_66], %163 {strides = array<i32>} : memref<8x128xf32, #tpu.memory_space<vmem>>, vector<1x128xf32>,
    %c128 = arith.constant 128 : index
    %c0_67 = arith.constant 0 : index
    %165 = vector.load %arg8[%c128, %c0_67] : memref<256x256xf32, #tpu.memory_space<vmem>>, vector<32x256xf32>
    %166 = arith.truncf %146 : vector<32x64xf32> to vector<32x64xbf16>
    %c0_68 = arith.constant 0 : index
    %c0_69 = arith.constant 0 : index
    %167 = vector.load %arg3[%c0_68, %c0_69] : memref<64x256xbf16, #tpu.memory_space<vmem>>, vector<64x256xbf16>
    %cst_70 = arith.constant dense<0.000000e+00> : vector<32x256xf32>
    %168 = tpu.matmul %166, %167, %cst_70 {dimension_numbers = #tpu.dot_dimension_numbers<[1], [0], [0], [1], [0, 0, 1, 1], [], []>} : vector<32x64xbf16>, vector<64x256xbf16>, vector<32x256xf32> -> vector<32x256xf32>
    %169 = arith.addf %165, %168 : vector<32x256xf32>
    %170 = vector.extract_strided_slice %169 {offsets = [0, 0], sizes = [32, 192], strides = [1, 1]} : vector<32x256xf32> to vector<32x192xf32>
    %171 = arith.negf %170 : vector<32x192xf32>
    %172 = math.exp %171 : vector<32x192xf32>
    %cst_71 = arith.constant 1.000000e+00 : f32
    %173 = vector.broadcast %cst_71 : f32 to vector<32x192xf32>
    %174 = arith.addf %173, %172 : vector<32x192xf32>
    %175 = arith.divf %173, %174 : vector<32x192xf32>
    %176 = vector.extract_strided_slice %169 {offsets = [0, 192], sizes = [32, 64], strides = [1, 1]} : vector<32x256xf32> to vector<32x64xf32>
    %177 = math.tanh %176 : vector<32x64xf32>
    %178 = vector.extract_strided_slice %175 {offsets = [0, 0], sizes = [32, 64], strides = [1, 1]} : vector<32x192xf32> to vector<32x64xf32>
    %179 = vector.extract_strided_slice %175 {offsets = [0, 64], sizes = [32, 64], strides = [1, 1]} : vector<32x192xf32> to vector<32x64xf32>
    %180 = vector.extract_strided_slice %175 {offsets = [0, 128], sizes = [32, 64], strides = [1, 1]} : vector<32x192xf32> to vector<32x64xf32>
    %181 = arith.mulf %179, %144 : vector<32x64xf32>
    %182 = arith.mulf %178, %177 : vector<32x64xf32>
    %183 = arith.addf %181, %182 : vector<32x64xf32>
    %184 = math.tanh %183 : vector<32x64xf32>
    %185 = arith.mulf %180, %184 : vector<32x64xf32>
    %186 = vector.extract_strided_slice %185 {offsets = [0, 0], sizes = [16, 64], strides = [1, 1]} : vector<32x64xf32> to vector<16x64xf32>
    %187 = vector.extract_strided_slice %185 {offsets = [16, 0], sizes = [16, 64], strides = [1, 1]} : vector<32x64xf32> to vector<16x64xf32>
    %cst_72 = arith.constant dense<0xFF800000> : vector<64xf32>
    %188 = vector.multi_reduction <maximumf>, %186, %cst_72 [0] : vector<16x64xf32> to vector<64xf32>
    %189 = vector.shape_cast %188 : vector<64xf32> to vector<1x64xf32>
    %cst_73 = arith.constant dense<0.000000e+00> : vector<64xf32>
    %190 = vector.multi_reduction <add>, %186, %cst_73 [0] : vector<16x64xf32> to vector<64xf32>
    %191 = vector.shape_cast %190 : vector<64xf32> to vector<1x64xf32>
    %cst_74 = arith.constant 1.600000e+01 : f32
    %192 = vector.broadcast %cst_74 : f32 to vector<1x64xf32>
    %193 = arith.divf %191, %192 : vector<1x64xf32>
    %194 = tpu.concatenate %189, %193 in 1 : vector<1x64xf32>, vector<1x64xf32> -> vector<1x128xf32>
    %c4 = arith.constant 4 : index
    %c0_75 = arith.constant 0 : index
    %195 = vector.load %arg9[%c4, %c0_75] : memref<8x128xf32, #tpu.memory_space<vmem>>, vector<1x128xf32>
    tpu.vector_store %arg9[%c4, %c0_75], %194 {strides = array<i32>} : memref<8x128xf32, #tpu.memory_space<vmem>>, vector<1x128xf32>,
    %cst_76 = arith.constant dense<0xFF800000> : vector<64xf32>
    %196 = vector.multi_reduction <maximumf>, %187, %cst_76 [0] : vector<16x64xf32> to vector<64xf32>
    %197 = vector.shape_cast %196 : vector<64xf32> to vector<1x64xf32>
    %cst_77 = arith.constant dense<0.000000e+00> : vector<64xf32>
    %198 = vector.multi_reduction <add>, %187, %cst_77 [0] : vector<16x64xf32> to vector<64xf32>
    %199 = vector.shape_cast %198 : vector<64xf32> to vector<1x64xf32>
    %cst_78 = arith.constant 1.600000e+01 : f32
    %200 = vector.broadcast %cst_78 : f32 to vector<1x64xf32>
    %201 = arith.divf %199, %200 : vector<1x64xf32>
    %202 = tpu.concatenate %197, %201 in 1 : vector<1x64xf32>, vector<1x64xf32> -> vector<1x128xf32>
    %c4_79 = arith.constant 4 : index
    %c0_80 = arith.constant 0 : index
    %203 = vector.load %arg10[%c4_79, %c0_80] : memref<8x128xf32, #tpu.memory_space<vmem>>, vector<1x128xf32>
    tpu.vector_store %arg10[%c4_79, %c0_80], %202 {strides = array<i32>} : memref<8x128xf32, #tpu.memory_space<vmem>>, vector<1x128xf32>,
    %c160 = arith.constant 160 : index
    %c0_81 = arith.constant 0 : index
    %204 = vector.load %arg8[%c160, %c0_81] : memref<256x256xf32, #tpu.memory_space<vmem>>, vector<32x256xf32>
    %205 = arith.truncf %185 : vector<32x64xf32> to vector<32x64xbf16>
    %c0_82 = arith.constant 0 : index
    %c0_83 = arith.constant 0 : index
    %206 = vector.load %arg3[%c0_82, %c0_83] : memref<64x256xbf16, #tpu.memory_space<vmem>>, vector<64x256xbf16>
    %cst_84 = arith.constant dense<0.000000e+00> : vector<32x256xf32>
    %207 = tpu.matmul %205, %206, %cst_84 {dimension_numbers = #tpu.dot_dimension_numbers<[1], [0], [0], [1], [0, 0, 1, 1], [], []>} : vector<32x64xbf16>, vector<64x256xbf16>, vector<32x256xf32> -> vector<32x256xf32>
    %208 = arith.addf %204, %207 : vector<32x256xf32>
    %209 = vector.extract_strided_slice %208 {offsets = [0, 0], sizes = [32, 192], strides = [1, 1]} : vector<32x256xf32> to vector<32x192xf32>
    %210 = arith.negf %209 : vector<32x192xf32>
    %211 = math.exp %210 : vector<32x192xf32>
    %cst_85 = arith.constant 1.000000e+00 : f32
    %212 = vector.broadcast %cst_85 : f32 to vector<32x192xf32>
    %213 = arith.addf %212, %211 : vector<32x192xf32>
    %214 = arith.divf %212, %213 : vector<32x192xf32>
    %215 = vector.extract_strided_slice %208 {offsets = [0, 192], sizes = [32, 64], strides = [1, 1]} : vector<32x256xf32> to vector<32x64xf32>
    %216 = math.tanh %215 : vector<32x64xf32>
    %217 = vector.extract_strided_slice %214 {offsets = [0, 0], sizes = [32, 64], strides = [1, 1]} : vector<32x192xf32> to vector<32x64xf32>
    %218 = vector.extract_strided_slice %214 {offsets = [0, 64], sizes = [32, 64], strides = [1, 1]} : vector<32x192xf32> to vector<32x64xf32>
    %219 = vector.extract_strided_slice %214 {offsets = [0, 128], sizes = [32, 64], strides = [1, 1]} : vector<32x192xf32> to vector<32x64xf32>
    %220 = arith.mulf %218, %183 : vector<32x64xf32>
    %221 = arith.mulf %217, %216 : vector<32x64xf32>
    %222 = arith.addf %220, %221 : vector<32x64xf32>
    %223 = math.tanh %222 : vector<32x64xf32>
    %224 = arith.mulf %219, %223 : vector<32x64xf32>
    %225 = vector.extract_strided_slice %224 {offsets = [0, 0], sizes = [16, 64], strides = [1, 1]} : vector<32x64xf32> to vector<16x64xf32>
    %226 = vector.extract_strided_slice %224 {offsets = [16, 0], sizes = [16, 64], strides = [1, 1]} : vector<32x64xf32> to vector<16x64xf32>
    %cst_86 = arith.constant dense<0xFF800000> : vector<64xf32>
    %227 = vector.multi_reduction <maximumf>, %225, %cst_86 [0] : vector<16x64xf32> to vector<64xf32>
    %228 = vector.shape_cast %227 : vector<64xf32> to vector<1x64xf32>
    %cst_87 = arith.constant dense<0.000000e+00> : vector<64xf32>
    %229 = vector.multi_reduction <add>, %225, %cst_87 [0] : vector<16x64xf32> to vector<64xf32>
    %230 = vector.shape_cast %229 : vector<64xf32> to vector<1x64xf32>
    %cst_88 = arith.constant 1.600000e+01 : f32
    %231 = vector.broadcast %cst_88 : f32 to vector<1x64xf32>
    %232 = arith.divf %230, %231 : vector<1x64xf32>
    %233 = tpu.concatenate %228, %232 in 1 : vector<1x64xf32>, vector<1x64xf32> -> vector<1x128xf32>
    %c5 = arith.constant 5 : index
    %c0_89 = arith.constant 0 : index
    %234 = vector.load %arg9[%c5, %c0_89] : memref<8x128xf32, #tpu.memory_space<vmem>>, vector<1x128xf32>
    tpu.vector_store %arg9[%c5, %c0_89], %233 {strides = array<i32>} : memref<8x128xf32, #tpu.memory_space<vmem>>, vector<1x128xf32>,
    %cst_90 = arith.constant dense<0xFF800000> : vector<64xf32>
    %235 = vector.multi_reduction <maximumf>, %226, %cst_90 [0] : vector<16x64xf32> to vector<64xf32>
    %236 = vector.shape_cast %235 : vector<64xf32> to vector<1x64xf32>
    %cst_91 = arith.constant dense<0.000000e+00> : vector<64xf32>
    %237 = vector.multi_reduction <add>, %226, %cst_91 [0] : vector<16x64xf32> to vector<64xf32>
    %238 = vector.shape_cast %237 : vector<64xf32> to vector<1x64xf32>
    %cst_92 = arith.constant 1.600000e+01 : f32
    %239 = vector.broadcast %cst_92 : f32 to vector<1x64xf32>
    %240 = arith.divf %238, %239 : vector<1x64xf32>
    %241 = tpu.concatenate %236, %240 in 1 : vector<1x64xf32>, vector<1x64xf32> -> vector<1x128xf32>
    %c5_93 = arith.constant 5 : index
    %c0_94 = arith.constant 0 : index
    %242 = vector.load %arg10[%c5_93, %c0_94] : memref<8x128xf32, #tpu.memory_space<vmem>>, vector<1x128xf32>
    tpu.vector_store %arg10[%c5_93, %c0_94], %241 {strides = array<i32>} : memref<8x128xf32, #tpu.memory_space<vmem>>, vector<1x128xf32>,
    %c192 = arith.constant 192 : index
    %c0_95 = arith.constant 0 : index
    %243 = vector.load %arg8[%c192, %c0_95] : memref<256x256xf32, #tpu.memory_space<vmem>>, vector<32x256xf32>
    %244 = arith.truncf %224 : vector<32x64xf32> to vector<32x64xbf16>
    %c0_96 = arith.constant 0 : index
    %c0_97 = arith.constant 0 : index
    %245 = vector.load %arg3[%c0_96, %c0_97] : memref<64x256xbf16, #tpu.memory_space<vmem>>, vector<64x256xbf16>
    %cst_98 = arith.constant dense<0.000000e+00> : vector<32x256xf32>
    %246 = tpu.matmul %244, %245, %cst_98 {dimension_numbers = #tpu.dot_dimension_numbers<[1], [0], [0], [1], [0, 0, 1, 1], [], []>} : vector<32x64xbf16>, vector<64x256xbf16>, vector<32x256xf32> -> vector<32x256xf32>
    %247 = arith.addf %243, %246 : vector<32x256xf32>
    %248 = vector.extract_strided_slice %247 {offsets = [0, 0], sizes = [32, 192], strides = [1, 1]} : vector<32x256xf32> to vector<32x192xf32>
    %249 = arith.negf %248 : vector<32x192xf32>
    %250 = math.exp %249 : vector<32x192xf32>
    %cst_99 = arith.constant 1.000000e+00 : f32
    %251 = vector.broadcast %cst_99 : f32 to vector<32x192xf32>
    %252 = arith.addf %251, %250 : vector<32x192xf32>
    %253 = arith.divf %251, %252 : vector<32x192xf32>
    %254 = vector.extract_strided_slice %247 {offsets = [0, 192], sizes = [32, 64], strides = [1, 1]} : vector<32x256xf32> to vector<32x64xf32>
    %255 = math.tanh %254 : vector<32x64xf32>
    %256 = vector.extract_strided_slice %253 {offsets = [0, 0], sizes = [32, 64], strides = [1, 1]} : vector<32x192xf32> to vector<32x64xf32>
    %257 = vector.extract_strided_slice %253 {offsets = [0, 64], sizes = [32, 64], strides = [1, 1]} : vector<32x192xf32> to vector<32x64xf32>
    %258 = vector.extract_strided_slice %253 {offsets = [0, 128], sizes = [32, 64], strides = [1, 1]} : vector<32x192xf32> to vector<32x64xf32>
    %259 = arith.mulf %257, %222 : vector<32x64xf32>
    %260 = arith.mulf %256, %255 : vector<32x64xf32>
    %261 = arith.addf %259, %260 : vector<32x64xf32>
    %262 = math.tanh %261 : vector<32x64xf32>
    %263 = arith.mulf %258, %262 : vector<32x64xf32>
    %264 = vector.extract_strided_slice %263 {offsets = [0, 0], sizes = [16, 64], strides = [1, 1]} : vector<32x64xf32> to vector<16x64xf32>
    %265 = vector.extract_strided_slice %263 {offsets = [16, 0], sizes = [16, 64], strides = [1, 1]} : vector<32x64xf32> to vector<16x64xf32>
    %cst_100 = arith.constant dense<0xFF800000> : vector<64xf32>
    %266 = vector.multi_reduction <maximumf>, %264, %cst_100 [0] : vector<16x64xf32> to vector<64xf32>
    %267 = vector.shape_cast %266 : vector<64xf32> to vector<1x64xf32>
    %cst_101 = arith.constant dense<0.000000e+00> : vector<64xf32>
    %268 = vector.multi_reduction <add>, %264, %cst_101 [0] : vector<16x64xf32> to vector<64xf32>
    %269 = vector.shape_cast %268 : vector<64xf32> to vector<1x64xf32>
    %cst_102 = arith.constant 1.600000e+01 : f32
    %270 = vector.broadcast %cst_102 : f32 to vector<1x64xf32>
    %271 = arith.divf %269, %270 : vector<1x64xf32>
    %272 = tpu.concatenate %267, %271 in 1 : vector<1x64xf32>, vector<1x64xf32> -> vector<1x128xf32>
    %c6 = arith.constant 6 : index
    %c0_103 = arith.constant 0 : index
    %273 = vector.load %arg9[%c6, %c0_103] : memref<8x128xf32, #tpu.memory_space<vmem>>, vector<1x128xf32>
    tpu.vector_store %arg9[%c6, %c0_103], %272 {strides = array<i32>} : memref<8x128xf32, #tpu.memory_space<vmem>>, vector<1x128xf32>,
    %cst_104 = arith.constant dense<0xFF800000> : vector<64xf32>
    %274 = vector.multi_reduction <maximumf>, %265, %cst_104 [0] : vector<16x64xf32> to vector<64xf32>
    %275 = vector.shape_cast %274 : vector<64xf32> to vector<1x64xf32>
    %cst_105 = arith.constant dense<0.000000e+00> : vector<64xf32>
    %276 = vector.multi_reduction <add>, %265, %cst_105 [0] : vector<16x64xf32> to vector<64xf32>
    %277 = vector.shape_cast %276 : vector<64xf32> to vector<1x64xf32>
    %cst_106 = arith.constant 1.600000e+01 : f32
    %278 = vector.broadcast %cst_106 : f32 to vector<1x64xf32>
    %279 = arith.divf %277, %278 : vector<1x64xf32>
    %280 = tpu.concatenate %275, %279 in 1 : vector<1x64xf32>, vector<1x64xf32> -> vector<1x128xf32>
    %c6_107 = arith.constant 6 : index
    %c0_108 = arith.constant 0 : index
    %281 = vector.load %arg10[%c6_107, %c0_108] : memref<8x128xf32, #tpu.memory_space<vmem>>, vector<1x128xf32>
    tpu.vector_store %arg10[%c6_107, %c0_108], %280 {strides = array<i32>} : memref<8x128xf32, #tpu.memory_space<vmem>>, vector<1x128xf32>,
    %c224 = arith.constant 224 : index
    %c0_109 = arith.constant 0 : index
    %282 = vector.load %arg8[%c224, %c0_109] : memref<256x256xf32, #tpu.memory_space<vmem>>, vector<32x256xf32>
    %283 = arith.truncf %263 : vector<32x64xf32> to vector<32x64xbf16>
    %c0_110 = arith.constant 0 : index
    %c0_111 = arith.constant 0 : index
    %284 = vector.load %arg3[%c0_110, %c0_111] : memref<64x256xbf16, #tpu.memory_space<vmem>>, vector<64x256xbf16>
    %cst_112 = arith.constant dense<0.000000e+00> : vector<32x256xf32>
    %285 = tpu.matmul %283, %284, %cst_112 {dimension_numbers = #tpu.dot_dimension_numbers<[1], [0], [0], [1], [0, 0, 1, 1], [], []>} : vector<32x64xbf16>, vector<64x256xbf16>, vector<32x256xf32> -> vector<32x256xf32>
    %286 = arith.addf %282, %285 : vector<32x256xf32>
    %287 = vector.extract_strided_slice %286 {offsets = [0, 0], sizes = [32, 192], strides = [1, 1]} : vector<32x256xf32> to vector<32x192xf32>
    %288 = arith.negf %287 : vector<32x192xf32>
    %289 = math.exp %288 : vector<32x192xf32>
    %cst_113 = arith.constant 1.000000e+00 : f32
    %290 = vector.broadcast %cst_113 : f32 to vector<32x192xf32>
    %291 = arith.addf %290, %289 : vector<32x192xf32>
    %292 = arith.divf %290, %291 : vector<32x192xf32>
    %293 = vector.extract_strided_slice %286 {offsets = [0, 192], sizes = [32, 64], strides = [1, 1]} : vector<32x256xf32> to vector<32x64xf32>
    %294 = math.tanh %293 : vector<32x64xf32>
    %295 = vector.extract_strided_slice %292 {offsets = [0, 0], sizes = [32, 64], strides = [1, 1]} : vector<32x192xf32> to vector<32x64xf32>
    %296 = vector.extract_strided_slice %292 {offsets = [0, 64], sizes = [32, 64], strides = [1, 1]} : vector<32x192xf32> to vector<32x64xf32>
    %297 = vector.extract_strided_slice %292 {offsets = [0, 128], sizes = [32, 64], strides = [1, 1]} : vector<32x192xf32> to vector<32x64xf32>
    %298 = arith.mulf %296, %261 : vector<32x64xf32>
    %299 = arith.mulf %295, %294 : vector<32x64xf32>
    %300 = arith.addf %298, %299 : vector<32x64xf32>
    %301 = math.tanh %300 : vector<32x64xf32>
    %302 = arith.mulf %297, %301 : vector<32x64xf32>
    %303 = vector.extract_strided_slice %302 {offsets = [0, 0], sizes = [16, 64], strides = [1, 1]} : vector<32x64xf32> to vector<16x64xf32>
    %304 = vector.extract_strided_slice %302 {offsets = [16, 0], sizes = [16, 64], strides = [1, 1]} : vector<32x64xf32> to vector<16x64xf32>
    %cst_114 = arith.constant dense<0xFF800000> : vector<64xf32>
    %305 = vector.multi_reduction <maximumf>, %303, %cst_114 [0] : vector<16x64xf32> to vector<64xf32>
    %306 = vector.shape_cast %305 : vector<64xf32> to vector<1x64xf32>
    %cst_115 = arith.constant dense<0.000000e+00> : vector<64xf32>
    %307 = vector.multi_reduction <add>, %303, %cst_115 [0] : vector<16x64xf32> to vector<64xf32>
    %308 = vector.shape_cast %307 : vector<64xf32> to vector<1x64xf32>
    %cst_116 = arith.constant 1.600000e+01 : f32
    %309 = vector.broadcast %cst_116 : f32 to vector<1x64xf32>
    %310 = arith.divf %308, %309 : vector<1x64xf32>
    %311 = tpu.concatenate %306, %310 in 1 : vector<1x64xf32>, vector<1x64xf32> -> vector<1x128xf32>
    %c7 = arith.constant 7 : index
    %c0_117 = arith.constant 0 : index
    %312 = vector.load %arg9[%c7, %c0_117] : memref<8x128xf32, #tpu.memory_space<vmem>>, vector<1x128xf32>
    tpu.vector_store %arg9[%c7, %c0_117], %311 {strides = array<i32>} : memref<8x128xf32, #tpu.memory_space<vmem>>, vector<1x128xf32>,
    %cst_118 = arith.constant dense<0xFF800000> : vector<64xf32>
    %313 = vector.multi_reduction <maximumf>, %304, %cst_118 [0] : vector<16x64xf32> to vector<64xf32>
    %314 = vector.shape_cast %313 : vector<64xf32> to vector<1x64xf32>
    %cst_119 = arith.constant dense<0.000000e+00> : vector<64xf32>
    %315 = vector.multi_reduction <add>, %304, %cst_119 [0] : vector<16x64xf32> to vector<64xf32>
    %316 = vector.shape_cast %315 : vector<64xf32> to vector<1x64xf32>
    %cst_120 = arith.constant 1.600000e+01 : f32
    %317 = vector.broadcast %cst_120 : f32 to vector<1x64xf32>
    %318 = arith.divf %316, %317 : vector<1x64xf32>
    %319 = tpu.concatenate %314, %318 in 1 : vector<1x64xf32>, vector<1x64xf32> -> vector<1x128xf32>
    %c7_121 = arith.constant 7 : index
    %c0_122 = arith.constant 0 : index
    %320 = vector.load %arg10[%c7_121, %c0_122] : memref<8x128xf32, #tpu.memory_space<vmem>>, vector<1x128xf32>
    tpu.vector_store %arg10[%c7_121, %c0_122], %319 {strides = array<i32>} : memref<8x128xf32, #tpu.memory_space<vmem>>, vector<1x128xf32>,
    %c0_123 = arith.constant 0 : index
    %c0_124 = arith.constant 0 : index
    %321 = vector.load %arg9[%c0_123, %c0_124] : memref<8x128xf32, #tpu.memory_space<vmem>>, vector<8x128xf32>
    %c0_125 = arith.constant 0 : index
    %c0_126 = arith.constant 0 : index
    %322 = vector.load %arg10[%c0_125, %c0_126] : memref<8x128xf32, #tpu.memory_space<vmem>>, vector<8x128xf32>
    %323 = arith.subf %321, %322 : vector<8x128xf32>
    %324 = math.absf %323 : vector<8x128xf32>
    %325 = arith.mulf %321, %322 : vector<8x128xf32>
    %326 = tpu.concatenate %321, %322, %324, %325 in 1 : vector<8x128xf32>, vector<8x128xf32>, vector<8x128xf32>, vector<8x128xf32> -> vector<8x512xf32>
    %327 = arith.truncf %326 : vector<8x512xf32> to vector<8x512xbf16>
    %c0_127 = arith.constant 0 : index
    %c0_128 = arith.constant 0 : index
    %328 = vector.load %arg5[%c0_127, %c0_128] : memref<512x128xbf16, #tpu.memory_space<vmem>>, vector<512x128xbf16>
    %cst_129 = arith.constant dense<0.000000e+00> : vector<8x128xf32>
    %329 = tpu.matmul %327, %328, %cst_129 {dimension_numbers = #tpu.dot_dimension_numbers<[1], [0], [0], [1], [0, 0, 1, 1], [], []>} : vector<8x512xbf16>, vector<512x128xbf16>, vector<8x128xf32> -> vector<8x128xf32>
    %c0_130 = arith.constant 0 : index
    %c0_131 = arith.constant 0 : index
    %330 = vector.load %arg6[%c0_130, %c0_131] : memref<1x128xf32, #tpu.memory_space<vmem>>, vector<1x128xf32>
    %331 = vector.broadcast %330 : vector<1x128xf32> to vector<8x128xf32>
    %332 = arith.addf %329, %331 : vector<8x128xf32>
    %c0_132 = arith.constant 0 : index
    %c0_133 = arith.constant 0 : index
    %333 = vector.load %arg7[%c0_132, %c0_133] : memref<8x128xf32, #tpu.memory_space<vmem>>, vector<8x128xf32>
    tpu.vector_store %arg7[%c0_132, %c0_133], %332 {strides = array<i32>} : memref<8x128xf32, #tpu.memory_space<vmem>>, vector<8x128xf32>,
    return
  }
  func.func @transform_0(%arg0: i32) -> (i32, i32) {
    %c0_i32 = arith.constant 0 : i32
    %c0_i32_0 = arith.constant 0 : i32
    %c0_i32_1 = arith.constant 0 : i32
    return %c0_i32, %c0_i32_0 : i32, i32
  }
  func.func @transform_1(%arg0: i32) -> (i32, i32) {
    %c0_i32 = arith.constant 0 : i32
    %c0_i32_0 = arith.constant 0 : i32
    %c0_i32_1 = arith.constant 0 : i32
    return %c0_i32, %c0_i32_0 : i32, i32
  }
  func.func @transform_2(%arg0: i32) -> (i32, i32) {
    %c0_i32 = arith.constant 0 : i32
    %c0_i32_0 = arith.constant 0 : i32
    %c0_i32_1 = arith.constant 0 : i32
    return %c0_i32, %c0_i32_0 : i32, i32
  }
  func.func @transform_3(%arg0: i32) -> (i32, i32) {
    %c0_i32 = arith.constant 0 : i32
    %c0_i32_0 = arith.constant 0 : i32
    %c0_i32_1 = arith.constant 0 : i32
    return %c0_i32, %c0_i32_0 : i32, i32
  }
  func.func @transform_4(%arg0: i32) -> (i32, i32) {
    %c0_i32 = arith.constant 0 : i32
    %c0_i32_0 = arith.constant 0 : i32
    %c0_i32_1 = arith.constant 0 : i32
    return %c0_i32, %c0_i32_0 : i32, i32
  }
  func.func @transform_5(%arg0: i32) -> (i32, i32) {
    %c0_i32 = arith.constant 0 : i32
    %c0_i32_0 = arith.constant 0 : i32
    %c0_i32_1 = arith.constant 0 : i32
    return %c0_i32, %c0_i32_0 : i32, i32
  }
  func.func @transform_6(%arg0: i32) -> (i32, i32) {
    %c0_i32 = arith.constant 0 : i32
    %c0_i32_0 = arith.constant 0 : i32
    %c0_i32_1 = arith.constant 0 : i32
    return %c0_i32, %c0_i32_0 : i32, i32
  }
}

</mosaic_0001>

<llo_original>
// kernel: siamese_lstm_forward.1
$region0: #{siamese_lstm_forward.1}
  #allocation0 [shape = 'u32[]', space=smem, size = 0x4, offset = 0x4, fixed_abs, tag = 'smem constant byte address 0x4 - core index']
  #allocation1 [shape = 'u32[144,128]{1,0:T(1,128)}', space=vmem, size = 0x12000, scoped, tag = 'internal scratch']
  #allocation2 [shape = 'f32[256,256]{1,0:T(8,128)}', space=vmem, size = 0x40000, scoped, tag = 'scratch operand']
  #allocation3 [shape = 'f32[8,128]{1,0:T(8,128)}', space=vmem, size = 0x1000, scoped, tag = 'scratch operand']
  #allocation4 [shape = 'f32[8,128]{1,0:T(8,128)}', space=vmem, size = 0x1000, scoped, tag = 'scratch operand']
  %s0 = inlined_call_operand.vmem [shape: bf16[256,8], index: 0, kind: input, shape index: {}]
  %s1 = inlined_call_operand.vmem [shape: bf16[8,256], index: 1, kind: input, shape index: {}]
  %s2 = inlined_call_operand.vmem [shape: bf16[64,256], index: 2, kind: input, shape index: {}]
  %s3 = inlined_call_operand.vmem [shape: f32[1,256], index: 3, kind: input, shape index: {}]
  %s4 = inlined_call_operand.vmem [shape: bf16[512,128], index: 4, kind: input, shape index: {}]
  %s5 = inlined_call_operand.vmem [shape: f32[1,128], index: 5, kind: input, shape index: {}]
  %s6 = inlined_call_operand.vmem [shape: f32[8,128], index: 6, kind: output, shape index: {}]
  %s7 = sld [smem:[#allocation0]]
  $region34: #{siamese_lstm_forward.1} parent=0
    _
  %s9 = ssub.s32 1, %s7
  %s10 = scalar_select 0, %s9, %s7
  // Predicated region
  $region2: #{siamese_lstm_forward.1} parent=0 // pred_check
    _
  $region3: #{siamese_lstm_forward.1} parent=0 // pred_check_branch
    %12 = sbr.rel (0) target = $region5
  $region4: #{siamese_lstm_forward.1} parent=0 // pred_region
    _
  $region5: #{siamese_lstm_forward.1} parent=0 // pred_fallthru
    _
  // Predicated region
  $region6: #{siamese_lstm_forward.1} parent=0 // pred_check
    _
  $region7: #{siamese_lstm_forward.1} parent=0 // pred_check_branch
    %14 = sbr.rel (0) target = $region9
  $region8: #{siamese_lstm_forward.1} parent=0 // pred_region
    _
  $region9: #{siamese_lstm_forward.1} parent=0 // pred_fallthru
    _
  // Predicated region
  $region10: #{siamese_lstm_forward.1} parent=0 // pred_check
    _
  $region11: #{siamese_lstm_forward.1} parent=0 // pred_check_branch
    %16 = sbr.rel (0) target = $region13
  $region12: #{siamese_lstm_forward.1} parent=0 // pred_region
    _
  $region13: #{siamese_lstm_forward.1} parent=0 // pred_fallthru
    _
  // Predicated region
  $region14: #{siamese_lstm_forward.1} parent=0 // pred_check
    _
  $region15: #{siamese_lstm_forward.1} parent=0 // pred_check_branch
    %18 = sbr.rel (0) target = $region17
  $region16: #{siamese_lstm_forward.1} parent=0 // pred_region
    _
  $region17: #{siamese_lstm_forward.1} parent=0 // pred_fallthru
    _
  // Predicated region
  $region18: #{siamese_lstm_forward.1} parent=0 // pred_check
    _
  $region19: #{siamese_lstm_forward.1} parent=0 // pred_check_branch
    %20 = sbr.rel (0) target = $region21
  $region20: #{siamese_lstm_forward.1} parent=0 // pred_region
    _
  $region21: #{siamese_lstm_forward.1} parent=0 // pred_fallthru
    _
  // Predicated region
  $region22: #{siamese_lstm_forward.1} parent=0 // pred_check
    _
  $region23: #{siamese_lstm_forward.1} parent=0 // pred_check_branch
    %22 = sbr.rel (0) target = $region25
  $region24: #{siamese_lstm_forward.1} parent=0 // pred_region
    _
  $region25: #{siamese_lstm_forward.1} parent=0 // pred_fallthru
    _
  %v24 = vld [vmem:[%s0] sm:$0xf]
  %v25 = vld [vmem:[%s0 + $0x4] sm:$0xf]
  %v26 = vld [vmem:[%s0 + $0x8] sm:$0xf]
  %v27 = vld [vmem:[%s0 + $0xc] sm:$0xf]
  %v28 = vld [vmem:[%s0 + $0x10] sm:$0xf]
  %v29 = vld [vmem:[%s0 + $0x14] sm:$0xf]
  %v30 = vld [vmem:[%s0 + $0x18] sm:$0xf]
  %v31 = vld [vmem:[%s0 + $0x1c] sm:$0xf]
  %v32 = vld [vmem:[%s0 + $0x20] sm:$0xf]
  %v33 = vld [vmem:[%s0 + $0x24] sm:$0xf]
  %v34 = vld [vmem:[%s0 + $0x28] sm:$0xf]
  %v35 = vld [vmem:[%s0 + $0x2c] sm:$0xf]
  %v36 = vld [vmem:[%s0 + $0x30] sm:$0xf]
  %v37 = vld [vmem:[%s0 + $0x34] sm:$0xf]
  %v38 = vld [vmem:[%s0 + $0x38] sm:$0xf]
  %v39 = vld [vmem:[%s0 + $0x3c] sm:$0xf]
  %v40 = vld [vmem:[%s0 + $0x40] sm:$0xf]
  %v41 = vld [vmem:[%s0 + $0x44] sm:$0xf]
  %v42 = vld [vmem:[%s0 + $0x48] sm:$0xf]
  %v43 = vld [vmem:[%s0 + $0x4c] sm:$0xf]
  %v44 = vld [vmem:[%s0 + $0x50] sm:$0xf]
  %v45 = vld [vmem:[%s0 + $0x54] sm:$0xf]
  %v46 = vld [vmem:[%s0 + $0x58] sm:$0xf]
  %v47 = vld [vmem:[%s0 + $0x5c] sm:$0xf]
  %v48 = vld [vmem:[%s0 + $0x60] sm:$0xf]
  %v49 = vld [vmem:[%s0 + $0x64] sm:$0xf]
  %v50 = vld [vmem:[%s0 + $0x68] sm:$0xf]
  %v51 = vld [vmem:[%s0 + $0x6c] sm:$0xf]
  %v52 = vld [vmem:[%s0 + $0x70] sm:$0xf]
  %v53 = vld [vmem:[%s0 + $0x74] sm:$0xf]
  %v54 = vld [vmem:[%s0 + $0x78] sm:$0xf]
  %v55 = vld [vmem:[%s0 + $0x7c] sm:$0xf]
  %v56 = vld [vmem:[%s1] sm:$0xff]
  %v57 = vld [vmem:[%s3] sm:$0x3]
  %v59 = vlaneseq
  %v60 = vshrl.u32 %v59, 7
  %v61 = vsub.s32 0, %v60
  %v62 = vrot.slane %v57, %v61
  %v63 = vlaneseq
  %v64 = vshrl.u32 %v63, 7
  %v65 = vsub.s32 1, %v64
  %v66 = vrot.slane %v57, %v65
  %v101 = vunpack.c.l.b16 %v24
  %v102 = vunpack.c.l.b16 %v25
  %v103 = vunpack.c.l.b16 %v26
  %v104 = vunpack.c.l.b16 %v27
  %v105 = vunpack.c.l.b16 %v28
  %v106 = vunpack.c.l.b16 %v29
  %v107 = vunpack.c.l.b16 %v30
  %v108 = vunpack.c.l.b16 %v31
  %v109 = vunpack.c.l.b16 %v32
  %v110 = vunpack.c.l.b16 %v33
  %v111 = vunpack.c.l.b16 %v34
  %v112 = vunpack.c.l.b16 %v35
  %v113 = vunpack.c.l.b16 %v36
  %v114 = vunpack.c.l.b16 %v37
  %v115 = vunpack.c.l.b16 %v38
  %v116 = vunpack.c.l.b16 %v39
  %v117 = vunpack.c.l.b16 %v40
  %v118 = vunpack.c.l.b16 %v41
  %v119 = vunpack.c.l.b16 %v42
  %v120 = vunpack.c.l.b16 %v43
  %v121 = vunpack.c.l.b16 %v44
  %v122 = vunpack.c.l.b16 %v45
  %v123 = vunpack.c.l.b16 %v46
  %v124 = vunpack.c.l.b16 %v47
  %v125 = vunpack.c.l.b16 %v48
  %v126 = vunpack.c.l.b16 %v49
  %v127 = vunpack.c.l.b16 %v50
  %v128 = vunpack.c.l.b16 %v51
  %v129 = vunpack.c.l.b16 %v52
  %v130 = vunpack.c.l.b16 %v53
  %v131 = vunpack.c.l.b16 %v54
  %v132 = vunpack.c.l.b16 %v55
  %v133 = vpack.c.b16 %v102, %v101
  %v134 = vpack.c.b16 %v104, %v103
  %v135 = vpack.c.b16 %v106, %v105
  %v136 = vpack.c.b16 %v108, %v107
  %v137 = vpack.c.b16 %v110, %v109
  %v138 = vpack.c.b16 %v112, %v111
  %v139 = vpack.c.b16 %v114, %v113
  %v140 = vpack.c.b16 %v116, %v115
  %v141 = vpack.c.b16 %v118, %v117
  %v142 = vpack.c.b16 %v120, %v119
  %v143 = vpack.c.b16 %v122, %v121
  %v144 = vpack.c.b16 %v124, %v123
  %v145 = vpack.c.b16 %v126, %v125
  %v146 = vpack.c.b16 %v128, %v127
  %v147 = vpack.c.b16 %v130, %v129
  %v148 = vpack.c.b16 %v132, %v131
  %v150 = vunpack.c.l.b16 %v56
  %v151 = vunpack.c.h.b16 %v56
  %v152 = vpack.c.b16 %v150, %v150
  %v153 = vpack.c.b16 %v151, %v151
  %vm154 = vcmask 64512
  %v156 = vsel %vm154, %v133, 0
  %v159 = vsel %vm154, %v134, 0
  %v162 = vsel %vm154, %v135, 0
  %v165 = vsel %vm154, %v136, 0
  %v168 = vsel %vm154, %v137, 0
  %v171 = vsel %vm154, %v138, 0
  %v174 = vsel %vm154, %v139, 0
  %v177 = vsel %vm154, %v140, 0
  %v180 = vsel %vm154, %v141, 0
  %v183 = vsel %vm154, %v142, 0
  %v186 = vsel %vm154, %v143, 0
  %v189 = vsel %vm154, %v144, 0
  %v192 = vsel %vm154, %v145, 0
  %v195 = vsel %vm154, %v146, 0
  %v198 = vsel %vm154, %v147, 0
  %v201 = vsel %vm154, %v148, 0
  %vm203 = vcmask 1043456
  %v205 = vsel %vm203, %v152, 0
  %v208 = vsel %vm203, %v153, 0
  %210 = vmatprep.subr.bf16.mxu0 0
  %211 = vmatpush1.bf16.msra.mxu0 0
  %212 = vmatprep.subr.bf16.mxu0 0
  %213 = vmatpush1.bf16.msra.mxu0 0
  %214 = vmatprep.subr.bf16.mxu0 0
  %215 = vmatpush1.bf16.msra.mxu0 0
  %216 = vmatprep.subr.bf16.mxu0 0
  %217 = vmatpush1.bf16.msra.mxu0 0
  %218 = vmatprep.subr.bf16.mxu0 0
  %219 = vmatpush1.bf16.msra.mxu0 0
  %220 = vmatprep.subr.bf16.mxu0 0
  %221 = vmatpush1.bf16.msra.mxu0 0
  %222 = vmatprep.subr.bf16.mxu0 0
  %223 = vmatpush1.bf16.msra.mxu0 0
  %224 = vmatprep.subr.bf16.mxu0 %v208
  %225 = vmatpush1.bf16.msra.mxu0 %v205
  %226 = vmatprep.subr.bf16.mxu0 0
  %227 = vmatpush2.bf16.msra.mxu0 0
  %228 = vmatprep.subr.bf16.mxu0 0
  %229 = vmatpush2.bf16.msra.mxu0 0
  %230 = vmatprep.subr.bf16.mxu0 0
  %231 = vmatpush2.bf16.msra.mxu0 0
  %232 = vmatprep.subr.bf16.mxu0 0
  %233 = vmatpush2.bf16.msra.mxu0 0
  %234 = vmatprep.subr.bf16.mxu0 0
  %235 = vmatpush2.bf16.msra.mxu0 0
  %236 = vmatprep.subr.bf16.mxu0 0
  %237 = vmatpush2.bf16.msra.mxu0 0
  %238 = vmatprep.subr.bf16.mxu0 0
  %239 = vmatpush2.bf16.msra.mxu0 0
  %240 = vmatprep.subr.bf16.mxu0 0
  %241 = vmatpush2.bf16.msra.mxu0 0
  %242 = vmatprep.mubr.bf16.mxu0 0
  %243 = vmatmul.mubr.bf16.gmra.mxu0 %v156
  %v244 = vpop.f32.mrf.mxu0
  %v245 = vadd.f32 %v62, %v244
  %v246 = vpop.f32.mrf.mxu0
  %v247 = vadd.f32 %v66, %v246
  %v248 = vpop.f32.mrf.mxu0
  %v249 = vadd.f32 %v62, %v248
  %v250 = vpop.f32.mrf.mxu0
  %v251 = vadd.f32 %v66, %v250
  %252 = vmatprep.mubr.bf16.mxu0 0
  %253 = vmatmul.mubr.bf16.gmra.mxu0 %v159
  %v254 = vpop.f32.mrf.mxu0
  %v255 = vadd.f32 %v62, %v254
  %v256 = vpop.f32.mrf.mxu0
  %v257 = vadd.f32 %v66, %v256
  %v258 = vpop.f32.mrf.mxu0
  %v259 = vadd.f32 %v62, %v258
  %v260 = vpop.f32.mrf.mxu0
  %v261 = vadd.f32 %v66, %v260
  %262 = vmatprep.mubr.bf16.mxu0 0
  %263 = vmatmul.mubr.bf16.gmra.mxu0 %v162
  %v264 = vpop.f32.mrf.mxu0
  %v265 = vadd.f32 %v62, %v264
  %v266 = vpop.f32.mrf.mxu0
  %v267 = vadd.f32 %v66, %v266
  %v268 = vpop.f32.mrf.mxu0
  %v269 = vadd.f32 %v62, %v268
  %v270 = vpop.f32.mrf.mxu0
  %v271 = vadd.f32 %v66, %v270
  %272 = vmatprep.mubr.bf16.mxu0 0
  %273 = vmatmul.mubr.bf16.gmra.mxu0 %v165
  %v274 = vpop.f32.mrf.mxu0
  %v275 = vadd.f32 %v62, %v274
  %v276 = vpop.f32.mrf.mxu0
  %v277 = vadd.f32 %v66, %v276
  %v278 = vpop.f32.mrf.mxu0
  %v279 = vadd.f32 %v62, %v278
  %v280 = vpop.f32.mrf.mxu0
  %v281 = vadd.f32 %v66, %v280
  %282 = vmatprep.mubr.bf16.mxu0 0
  %283 = vmatmul.mubr.bf16.gmra.mxu0 %v168
  %v284 = vpop.f32.mrf.mxu0
  %v285 = vadd.f32 %v62, %v284
  %v286 = vpop.f32.mrf.mxu0
  %v287 = vadd.f32 %v66, %v286
  %v288 = vpop.f32.mrf.mxu0
  %v289 = vadd.f32 %v62, %v288
  %v290 = vpop.f32.mrf.mxu0
  %v291 = vadd.f32 %v66, %v290
  %292 = vmatprep.mubr.bf16.mxu0 0
  %293 = vmatmul.mubr.bf16.gmra.mxu0 %v171
  %v294 = vpop.f32.mrf.mxu0
  %v295 = vadd.f32 %v62, %v294
  %v296 = vpop.f32.mrf.mxu0
  %v297 = vadd.f32 %v66, %v296
  %v298 = vpop.f32.mrf.mxu0
  %v299 = vadd.f32 %v62, %v298
  %v300 = vpop.f32.mrf.mxu0
  %v301 = vadd.f32 %v66, %v300
  %302 = vmatprep.mubr.bf16.mxu0 0
  %303 = vmatmul.mubr.bf16.gmra.mxu0 %v174
  %v304 = vpop.f32.mrf.mxu0
  %v305 = vadd.f32 %v62, %v304
  %v306 = vpop.f32.mrf.mxu0
  %v307 = vadd.f32 %v66, %v306
  %v308 = vpop.f32.mrf.mxu0
  %v309 = vadd.f32 %v62, %v308
  %v310 = vpop.f32.mrf.mxu0
  %v311 = vadd.f32 %v66, %v310
  %312 = vmatprep.mubr.bf16.mxu0 0
  %313 = vmatmul.mubr.bf16.gmra.mxu0 %v177
  %v314 = vpop.f32.mrf.mxu0
  %v315 = vadd.f32 %v62, %v314
  %v316 = vpop.f32.mrf.mxu0
  %v317 = vadd.f32 %v66, %v316
  %v318 = vpop.f32.mrf.mxu0
  %v319 = vadd.f32 %v62, %v318
  %v320 = vpop.f32.mrf.mxu0
  %v321 = vadd.f32 %v66, %v320
  %322 = vmatprep.mubr.bf16.mxu0 0
  %323 = vmatmul.mubr.bf16.gmra.mxu0 %v180
  %v324 = vpop.f32.mrf.mxu0
  %v325 = vadd.f32 %v62, %v324
  %v326 = vpop.f32.mrf.mxu0
  %v327 = vadd.f32 %v66, %v326
  %v328 = vpop.f32.mrf.mxu0
  %v329 = vadd.f32 %v62, %v328
  %v330 = vpop.f32.mrf.mxu0
  %v331 = vadd.f32 %v66, %v330
  %332 = vmatprep.mubr.bf16.mxu0 0
  %333 = vmatmul.mubr.bf16.gmra.mxu0 %v183
  %v334 = vpop.f32.mrf.mxu0
  %v335 = vadd.f32 %v62, %v334
  %v336 = vpop.f32.mrf.mxu0
  %v337 = vadd.f32 %v66, %v336
  %v338 = vpop.f32.mrf.mxu0
  %v339 = vadd.f32 %v62, %v338
  %v340 = vpop.f32.mrf.mxu0
  %v341 = vadd.f32 %v66, %v340
  %342 = vmatprep.mubr.bf16.mxu0 0
  %343 = vmatmul.mubr.bf16.gmra.mxu0 %v186
  %v344 = vpop.f32.mrf.mxu0
  %v345 = vadd.f32 %v62, %v344
  %v346 = vpop.f32.mrf.mxu0
  %v347 = vadd.f32 %v66, %v346
  %v348 = vpop.f32.mrf.mxu0
  %v349 = vadd.f32 %v62, %v348
  %v350 = vpop.f32.mrf.mxu0
  %v351 = vadd.f32 %v66, %v350
  %352 = vmatprep.mubr.bf16.mxu0 0
  %353 = vmatmul.mubr.bf16.gmra.mxu0 %v189
  %v354 = vpop.f32.mrf.mxu0
  %v355 = vadd.f32 %v62, %v354
  %v356 = vpop.f32.mrf.mxu0
  %v357 = vadd.f32 %v66, %v356
  %v358 = vpop.f32.mrf.mxu0
  %v359 = vadd.f32 %v62, %v358
  %v360 = vpop.f32.mrf.mxu0
  %v361 = vadd.f32 %v66, %v360
  %362 = vmatprep.mubr.bf16.mxu0 0
  %363 = vmatmul.mubr.bf16.gmra.mxu0 %v192
  %v364 = vpop.f32.mrf.mxu0
  %v365 = vadd.f32 %v62, %v364
  %v366 = vpop.f32.mrf.mxu0
  %v367 = vadd.f32 %v66, %v366
  %v368 = vpop.f32.mrf.mxu0
  %v369 = vadd.f32 %v62, %v368
  %v370 = vpop.f32.mrf.mxu0
  %v371 = vadd.f32 %v66, %v370
  %372 = vmatprep.mubr.bf16.mxu0 0
  %373 = vmatmul.mubr.bf16.gmra.mxu0 %v195
  %v374 = vpop.f32.mrf.mxu0
  %v375 = vadd.f32 %v62, %v374
  %v376 = vpop.f32.mrf.mxu0
  %v377 = vadd.f32 %v66, %v376
  %v378 = vpop.f32.mrf.mxu0
  %v379 = vadd.f32 %v62, %v378
  %v380 = vpop.f32.mrf.mxu0
  %v381 = vadd.f32 %v66, %v380
  %382 = vmatprep.mubr.bf16.mxu0 0
  %383 = vmatmul.mubr.bf16.gmra.mxu0 %v198
  %v384 = vpop.f32.mrf.mxu0
  %v385 = vadd.f32 %v62, %v384
  %v386 = vpop.f32.mrf.mxu0
  %v387 = vadd.f32 %v66, %v386
  %v388 = vpop.f32.mrf.mxu0
  %v389 = vadd.f32 %v62, %v388
  %v390 = vpop.f32.mrf.mxu0
  %v391 = vadd.f32 %v66, %v390
  %392 = vmatprep.mubr.bf16.mxu0 0
  %393 = vmatmul.mubr.bf16.gmra.mxu0 %v201
  %v394 = vpop.f32.mrf.mxu0
  %v395 = vadd.f32 %v62, %v394
  %v396 = vpop.f32.mrf.mxu0
  %v397 = vadd.f32 %v66, %v396
  %v398 = vpop.f32.mrf.mxu0
  %v399 = vadd.f32 %v62, %v398
  %v400 = vpop.f32.mrf.mxu0
  %v401 = vadd.f32 %v66, %v400
  %402 = vdwg.mxu0
  %403 = vst [vmem:[#allocation2] sm:$0xff] %v245
  %404 = vst [vmem:[#allocation2 + $0x8] sm:$0xff] %v247
  %405 = vst [vmem:[#allocation2 + $0x10] sm:$0xff] %v249
  %406 = vst [vmem:[#allocation2 + $0x18] sm:$0xff] %v251
  %407 = vst [vmem:[#allocation2 + $0x20] sm:$0xff] %v255
  %408 = vst [vmem:[#allocation2 + $0x28] sm:$0xff] %v257
  %409 = vst [vmem:[#allocation2 + $0x30] sm:$0xff] %v259
  %410 = vst [vmem:[#allocation2 + $0x38] sm:$0xff] %v261
  %411 = vst [vmem:[#allocation2 + $0x40] sm:$0xff] %v265
  %412 = vst [vmem:[#allocation2 + $0x48] sm:$0xff] %v267
  %413 = vst [vmem:[#allocation2 + $0x50] sm:$0xff] %v269
  %414 = vst [vmem:[#allocation2 + $0x58] sm:$0xff] %v271
  %415 = vst [vmem:[#allocation2 + $0x60] sm:$0xff] %v275
  %416 = vst [vmem:[#allocation2 + $0x68] sm:$0xff] %v277
  %417 = vst [vmem:[#allocation2 + $0x70] sm:$0xff] %v279
  %418 = vst [vmem:[#allocation2 + $0x78] sm:$0xff] %v281
  %419 = vst [vmem:[#allocation2 + $0x80] sm:$0xff] %v285
  %420 = vst [vmem:[#allocation2 + $0x88] sm:$0xff] %v287
  %421 = vst [vmem:[#allocation2 + $0x90] sm:$0xff] %v289
  %422 = vst [vmem:[#allocation2 + $0x98] sm:$0xff] %v291
  %423 = vst [vmem:[#allocation2 + $0xa0] sm:$0xff] %v295
  %424 = vst [vmem:[#allocation2 + $0xa8] sm:$0xff] %v297
  %425 = vst [vmem:[#allocation2 + $0xb0] sm:$0xff] %v299
  %426 = vst [vmem:[#allocation2 + $0xb8] sm:$0xff] %v301
  %427 = vst [vmem:[#allocation2 + $0xc0] sm:$0xff] %v305
  %428 = vst [vmem:[#allocation2 + $0xc8] sm:$0xff] %v307
  %429 = vst [vmem:[#allocation2 + $0xd0] sm:$0xff] %v309
  %430 = vst [vmem:[#allocation2 + $0xd8] sm:$0xff] %v311
  %431 = vst [vmem:[#allocation2 + $0xe0] sm:$0xff] %v315
  %432 = vst [vmem:[#allocation2 + $0xe8] sm:$0xff] %v317
  %433 = vst [vmem:[#allocation2 + $0xf0] sm:$0xff] %v319
  %434 = vst [vmem:[#allocation2 + $0xf8] sm:$0xff] %v321
  %435 = vst [vmem:[#allocation2 + $0x100] sm:$0xff] %v325
  %436 = vst [vmem:[#allocation2 + $0x108] sm:$0xff] %v327
  %437 = vst [vmem:[#allocation2 + $0x110] sm:$0xff] %v329
  %438 = vst [vmem:[#allocation2 + $0x118] sm:$0xff] %v331
  %439 = vst [vmem:[#allocation2 + $0x120] sm:$0xff] %v335
  %440 = vst [vmem:[#allocation2 + $0x128] sm:$0xff] %v337
  %441 = vst [vmem:[#allocation2 + $0x130] sm:$0xff] %v339
  %442 = vst [vmem:[#allocation2 + $0x138] sm:$0xff] %v341
  %443 = vst [vmem:[#allocation2 + $0x140] sm:$0xff] %v345
  %444 = vst [vmem:[#allocation2 + $0x148] sm:$0xff] %v347
  %445 = vst [vmem:[#allocation2 + $0x150] sm:$0xff] %v349
  %446 = vst [vmem:[#allocation2 + $0x158] sm:$0xff] %v351
  %447 = vst [vmem:[#allocation2 + $0x160] sm:$0xff] %v355
  %448 = vst [vmem:[#allocation2 + $0x168] sm:$0xff] %v357
  %449 = vst [vmem:[#allocation2 + $0x170] sm:$0xff] %v359
  %450 = vst [vmem:[#allocation2 + $0x178] sm:$0xff] %v361
  %451 = vst [vmem:[#allocation2 + $0x180] sm:$0xff] %v365
  %452 = vst [vmem:[#allocation2 + $0x188] sm:$0xff] %v367
  %453 = vst [vmem:[#allocation2 + $0x190] sm:$0xff] %v369
  %454 = vst [vmem:[#allocation2 + $0x198] sm:$0xff] %v371
  %455 = vst [vmem:[#allocation2 + $0x1a0] sm:$0xff] %v375
  %456 = vst [vmem:[#allocation2 + $0x1a8] sm:$0xff] %v377
  %457 = vst [vmem:[#allocation2 + $0x1b0] sm:$0xff] %v379
  %458 = vst [vmem:[#allocation2 + $0x1b8] sm:$0xff] %v381
  %459 = vst [vmem:[#allocation2 + $0x1c0] sm:$0xff] %v385
  %460 = vst [vmem:[#allocation2 + $0x1c8] sm:$0xff] %v387
  %461 = vst [vmem:[#allocation2 + $0x1d0] sm:$0xff] %v389
  %462 = vst [vmem:[#allocation2 + $0x1d8] sm:$0xff] %v391
  %463 = vst [vmem:[#allocation2 + $0x1e0] sm:$0xff] %v395
  %464 = vst [vmem:[#allocation2 + $0x1e8] sm:$0xff] %v397
  %465 = vst [vmem:[#allocation2 + $0x1f0] sm:$0xff] %v399
  %466 = vst [vmem:[#allocation2 + $0x1f8] sm:$0xff] %v401
  %v467 = vld [vmem:[#allocation2] sm:$0xff]
  %v468 = vld [vmem:[#allocation2 + $0x8] sm:$0xff]
  %v469 = vld [vmem:[#allocation2 + $0x10] sm:$0xff]
  %v470 = vld [vmem:[#allocation2 + $0x18] sm:$0xff]
  %v471 = vld [vmem:[#allocation2 + $0x20] sm:$0xff]
  %v472 = vld [vmem:[#allocation2 + $0x28] sm:$0xff]
  %v473 = vld [vmem:[#allocation2 + $0x30] sm:$0xff]
  %v474 = vld [vmem:[#allocation2 + $0x38] sm:$0xff]
  %v475 = vld [vmem:[%s2] sm:$0xff]
  %v476 = vld [vmem:[%s2 + $0x8] sm:$0xff]
  %v477 = vld [vmem:[%s2 + $0x10] sm:$0xff]
  %v478 = vld [vmem:[%s2 + $0x18] sm:$0xff]
  %v479 = vld [vmem:[%s2 + $0x20] sm:$0xff]
  %v480 = vld [vmem:[%s2 + $0x28] sm:$0xff]
  %v481 = vld [vmem:[%s2 + $0x30] sm:$0xff]
  %v482 = vld [vmem:[%s2 + $0x38] sm:$0xff]
  %v491 = vunpack.c.l.b16 %v475
  %v492 = vunpack.c.h.b16 %v475
  %v493 = vunpack.c.l.b16 %v476
  %v494 = vunpack.c.h.b16 %v476
  %v495 = vunpack.c.l.b16 %v477
  %v496 = vunpack.c.h.b16 %v477
  %v497 = vunpack.c.l.b16 %v478
  %v498 = vunpack.c.h.b16 %v478
  %v499 = vunpack.c.l.b16 %v479
  %v500 = vunpack.c.h.b16 %v479
  %v501 = vunpack.c.l.b16 %v480
  %v502 = vunpack.c.h.b16 %v480
  %v503 = vunpack.c.l.b16 %v481
  %v504 = vunpack.c.h.b16 %v481
  %v505 = vunpack.c.l.b16 %v482
  %v506 = vunpack.c.h.b16 %v482
  %v507 = vpack.c.b16 %v493, %v491
  %v508 = vpack.c.b16 %v494, %v492
  %v509 = vpack.c.b16 %v497, %v495
  %v510 = vpack.c.b16 %v498, %v496
  %v511 = vpack.c.b16 %v501, %v499
  %v512 = vpack.c.b16 %v502, %v500
  %v513 = vpack.c.b16 %v505, %v503
  %v514 = vpack.c.b16 %v506, %v504
  %vm523 = vcmask 523264
  %v525 = vsel %vm523, 0, 0
  %527 = vmatprep.subr.bf16.mxu0 0
  %528 = vmatpush1.bf16.msra.mxu0 0
  %529 = vmatprep.subr.bf16.mxu0 0
  %530 = vmatpush1.bf16.msra.mxu0 0
  %531 = vmatprep.subr.bf16.mxu0 0
  %532 = vmatpush1.bf16.msra.mxu0 0
  %533 = vmatprep.subr.bf16.mxu0 0
  %534 = vmatpush1.bf16.msra.mxu0 0
  %535 = vmatprep.subr.bf16.mxu0 %v514
  %536 = vmatpush1.bf16.msra.mxu0 %v513
  %537 = vmatprep.subr.bf16.mxu0 %v512
  %538 = vmatpush1.bf16.msra.mxu0 %v511
  %539 = vmatprep.subr.bf16.mxu0 %v510
  %540 = vmatpush1.bf16.msra.mxu0 %v509
  %541 = vmatprep.subr.bf16.mxu0 %v508
  %542 = vmatpush1.bf16.msra.mxu0 %v507
  %543 = vmatprep.subr.bf16.mxu0 0
  %544 = vmatpush2.bf16.msra.mxu0 0
  %545 = vmatprep.subr.bf16.mxu0 0
  %546 = vmatpush2.bf16.msra.mxu0 0
  %547 = vmatprep.subr.bf16.mxu0 0
  %548 = vmatpush2.bf16.msra.mxu0 0
  %549 = vmatprep.subr.bf16.mxu0 0
  %550 = vmatpush2.bf16.msra.mxu0 0
  %551 = vmatprep.subr.bf16.mxu0 0
  %552 = vmatpush2.bf16.msra.mxu0 0
  %553 = vmatprep.subr.bf16.mxu0 0
  %554 = vmatpush2.bf16.msra.mxu0 0
  %555 = vmatprep.subr.bf16.mxu0 0
  %556 = vmatpush2.bf16.msra.mxu0 0
  %557 = vmatprep.subr.bf16.mxu0 0
  %558 = vmatpush2.bf16.msra.mxu0 0
  %559 = vmatprep.mubr.bf16.mxu0 0
  %560 = vmatmul.mubr.bf16.gmra.mxu0 %v525
  %v561 = vpop.f32.mrf.mxu0
  %v562 = vadd.f32 0.0, %v561
  %v563 = vpop.f32.mrf.mxu0
  %v564 = vadd.f32 0.0, %v563
  %v565 = vpop.f32.mrf.mxu0
  %v566 = vadd.f32 0.0, %v565
  %v567 = vpop.f32.mrf.mxu0
  %v568 = vadd.f32 0.0, %v567
  %569 = vmatprep.mubr.bf16.mxu0 0
  %570 = vmatmul.mubr.bf16.gmra.mxu0 %v525
  %v571 = vpop.f32.mrf.mxu0
  %v572 = vadd.f32 0.0, %v571
  %v573 = vpop.f32.mrf.mxu0
  %v574 = vadd.f32 0.0, %v573
  %v575 = vpop.f32.mrf.mxu0
  %v576 = vadd.f32 0.0, %v575
  %v577 = vpop.f32.mrf.mxu0
  %v578 = vadd.f32 0.0, %v577
  %579 = vdwg.mxu0
  %v580 = vadd.f32 %v467, %v562
  %v581 = vadd.f32 %v468, %v564
  %v582 = vadd.f32 %v469, %v566
  %v583 = vadd.f32 %v470, %v568
  %v584 = vadd.f32 %v471, %v572
  %v585 = vadd.f32 %v472, %v574
  %v586 = vadd.f32 %v473, %v576
  %v587 = vadd.f32 %v474, %v578
  %v588 = vxor.u32 %v580, 2147483648
  %v589 = vxor.u32 %v581, 2147483648
  %v590 = vxor.u32 %v582, 2147483648
  %v591 = vxor.u32 %v583, 2147483648
  %v592 = vxor.u32 %v584, 2147483648
  %v593 = vxor.u32 %v585, 2147483648
  %v594 = vxor.u32 %v586, 2147483648
  %v595 = vxor.u32 %v587, 2147483648
  %v596 = vmul.f32 %v588, 1.442695
  %v597 = vpow.pop %v596
  %v598 = vmul.f32 %v589, 1.442695
  %v599 = vpow.pop %v598
  %v600 = vmul.f32 %v590, 1.442695
  %v601 = vpow.pop %v600
  %v602 = vmul.f32 %v591, 1.442695
  %v603 = vpow.pop %v602
  %v604 = vmul.f32 %v592, 1.442695
  %v605 = vpow.pop %v604
  %v606 = vmul.f32 %v593, 1.442695
  %v607 = vpow.pop %v606
  %v608 = vmul.f32 %v594, 1.442695
  %v609 = vpow.pop %v608
  %v610 = vmul.f32 %v595, 1.442695
  %v611 = vpow.pop %v610
  %v612 = vadd.f32 %v597, 1.0
  %v613 = vadd.f32 %v599, 1.0
  %v614 = vadd.f32 %v601, 1.0
  %v615 = vadd.f32 %v603, 1.0
  %v616 = vadd.f32 %v605, 1.0
  %v617 = vadd.f32 %v607, 1.0
  %v618 = vadd.f32 %v609, 1.0
  %v619 = vadd.f32 %v611, 1.0
  %v620 = vrcp.pop %v612
  %v621 = vmul.f32 1.0, %v620
  %v622 = vrcp.pop %v613
  %v623 = vmul.f32 1.0, %v622
  %v624 = vrcp.pop %v614
  %v625 = vmul.f32 1.0, %v624
  %v626 = vrcp.pop %v615
  %v627 = vmul.f32 1.0, %v626
  %v628 = vrcp.pop %v616
  %v629 = vmul.f32 1.0, %v628
  %v630 = vrcp.pop %v617
  %v631 = vmul.f32 1.0, %v630
  %v632 = vrcp.pop %v618
  %v633 = vmul.f32 1.0, %v632
  %v634 = vrcp.pop %v619
  %v635 = vmul.f32 1.0, %v634
  %v636 = vtanh.pop %v581
  %v637 = vtanh.pop %v583
  %v638 = vtanh.pop %v585
  %v639 = vtanh.pop %v587
  %v640 = vmul.f32 %v621, 0.0
  %v641 = vmul.f32 %v625, 0.0
  %v642 = vmul.f32 %v629, 0.0
  %v643 = vmul.f32 %v633, 0.0
  %648 = vrot.lane.b32.xlu0 %v636, 64
  %v649 = vpop.permute.xlu0 %648
  %650 = vrot.lane.b32.xlu0 %v637, 64
  %v651 = vpop.permute.xlu0 %650
  %652 = vrot.lane.b32.xlu0 %v638, 64
  %v653 = vpop.permute.xlu0 %652
  %654 = vrot.lane.b32.xlu0 %v639, 64
  %v655 = vpop.permute.xlu0 %654
  %v660 = vmul.f32 %v621, %v649
  %v661 = vmul.f32 %v625, %v651
  %v662 = vmul.f32 %v629, %v653
  %v663 = vmul.f32 %v633, %v655
  %668 = vrot.lane.b32.xlu0 %v660, 64
  %v669 = vpop.permute.xlu0 %668
  %670 = vrot.lane.b32.xlu0 %v661, 64
  %v671 = vpop.permute.xlu0 %670
  %672 = vrot.lane.b32.xlu0 %v662, 64
  %v673 = vpop.permute.xlu0 %672
  %674 = vrot.lane.b32.xlu0 %v663, 64
  %v675 = vpop.permute.xlu0 %674
  %v680 = vadd.f32 %v640, %v669
  %v681 = vadd.f32 %v641, %v671
  %v682 = vadd.f32 %v642, %v673
  %v683 = vadd.f32 %v643, %v675
  %v684 = vtanh.pop %v680
  %v685 = vtanh.pop %v681
  %v686 = vtanh.pop %v682
  %v687 = vtanh.pop %v683
  %692 = vrot.lane.b32.xlu0 %v684, 64
  %v693 = vpop.permute.xlu0 %692
  %694 = vrot.lane.b32.xlu0 %v685, 64
  %v695 = vpop.permute.xlu0 %694
  %696 = vrot.lane.b32.xlu0 %v686, 64
  %v697 = vpop.permute.xlu0 %696
  %698 = vrot.lane.b32.xlu0 %v687, 64
  %v699 = vpop.permute.xlu0 %698
  %v704 = vmul.f32 %v623, %v693
  %v705 = vmul.f32 %v627, %v695
  %v706 = vmul.f32 %v631, %v697
  %v707 = vmul.f32 %v635, %v699
  %v708 = vsel %vm523, %v704, -inf
  %v709 = vsel %vm523, %v705, -inf
  %v710 = vmax.f32 %v708, %v709
  %v711 = vrot.slane %v710, 4
  %v712 = vmax.f32 %v710, %v711
  %v713 = vrot.slane %v712, 2
  %v714 = vmax.f32 %v712, %v713
  %v715 = vrot.slane %v714, 1
  %v716 = vmax.f32 %v714, %v715
  %v717 = vsel %vm523, %v704, 0.0
  %v718 = vsel %vm523, %v705, 0.0
  %v719 = vadd.f32 %v717, %v718
  %v720 = vrot.slane %v719, 4
  %v721 = vadd.f32 %v719, %v720
  %v722 = vrot.slane %v721, 2
  %v723 = vadd.f32 %v721, %v722
  %v724 = vrot.slane %v723, 1
  %v725 = vadd.f32 %v723, %v724
  %v726 = vrcp.pop 16.0
  %v727 = vmul.f32 %v725, %v726
  %729 = vrot.lane.b32.xlu0 %v727, 64
  %v730 = vpop.permute.xlu0 %729
  %v732 = vsel %vm523, %v716, %v730
  %733 = vst [vmem:[#allocation3] sm:$0x1] %v732
  %v734 = vsel %vm523, %v706, -inf
  %v735 = vsel %vm523, %v707, -inf
  %v736 = vmax.f32 %v734, %v735
  %v737 = vrot.slane %v736, 4
  %v738 = vmax.f32 %v736, %v737
  %v739 = vrot.slane %v738, 2
  %v740 = vmax.f32 %v738, %v739
  %v741 = vrot.slane %v740, 1
  %v742 = vmax.f32 %v740, %v741
  %v743 = vsel %vm523, %v706, 0.0
  %v744 = vsel %vm523, %v707, 0.0
  %v745 = vadd.f32 %v743, %v744
  %v746 = vrot.slane %v745, 4
  %v747 = vadd.f32 %v745, %v746
  %v748 = vrot.slane %v747, 2
  %v749 = vadd.f32 %v747, %v748
  %v750 = vrot.slane %v749, 1
  %v751 = vadd.f32 %v749, %v750
  %v752 = vmul.f32 %v751, %v726
  %754 = vrot.lane.b32.xlu0 %v752, 64
  %v755 = vpop.permute.xlu0 %754
  %v757 = vsel %vm523, %v742, %v755
  %758 = vst [vmem:[#allocation4] sm:$0x1] %v757
  %v759 = vld [vmem:[#allocation2 + $0x40] sm:$0xff]
  %v760 = vld [vmem:[#allocation2 + $0x48] sm:$0xff]
  %v761 = vld [vmem:[#allocation2 + $0x50] sm:$0xff]
  %v762 = vld [vmem:[#allocation2 + $0x58] sm:$0xff]
  %v763 = vld [vmem:[#allocation2 + $0x60] sm:$0xff]
  %v764 = vld [vmem:[#allocation2 + $0x68] sm:$0xff]
  %v765 = vld [vmem:[#allocation2 + $0x70] sm:$0xff]
  %v766 = vld [vmem:[#allocation2 + $0x78] sm:$0xff]
  %v767 = vpack.c.bf16 %v705, %v704
  %v768 = vpack.c.bf16 %v707, %v706
  %v769 = vld [vmem:[%s2] sm:$0xff]
  %v770 = vld [vmem:[%s2 + $0x8] sm:$0xff]
  %v771 = vld [vmem:[%s2 + $0x10] sm:$0xff]
  %v772 = vld [vmem:[%s2 + $0x18] sm:$0xff]
  %v773 = vld [vmem:[%s2 + $0x20] sm:$0xff]
  %v774 = vld [vmem:[%s2 + $0x28] sm:$0xff]
  %v775 = vld [vmem:[%s2 + $0x30] sm:$0xff]
  %v776 = vld [vmem:[%s2 + $0x38] sm:$0xff]
  %v785 = vunpack.c.l.b16 %v769
  %v786 = vunpack.c.h.b16 %v769
  %v787 = vunpack.c.l.b16 %v770
  %v788 = vunpack.c.h.b16 %v770
  %v789 = vunpack.c.l.b16 %v771
  %v790 = vunpack.c.h.b16 %v771
  %v791 = vunpack.c.l.b16 %v772
  %v792 = vunpack.c.h.b16 %v772
  %v793 = vunpack.c.l.b16 %v773
  %v794 = vunpack.c.h.b16 %v773
  %v795 = vunpack.c.l.b16 %v774
  %v796 = vunpack.c.h.b16 %v774
  %v797 = vunpack.c.l.b16 %v775
  %v798 = vunpack.c.h.b16 %v775
  %v799 = vunpack.c.l.b16 %v776
  %v800 = vunpack.c.h.b16 %v776
  %v801 = vpack.c.b16 %v787, %v785
  %v802 = vpack.c.b16 %v788, %v786
  %v803 = vpack.c.b16 %v791, %v789
  %v804 = vpack.c.b16 %v792, %v790
  %v805 = vpack.c.b16 %v795, %v793
  %v806 = vpack.c.b16 %v796, %v794
  %v807 = vpack.c.b16 %v799, %v797
  %v808 = vpack.c.b16 %v800, %v798
  %v818 = vsel %vm523, %v767, 0
  %v821 = vsel %vm523, %v768, 0
  %823 = vmatprep.subr.bf16.mxu0 0
  %824 = vmatpush1.bf16.msra.mxu0 0
  %825 = vmatprep.subr.bf16.mxu0 0
  %826 = vmatpush1.bf16.msra.mxu0 0
  %827 = vmatprep.subr.bf16.mxu0 0
  %828 = vmatpush1.bf16.msra.mxu0 0
  %829 = vmatprep.subr.bf16.mxu0 0
  %830 = vmatpush1.bf16.msra.mxu0 0
  %831 = vmatprep.subr.bf16.mxu0 %v808
  %832 = vmatpush1.bf16.msra.mxu0 %v807
  %833 = vmatprep.subr.bf16.mxu0 %v806
  %834 = vmatpush1.bf16.msra.mxu0 %v805
  %835 = vmatprep.subr.bf16.mxu0 %v804
  %836 = vmatpush1.bf16.msra.mxu0 %v803
  %837 = vmatprep.subr.bf16.mxu0 %v802
  %838 = vmatpush1.bf16.msra.mxu0 %v801
  %839 = vmatprep.subr.bf16.mxu0 0
  %840 = vmatpush2.bf16.msra.mxu0 0
  %841 = vmatprep.subr.bf16.mxu0 0
  %842 = vmatpush2.bf16.msra.mxu0 0
  %843 = vmatprep.subr.bf16.mxu0 0
  %844 = vmatpush2.bf16.msra.mxu0 0
  %845 = vmatprep.subr.bf16.mxu0 0
  %846 = vmatpush2.bf16.msra.mxu0 0
  %847 = vmatprep.subr.bf16.mxu0 0
  %848 = vmatpush2.bf16.msra.mxu0 0
  %849 = vmatprep.subr.bf16.mxu0 0
  %850 = vmatpush2.bf16.msra.mxu0 0
  %851 = vmatprep.subr.bf16.mxu0 0
  %852 = vmatpush2.bf16.msra.mxu0 0
  %853 = vmatprep.subr.bf16.mxu0 0
  %854 = vmatpush2.bf16.msra.mxu0 0
  %855 = vmatprep.mubr.bf16.mxu0 0
  %856 = vmatmul.mubr.bf16.gmra.mxu0 %v818
  %v857 = vpop.f32.mrf.mxu0
  %v858 = vadd.f32 0.0, %v857
  %v859 = vpop.f32.mrf.mxu0
  %v860 = vadd.f32 0.0, %v859
  %v861 = vpop.f32.mrf.mxu0
  %v862 = vadd.f32 0.0, %v861
  %v863 = vpop.f32.mrf.mxu0
  %v864 = vadd.f32 0.0, %v863
  %865 = vmatprep.mubr.bf16.mxu0 0
  %866 = vmatmul.mubr.bf16.gmra.mxu0 %v821
  %v867 = vpop.f32.mrf.mxu0
  %v868 = vadd.f32 0.0, %v867
  %v869 = vpop.f32.mrf.mxu0
  %v870 = vadd.f32 0.0, %v869
  %v871 = vpop.f32.mrf.mxu0
  %v872 = vadd.f32 0.0, %v871
  %v873 = vpop.f32.mrf.mxu0
  %v874 = vadd.f32 0.0, %v873
  %875 = vdwg.mxu0
  %v876 = vadd.f32 %v759, %v858
  %v877 = vadd.f32 %v760, %v860
  %v878 = vadd.f32 %v761, %v862
  %v879 = vadd.f32 %v762, %v864
  %v880 = vadd.f32 %v763, %v868
  %v881 = vadd.f32 %v764, %v870
  %v882 = vadd.f32 %v765, %v872
  %v883 = vadd.f32 %v766, %v874
  %v884 = vxor.u32 %v876, 2147483648
  %v885 = vxor.u32 %v877, 2147483648
  %v886 = vxor.u32 %v878, 2147483648
  %v887 = vxor.u32 %v879, 2147483648
  %v888 = vxor.u32 %v880, 2147483648
  %v889 = vxor.u32 %v881, 2147483648
  %v890 = vxor.u32 %v882, 2147483648
  %v891 = vxor.u32 %v883, 2147483648
  %v892 = vmul.f32 %v884, 1.442695
  %v893 = vpow.pop %v892
  %v894 = vmul.f32 %v885, 1.442695
  %v895 = vpow.pop %v894
  %v896 = vmul.f32 %v886, 1.442695
  %v897 = vpow.pop %v896
  %v898 = vmul.f32 %v887, 1.442695
  %v899 = vpow.pop %v898
  %v900 = vmul.f32 %v888, 1.442695
  %v901 = vpow.pop %v900
  %v902 = vmul.f32 %v889, 1.442695
  %v903 = vpow.pop %v902
  %v904 = vmul.f32 %v890, 1.442695
  %v905 = vpow.pop %v904
  %v906 = vmul.f32 %v891, 1.442695
  %v907 = vpow.pop %v906
  %v908 = vadd.f32 %v893, 1.0
  %v909 = vadd.f32 %v895, 1.0
  %v910 = vadd.f32 %v897, 1.0
  %v911 = vadd.f32 %v899, 1.0
  %v912 = vadd.f32 %v901, 1.0
  %v913 = vadd.f32 %v903, 1.0
  %v914 = vadd.f32 %v905, 1.0
  %v915 = vadd.f32 %v907, 1.0
  %v916 = vrcp.pop %v908
  %v917 = vmul.f32 1.0, %v916
  %v918 = vrcp.pop %v909
  %v919 = vmul.f32 1.0, %v918
  %v920 = vrcp.pop %v910
  %v921 = vmul.f32 1.0, %v920
  %v922 = vrcp.pop %v911
  %v923 = vmul.f32 1.0, %v922
  %v924 = vrcp.pop %v912
  %v925 = vmul.f32 1.0, %v924
  %v926 = vrcp.pop %v913
  %v927 = vmul.f32 1.0, %v926
  %v928 = vrcp.pop %v914
  %v929 = vmul.f32 1.0, %v928
  %v930 = vrcp.pop %v915
  %v931 = vmul.f32 1.0, %v930
  %v932 = vtanh.pop %v877
  %v933 = vtanh.pop %v879
  %v934 = vtanh.pop %v881
  %v935 = vtanh.pop %v883
  %v936 = vmul.f32 %v917, %v680
  %v937 = vmul.f32 %v921, %v681
  %v938 = vmul.f32 %v925, %v682
  %v939 = vmul.f32 %v929, %v683
  %944 = vrot.lane.b32.xlu0 %v932, 64
  %v945 = vpop.permute.xlu0 %944
  %946 = vrot.lane.b32.xlu0 %v933, 64
  %v947 = vpop.permute.xlu0 %946
  %948 = vrot.lane.b32.xlu0 %v934, 64
  %v949 = vpop.permute.xlu0 %948
  %950 = vrot.lane.b32.xlu0 %v935, 64
  %v951 = vpop.permute.xlu0 %950
  %v956 = vmul.f32 %v917, %v945
  %v957 = vmul.f32 %v921, %v947
  %v958 = vmul.f32 %v925, %v949
  %v959 = vmul.f32 %v929, %v951
  %964 = vrot.lane.b32.xlu0 %v956, 64
  %v965 = vpop.permute.xlu0 %964
  %966 = vrot.lane.b32.xlu0 %v957, 64
  %v967 = vpop.permute.xlu0 %966
  %968 = vrot.lane.b32.xlu0 %v958, 64
  %v969 = vpop.permute.xlu0 %968
  %970 = vrot.lane.b32.xlu0 %v959, 64
  %v971 = vpop.permute.xlu0 %970
  %v976 = vadd.f32 %v936, %v965
  %v977 = vadd.f32 %v937, %v967
  %v978 = vadd.f32 %v938, %v969
  %v979 = vadd.f32 %v939, %v971
  %v980 = vtanh.pop %v976
  %v981 = vtanh.pop %v977
  %v982 = vtanh.pop %v978
  %v983 = vtanh.pop %v979
  %988 = vrot.lane.b32.xlu0 %v980, 64
  %v989 = vpop.permute.xlu0 %988
  %990 = vrot.lane.b32.xlu0 %v981, 64
  %v991 = vpop.permute.xlu0 %990
  %992 = vrot.lane.b32.xlu0 %v982, 64
  %v993 = vpop.permute.xlu0 %992
  %994 = vrot.lane.b32.xlu0 %v983, 64
  %v995 = vpop.permute.xlu0 %994
  %v1000 = vmul.f32 %v919, %v989
  %v1001 = vmul.f32 %v923, %v991
  %v1002 = vmul.f32 %v927, %v993
  %v1003 = vmul.f32 %v931, %v995
  %v1004 = vsel %vm523, %v1000, -inf
  %v1005 = vsel %vm523, %v1001, -inf
  %v1006 = vmax.f32 %v1004, %v1005
  %v1007 = vrot.slane %v1006, 4
  %v1008 = vmax.f32 %v1006, %v1007
  %v1009 = vrot.slane %v1008, 2
  %v1010 = vmax.f32 %v1008, %v1009
  %v1011 = vrot.slane %v1010, 1
  %v1012 = vmax.f32 %v1010, %v1011
  %v1013 = vsel %vm523, %v1000, 0.0
  %v1014 = vsel %vm523, %v1001, 0.0
  %v1015 = vadd.f32 %v1013, %v1014
  %v1016 = vrot.slane %v1015, 4
  %v1017 = vadd.f32 %v1015, %v1016
  %v1018 = vrot.slane %v1017, 2
  %v1019 = vadd.f32 %v1017, %v1018
  %v1020 = vrot.slane %v1019, 1
  %v1021 = vadd.f32 %v1019, %v1020
  %v1022 = vmul.f32 %v1021, %v726
  %1024 = vrot.lane.b32.xlu0 %v1022, 64
  %v1025 = vpop.permute.xlu0 %1024
  %v1027 = vsel %vm523, %v1012, %v1025
  %1028 = vst [vmem:[#allocation3 + $0x1] sm:$0x1] %v1027
  %v1029 = vsel %vm523, %v1002, -inf
  %v1030 = vsel %vm523, %v1003, -inf
  %v1031 = vmax.f32 %v1029, %v1030
  %v1032 = vrot.slane %v1031, 4
  %v1033 = vmax.f32 %v1031, %v1032
  %v1034 = vrot.slane %v1033, 2
  %v1035 = vmax.f32 %v1033, %v1034
  %v1036 = vrot.slane %v1035, 1
  %v1037 = vmax.f32 %v1035, %v1036
  %v1038 = vsel %vm523, %v1002, 0.0
  %v1039 = vsel %vm523, %v1003, 0.0
  %v1040 = vadd.f32 %v1038, %v1039
  %v1041 = vrot.slane %v1040, 4
  %v1042 = vadd.f32 %v1040, %v1041
  %v1043 = vrot.slane %v1042, 2
  %v1044 = vadd.f32 %v1042, %v1043
  %v1045 = vrot.slane %v1044, 1
  %v1046 = vadd.f32 %v1044, %v1045
  %v1047 = vmul.f32 %v1046, %v726
  %1049 = vrot.lane.b32.xlu0 %v1047, 64
  %v1050 = vpop.permute.xlu0 %1049
  %v1052 = vsel %vm523, %v1037, %v1050
  %1053 = vst [vmem:[#allocation4 + $0x1] sm:$0x1] %v1052
  %v1054 = vld [vmem:[#allocation2 + $0x80] sm:$0xff]
  %v1055 = vld [vmem:[#allocation2 + $0x88] sm:$0xff]
  %v1056 = vld [vmem:[#allocation2 + $0x90] sm:$0xff]
  %v1057 = vld [vmem:[#allocation2 + $0x98] sm:$0xff]
  %v1058 = vld [vmem:[#allocation2 + $0xa0] sm:$0xff]
  %v1059 = vld [vmem:[#allocation2 + $0xa8] sm:$0xff]
  %v1060 = vld [vmem:[#allocation2 + $0xb0] sm:$0xff]
  %v1061 = vld [vmem:[#allocation2 + $0xb8] sm:$0xff]
  %v1062 = vpack.c.bf16 %v1001, %v1000
  %v1063 = vpack.c.bf16 %v1003, %v1002
  %v1064 = vld [vmem:[%s2] sm:$0xff]
  %v1065 = vld [vmem:[%s2 + $0x8] sm:$0xff]
  %v1066 = vld [vmem:[%s2 + $0x10] sm:$0xff]
  %v1067 = vld [vmem:[%s2 + $0x18] sm:$0xff]
  %v1068 = vld [vmem:[%s2 + $0x20] sm:$0xff]
  %v1069 = vld [vmem:[%s2 + $0x28] sm:$0xff]
  %v1070 = vld [vmem:[%s2 + $0x30] sm:$0xff]
  %v1071 = vld [vmem:[%s2 + $0x38] sm:$0xff]
  %v1080 = vunpack.c.l.b16 %v1064
  %v1081 = vunpack.c.h.b16 %v1064
  %v1082 = vunpack.c.l.b16 %v1065
  %v1083 = vunpack.c.h.b16 %v1065
  %v1084 = vunpack.c.l.b16 %v1066
  %v1085 = vunpack.c.h.b16 %v1066
  %v1086 = vunpack.c.l.b16 %v1067
  %v1087 = vunpack.c.h.b16 %v1067
  %v1088 = vunpack.c.l.b16 %v1068
  %v1089 = vunpack.c.h.b16 %v1068
  %v1090 = vunpack.c.l.b16 %v1069
  %v1091 = vunpack.c.h.b16 %v1069
  %v1092 = vunpack.c.l.b16 %v1070
  %v1093 = vunpack.c.h.b16 %v1070
  %v1094 = vunpack.c.l.b16 %v1071
  %v1095 = vunpack.c.h.b16 %v1071
  %v1096 = vpack.c.b16 %v1082, %v1080
  %v1097 = vpack.c.b16 %v1083, %v1081
  %v1098 = vpack.c.b16 %v1086, %v1084
  %v1099 = vpack.c.b16 %v1087, %v1085
  %v1100 = vpack.c.b16 %v1090, %v1088
  %v1101 = vpack.c.b16 %v1091, %v1089
  %v1102 = vpack.c.b16 %v1094, %v1092
  %v1103 = vpack.c.b16 %v1095, %v1093
  %v1113 = vsel %vm523, %v1062, 0
  %v1116 = vsel %vm523, %v1063, 0
  %1118 = vmatprep.subr.bf16.mxu0 0
  %1119 = vmatpush1.bf16.msra.mxu0 0
  %1120 = vmatprep.subr.bf16.mxu0 0
  %1121 = vmatpush1.bf16.msra.mxu0 0
  %1122 = vmatprep.subr.bf16.mxu0 0
  %1123 = vmatpush1.bf16.msra.mxu0 0
  %1124 = vmatprep.subr.bf16.mxu0 0
  %1125 = vmatpush1.bf16.msra.mxu0 0
  %1126 = vmatprep.subr.bf16.mxu0 %v1103
  %1127 = vmatpush1.bf16.msra.mxu0 %v1102
  %1128 = vmatprep.subr.bf16.mxu0 %v1101
  %1129 = vmatpush1.bf16.msra.mxu0 %v1100
  %1130 = vmatprep.subr.bf16.mxu0 %v1099
  %1131 = vmatpush1.bf16.msra.mxu0 %v1098
  %1132 = vmatprep.subr.bf16.mxu0 %v1097
  %1133 = vmatpush1.bf16.msra.mxu0 %v1096
  %1134 = vmatprep.subr.bf16.mxu0 0
  %1135 = vmatpush2.bf16.msra.mxu0 0
  %1136 = vmatprep.subr.bf16.mxu0 0
  %1137 = vmatpush2.bf16.msra.mxu0 0
  %1138 = vmatprep.subr.bf16.mxu0 0
  %1139 = vmatpush2.bf16.msra.mxu0 0
  %1140 = vmatprep.subr.bf16.mxu0 0
  %1141 = vmatpush2.bf16.msra.mxu0 0
  %1142 = vmatprep.subr.bf16.mxu0 0
  %1143 = vmatpush2.bf16.msra.mxu0 0
  %1144 = vmatprep.subr.bf16.mxu0 0
  %1145 = vmatpush2.bf16.msra.mxu0 0
  %1146 = vmatprep.subr.bf16.mxu0 0
  %1147 = vmatpush2.bf16.msra.mxu0 0
  %1148 = vmatprep.subr.bf16.mxu0 0
  %1149 = vmatpush2.bf16.msra.mxu0 0
  %1150 = vmatprep.mubr.bf16.mxu0 0
  %1151 = vmatmul.mubr.bf16.gmra.mxu0 %v1113
  %v1152 = vpop.f32.mrf.mxu0
  %v1153 = vadd.f32 0.0, %v1152
  %v1154 = vpop.f32.mrf.mxu0
  %v1155 = vadd.f32 0.0, %v1154
  %v1156 = vpop.f32.mrf.mxu0
  %v1157 = vadd.f32 0.0, %v1156
  %v1158 = vpop.f32.mrf.mxu0
  %v1159 = vadd.f32 0.0, %v1158
  %1160 = vmatprep.mubr.bf16.mxu0 0
  %1161 = vmatmul.mubr.bf16.gmra.mxu0 %v1116
  %v1162 = vpop.f32.mrf.mxu0
  %v1163 = vadd.f32 0.0, %v1162
  %v1164 = vpop.f32.mrf.mxu0
  %v1165 = vadd.f32 0.0, %v1164
  %v1166 = vpop.f32.mrf.mxu0
  %v1167 = vadd.f32 0.0, %v1166
  %v1168 = vpop.f32.mrf.mxu0
  %v1169 = vadd.f32 0.0, %v1168
  %1170 = vdwg.mxu0
  %v1171 = vadd.f32 %v1054, %v1153
  %v1172 = vadd.f32 %v1055, %v1155
  %v1173 = vadd.f32 %v1056, %v1157
  %v1174 = vadd.f32 %v1057, %v1159
  %v1175 = vadd.f32 %v1058, %v1163
  %v1176 = vadd.f32 %v1059, %v1165
  %v1177 = vadd.f32 %v1060, %v1167
  %v1178 = vadd.f32 %v1061, %v1169
  %v1179 = vxor.u32 %v1171, 2147483648
  %v1180 = vxor.u32 %v1172, 2147483648
  %v1181 = vxor.u32 %v1173, 2147483648
  %v1182 = vxor.u32 %v1174, 2147483648
  %v1183 = vxor.u32 %v1175, 2147483648
  %v1184 = vxor.u32 %v1176, 2147483648
  %v1185 = vxor.u32 %v1177, 2147483648
  %v1186 = vxor.u32 %v1178, 2147483648
  %v1187 = vmul.f32 %v1179, 1.442695
  %v1188 = vpow.pop %v1187
  %v1189 = vmul.f32 %v1180, 1.442695
  %v1190 = vpow.pop %v1189
  %v1191 = vmul.f32 %v1181, 1.442695
  %v1192 = vpow.pop %v1191
  %v1193 = vmul.f32 %v1182, 1.442695
  %v1194 = vpow.pop %v1193
  %v1195 = vmul.f32 %v1183, 1.442695
  %v1196 = vpow.pop %v1195
  %v1197 = vmul.f32 %v1184, 1.442695
  %v1198 = vpow.pop %v1197
  %v1199 = vmul.f32 %v1185, 1.442695
  %v1200 = vpow.pop %v1199
  %v1201 = vmul.f32 %v1186, 1.442695
  %v1202 = vpow.pop %v1201
  %v1203 = vadd.f32 %v1188, 1.0
  %v1204 = vadd.f32 %v1190, 1.0
  %v1205 = vadd.f32 %v1192, 1.0
  %v1206 = vadd.f32 %v1194, 1.0
  %v1207 = vadd.f32 %v1196, 1.0
  %v1208 = vadd.f32 %v1198, 1.0
  %v1209 = vadd.f32 %v1200, 1.0
  %v1210 = vadd.f32 %v1202, 1.0
  %v1211 = vrcp.pop %v1203
  %v1212 = vmul.f32 1.0, %v1211
  %v1213 = vrcp.pop %v1204
  %v1214 = vmul.f32 1.0, %v1213
  %v1215 = vrcp.pop %v1205
  %v1216 = vmul.f32 1.0, %v1215
  %v1217 = vrcp.pop %v1206
  %v1218 = vmul.f32 1.0, %v1217
  %v1219 = vrcp.pop %v1207
  %v1220 = vmul.f32 1.0, %v1219
  %v1221 = vrcp.pop %v1208
  %v1222 = vmul.f32 1.0, %v1221
  %v1223 = vrcp.pop %v1209
  %v1224 = vmul.f32 1.0, %v1223
  %v1225 = vrcp.pop %v1210
  %v1226 = vmul.f32 1.0, %v1225
  %v1227 = vtanh.pop %v1172
  %v1228 = vtanh.pop %v1174
  %v1229 = vtanh.pop %v1176
  %v1230 = vtanh.pop %v1178
  %v1231 = vmul.f32 %v1212, %v976
  %v1232 = vmul.f32 %v1216, %v977
  %v1233 = vmul.f32 %v1220, %v978
  %v1234 = vmul.f32 %v1224, %v979
  %1239 = vrot.lane.b32.xlu0 %v1227, 64
  %v1240 = vpop.permute.xlu0 %1239
  %1241 = vrot.lane.b32.xlu0 %v1228, 64
  %v1242 = vpop.permute.xlu0 %1241
  %1243 = vrot.lane.b32.xlu0 %v1229, 64
  %v1244 = vpop.permute.xlu0 %1243
  %1245 = vrot.lane.b32.xlu0 %v1230, 64
  %v1246 = vpop.permute.xlu0 %1245
  %v1251 = vmul.f32 %v1212, %v1240
  %v1252 = vmul.f32 %v1216, %v1242
  %v1253 = vmul.f32 %v1220, %v1244
  %v1254 = vmul.f32 %v1224, %v1246
  %1259 = vrot.lane.b32.xlu0 %v1251, 64
  %v1260 = vpop.permute.xlu0 %1259
  %1261 = vrot.lane.b32.xlu0 %v1252, 64
  %v1262 = vpop.permute.xlu0 %1261
  %1263 = vrot.lane.b32.xlu0 %v1253, 64
  %v1264 = vpop.permute.xlu0 %1263
  %1265 = vrot.lane.b32.xlu0 %v1254, 64
  %v1266 = vpop.permute.xlu0 %1265
  %v1271 = vadd.f32 %v1231, %v1260
  %v1272 = vadd.f32 %v1232, %v1262
  %v1273 = vadd.f32 %v1233, %v1264
  %v1274 = vadd.f32 %v1234, %v1266
  %v1275 = vtanh.pop %v1271
  %v1276 = vtanh.pop %v1272
  %v1277 = vtanh.pop %v1273
  %v1278 = vtanh.pop %v1274
  %1283 = vrot.lane.b32.xlu0 %v1275, 64
  %v1284 = vpop.permute.xlu0 %1283
  %1285 = vrot.lane.b32.xlu0 %v1276, 64
  %v1286 = vpop.permute.xlu0 %1285
  %1287 = vrot.lane.b32.xlu0 %v1277, 64
  %v1288 = vpop.permute.xlu0 %1287
  %1289 = vrot.lane.b32.xlu0 %v1278, 64
  %v1290 = vpop.permute.xlu0 %1289
  %v1295 = vmul.f32 %v1214, %v1284
  %v1296 = vmul.f32 %v1218, %v1286
  %v1297 = vmul.f32 %v1222, %v1288
  %v1298 = vmul.f32 %v1226, %v1290
  %v1299 = vsel %vm523, %v1295, -inf
  %v1300 = vsel %vm523, %v1296, -inf
  %v1301 = vmax.f32 %v1299, %v1300
  %v1302 = vrot.slane %v1301, 4
  %v1303 = vmax.f32 %v1301, %v1302
  %v1304 = vrot.slane %v1303, 2
  %v1305 = vmax.f32 %v1303, %v1304
  %v1306 = vrot.slane %v1305, 1
  %v1307 = vmax.f32 %v1305, %v1306
  %v1308 = vsel %vm523, %v1295, 0.0
  %v1309 = vsel %vm523, %v1296, 0.0
  %v1310 = vadd.f32 %v1308, %v1309
  %v1311 = vrot.slane %v1310, 4
  %v1312 = vadd.f32 %v1310, %v1311
  %v1313 = vrot.slane %v1312, 2
  %v1314 = vadd.f32 %v1312, %v1313
  %v1315 = vrot.slane %v1314, 1
  %v1316 = vadd.f32 %v1314, %v1315
  %v1317 = vmul.f32 %v1316, %v726
  %1319 = vrot.lane.b32.xlu0 %v1317, 64
  %v1320 = vpop.permute.xlu0 %1319
  %v1322 = vsel %vm523, %v1307, %v1320
  %1323 = vst [vmem:[#allocation3 + $0x2] sm:$0x1] %v1322
  %v1324 = vsel %vm523, %v1297, -inf
  %v1325 = vsel %vm523, %v1298, -inf
  %v1326 = vmax.f32 %v1324, %v1325
  %v1327 = vrot.slane %v1326, 4
  %v1328 = vmax.f32 %v1326, %v1327
  %v1329 = vrot.slane %v1328, 2
  %v1330 = vmax.f32 %v1328, %v1329
  %v1331 = vrot.slane %v1330, 1
  %v1332 = vmax.f32 %v1330, %v1331
  %v1333 = vsel %vm523, %v1297, 0.0
  %v1334 = vsel %vm523, %v1298, 0.0
  %v1335 = vadd.f32 %v1333, %v1334
  %v1336 = vrot.slane %v1335, 4
  %v1337 = vadd.f32 %v1335, %v1336
  %v1338 = vrot.slane %v1337, 2
  %v1339 = vadd.f32 %v1337, %v1338
  %v1340 = vrot.slane %v1339, 1
  %v1341 = vadd.f32 %v1339, %v1340
  %v1342 = vmul.f32 %v1341, %v726
  %1344 = vrot.lane.b32.xlu0 %v1342, 64
  %v1345 = vpop.permute.xlu0 %1344
  %v1347 = vsel %vm523, %v1332, %v1345
  %1348 = vst [vmem:[#allocation4 + $0x2] sm:$0x1] %v1347
  %v1349 = vld [vmem:[#allocation2 + $0xc0] sm:$0xff]
  %v1350 = vld [vmem:[#allocation2 + $0xc8] sm:$0xff]
  %v1351 = vld [vmem:[#allocation2 + $0xd0] sm:$0xff]
  %v1352 = vld [vmem:[#allocation2 + $0xd8] sm:$0xff]
  %v1353 = vld [vmem:[#allocation2 + $0xe0] sm:$0xff]
  %v1354 = vld [vmem:[#allocation2 + $0xe8] sm:$0xff]
  %v1355 = vld [vmem:[#allocation2 + $0xf0] sm:$0xff]
  %v1356 = vld [vmem:[#allocation2 + $0xf8] sm:$0xff]
  %v1357 = vpack.c.bf16 %v1296, %v1295
  %v1358 = vpack.c.bf16 %v1298, %v1297
  %v1359 = vld [vmem:[%s2] sm:$0xff]
  %v1360 = vld [vmem:[%s2 + $0x8] sm:$0xff]
  %v1361 = vld [vmem:[%s2 + $0x10] sm:$0xff]
  %v1362 = vld [vmem:[%s2 + $0x18] sm:$0xff]
  %v1363 = vld [vmem:[%s2 + $0x20] sm:$0xff]
  %v1364 = vld [vmem:[%s2 + $0x28] sm:$0xff]
  %v1365 = vld [vmem:[%s2 + $0x30] sm:$0xff]
  %v1366 = vld [vmem:[%s2 + $0x38] sm:$0xff]
  %v1375 = vunpack.c.l.b16 %v1359
  %v1376 = vunpack.c.h.b16 %v1359
  %v1377 = vunpack.c.l.b16 %v1360
  %v1378 = vunpack.c.h.b16 %v1360
  %v1379 = vunpack.c.l.b16 %v1361
  %v1380 = vunpack.c.h.b16 %v1361
  %v1381 = vunpack.c.l.b16 %v1362
  %v1382 = vunpack.c.h.b16 %v1362
  %v1383 = vunpack.c.l.b16 %v1363
  %v1384 = vunpack.c.h.b16 %v1363
  %v1385 = vunpack.c.l.b16 %v1364
  %v1386 = vunpack.c.h.b16 %v1364
  %v1387 = vunpack.c.l.b16 %v1365
  %v1388 = vunpack.c.h.b16 %v1365
  %v1389 = vunpack.c.l.b16 %v1366
  %v1390 = vunpack.c.h.b16 %v1366
  %v1391 = vpack.c.b16 %v1377, %v1375
  %v1392 = vpack.c.b16 %v1378, %v1376
  %v1393 = vpack.c.b16 %v1381, %v1379
  %v1394 = vpack.c.b16 %v1382, %v1380
  %v1395 = vpack.c.b16 %v1385, %v1383
  %v1396 = vpack.c.b16 %v1386, %v1384
  %v1397 = vpack.c.b16 %v1389, %v1387
  %v1398 = vpack.c.b16 %v1390, %v1388
  %v1408 = vsel %vm523, %v1357, 0
  %v1411 = vsel %vm523, %v1358, 0
  %1413 = vmatprep.subr.bf16.mxu0 0
  %1414 = vmatpush1.bf16.msra.mxu0 0
  %1415 = vmatprep.subr.bf16.mxu0 0
  %1416 = vmatpush1.bf16.msra.mxu0 0
  %1417 = vmatprep.subr.bf16.mxu0 0
  %1418 = vmatpush1.bf16.msra.mxu0 0
  %1419 = vmatprep.subr.bf16.mxu0 0
  %1420 = vmatpush1.bf16.msra.mxu0 0
  %1421 = vmatprep.subr.bf16.mxu0 %v1398
  %1422 = vmatpush1.bf16.msra.mxu0 %v1397
  %1423 = vmatprep.subr.bf16.mxu0 %v1396
  %1424 = vmatpush1.bf16.msra.mxu0 %v1395
  %1425 = vmatprep.subr.bf16.mxu0 %v1394
  %1426 = vmatpush1.bf16.msra.mxu0 %v1393
  %1427 = vmatprep.subr.bf16.mxu0 %v1392
  %1428 = vmatpush1.bf16.msra.mxu0 %v1391
  %1429 = vmatprep.subr.bf16.mxu0 0
  %1430 = vmatpush2.bf16.msra.mxu0 0
  %1431 = vmatprep.subr.bf16.mxu0 0
  %1432 = vmatpush2.bf16.msra.mxu0 0
  %1433 = vmatprep.subr.bf16.mxu0 0
  %1434 = vmatpush2.bf16.msra.mxu0 0
  %1435 = vmatprep.subr.bf16.mxu0 0
  %1436 = vmatpush2.bf16.msra.mxu0 0
  %1437 = vmatprep.subr.bf16.mxu0 0
  %1438 = vmatpush2.bf16.msra.mxu0 0
  %1439 = vmatprep.subr.bf16.mxu0 0
  %1440 = vmatpush2.bf16.msra.mxu0 0
  %1441 = vmatprep.subr.bf16.mxu0 0
  %1442 = vmatpush2.bf16.msra.mxu0 0
  %1443 = vmatprep.subr.bf16.mxu0 0
  %1444 = vmatpush2.bf16.msra.mxu0 0
  %1445 = vmatprep.mubr.bf16.mxu0 0
  %1446 = vmatmul.mubr.bf16.gmra.mxu0 %v1408
  %v1447 = vpop.f32.mrf.mxu0
  %v1448 = vadd.f32 0.0, %v1447
  %v1449 = vpop.f32.mrf.mxu0
  %v1450 = vadd.f32 0.0, %v1449
  %v1451 = vpop.f32.mrf.mxu0
  %v1452 = vadd.f32 0.0, %v1451
  %v1453 = vpop.f32.mrf.mxu0
  %v1454 = vadd.f32 0.0, %v1453
  %1455 = vmatprep.mubr.bf16.mxu0 0
  %1456 = vmatmul.mubr.bf16.gmra.mxu0 %v1411
  %v1457 = vpop.f32.mrf.mxu0
  %v1458 = vadd.f32 0.0, %v1457
  %v1459 = vpop.f32.mrf.mxu0
  %v1460 = vadd.f32 0.0, %v1459
  %v1461 = vpop.f32.mrf.mxu0
  %v1462 = vadd.f32 0.0, %v1461
  %v1463 = vpop.f32.mrf.mxu0
  %v1464 = vadd.f32 0.0, %v1463
  %1465 = vdwg.mxu0
  %v1466 = vadd.f32 %v1349, %v1448
  %v1467 = vadd.f32 %v1350, %v1450
  %v1468 = vadd.f32 %v1351, %v1452
  %v1469 = vadd.f32 %v1352, %v1454
  %v1470 = vadd.f32 %v1353, %v1458
  %v1471 = vadd.f32 %v1354, %v1460
  %v1472 = vadd.f32 %v1355, %v1462
  %v1473 = vadd.f32 %v1356, %v1464
  %v1474 = vxor.u32 %v1466, 2147483648
  %v1475 = vxor.u32 %v1467, 2147483648
  %v1476 = vxor.u32 %v1468, 2147483648
  %v1477 = vxor.u32 %v1469, 2147483648
  %v1478 = vxor.u32 %v1470, 2147483648
  %v1479 = vxor.u32 %v1471, 2147483648
  %v1480 = vxor.u32 %v1472, 2147483648
  %v1481 = vxor.u32 %v1473, 2147483648
  %v1482 = vmul.f32 %v1474, 1.442695
  %v1483 = vpow.pop %v1482
  %v1484 = vmul.f32 %v1475, 1.442695
  %v1485 = vpow.pop %v1484
  %v1486 = vmul.f32 %v1476, 1.442695
  %v1487 = vpow.pop %v1486
  %v1488 = vmul.f32 %v1477, 1.442695
  %v1489 = vpow.pop %v1488
  %v1490 = vmul.f32 %v1478, 1.442695
  %v1491 = vpow.pop %v1490
  %v1492 = vmul.f32 %v1479, 1.442695
  %v1493 = vpow.pop %v1492
  %v1494 = vmul.f32 %v1480, 1.442695
  %v1495 = vpow.pop %v1494
  %v1496 = vmul.f32 %v1481, 1.442695
  %v1497 = vpow.pop %v1496
  %v1498 = vadd.f32 %v1483, 1.0
  %v1499 = vadd.f32 %v1485, 1.0
  %v1500 = vadd.f32 %v1487, 1.0
  %v1501 = vadd.f32 %v1489, 1.0
  %v1502 = vadd.f32 %v1491, 1.0
  %v1503 = vadd.f32 %v1493, 1.0
  %v1504 = vadd.f32 %v1495, 1.0
  %v1505 = vadd.f32 %v1497, 1.0
  %v1506 = vrcp.pop %v1498
  %v1507 = vmul.f32 1.0, %v1506
  %v1508 = vrcp.pop %v1499
  %v1509 = vmul.f32 1.0, %v1508
  %v1510 = vrcp.pop %v1500
  %v1511 = vmul.f32 1.0, %v1510
  %v1512 = vrcp.pop %v1501
  %v1513 = vmul.f32 1.0, %v1512
  %v1514 = vrcp.pop %v1502
  %v1515 = vmul.f32 1.0, %v1514
  %v1516 = vrcp.pop %v1503
  %v1517 = vmul.f32 1.0, %v1516
  %v1518 = vrcp.pop %v1504
  %v1519 = vmul.f32 1.0, %v1518
  %v1520 = vrcp.pop %v1505
  %v1521 = vmul.f32 1.0, %v1520
  %v1522 = vtanh.pop %v1467
  %v1523 = vtanh.pop %v1469
  %v1524 = vtanh.pop %v1471
  %v1525 = vtanh.pop %v1473
  %v1526 = vmul.f32 %v1507, %v1271
  %v1527 = vmul.f32 %v1511, %v1272
  %v1528 = vmul.f32 %v1515, %v1273
  %v1529 = vmul.f32 %v1519, %v1274
  %1534 = vrot.lane.b32.xlu0 %v1522, 64
  %v1535 = vpop.permute.xlu0 %1534
  %1536 = vrot.lane.b32.xlu0 %v1523, 64
  %v1537 = vpop.permute.xlu0 %1536
  %1538 = vrot.lane.b32.xlu0 %v1524, 64
  %v1539 = vpop.permute.xlu0 %1538
  %1540 = vrot.lane.b32.xlu0 %v1525, 64
  %v1541 = vpop.permute.xlu0 %1540
  %v1546 = vmul.f32 %v1507, %v1535
  %v1547 = vmul.f32 %v1511, %v1537
  %v1548 = vmul.f32 %v1515, %v1539
  %v1549 = vmul.f32 %v1519, %v1541
  %1554 = vrot.lane.b32.xlu0 %v1546, 64
  %v1555 = vpop.permute.xlu0 %1554
  %1556 = vrot.lane.b32.xlu0 %v1547, 64
  %v1557 = vpop.permute.xlu0 %1556
  %1558 = vrot.lane.b32.xlu0 %v1548, 64
  %v1559 = vpop.permute.xlu0 %1558
  %1560 = vrot.lane.b32.xlu0 %v1549, 64
  %v1561 = vpop.permute.xlu0 %1560
  %v1566 = vadd.f32 %v1526, %v1555
  %v1567 = vadd.f32 %v1527, %v1557
  %v1568 = vadd.f32 %v1528, %v1559
  %v1569 = vadd.f32 %v1529, %v1561
  %v1570 = vtanh.pop %v1566
  %v1571 = vtanh.pop %v1567
  %v1572 = vtanh.pop %v1568
  %v1573 = vtanh.pop %v1569
  %1578 = vrot.lane.b32.xlu0 %v1570, 64
  %v1579 = vpop.permute.xlu0 %1578
  %1580 = vrot.lane.b32.xlu0 %v1571, 64
  %v1581 = vpop.permute.xlu0 %1580
  %1582 = vrot.lane.b32.xlu0 %v1572, 64
  %v1583 = vpop.permute.xlu0 %1582
  %1584 = vrot.lane.b32.xlu0 %v1573, 64
  %v1585 = vpop.permute.xlu0 %1584
  %v1590 = vmul.f32 %v1509, %v1579
  %v1591 = vmul.f32 %v1513, %v1581
  %v1592 = vmul.f32 %v1517, %v1583
  %v1593 = vmul.f32 %v1521, %v1585
  %v1594 = vsel %vm523, %v1590, -inf
  %v1595 = vsel %vm523, %v1591, -inf
  %v1596 = vmax.f32 %v1594, %v1595
  %v1597 = vrot.slane %v1596, 4
  %v1598 = vmax.f32 %v1596, %v1597
  %v1599 = vrot.slane %v1598, 2
  %v1600 = vmax.f32 %v1598, %v1599
  %v1601 = vrot.slane %v1600, 1
  %v1602 = vmax.f32 %v1600, %v1601
  %v1603 = vsel %vm523, %v1590, 0.0
  %v1604 = vsel %vm523, %v1591, 0.0
  %v1605 = vadd.f32 %v1603, %v1604
  %v1606 = vrot.slane %v1605, 4
  %v1607 = vadd.f32 %v1605, %v1606
  %v1608 = vrot.slane %v1607, 2
  %v1609 = vadd.f32 %v1607, %v1608
  %v1610 = vrot.slane %v1609, 1
  %v1611 = vadd.f32 %v1609, %v1610
  %v1612 = vmul.f32 %v1611, %v726
  %1614 = vrot.lane.b32.xlu0 %v1612, 64
  %v1615 = vpop.permute.xlu0 %1614
  %v1617 = vsel %vm523, %v1602, %v1615
  %1618 = vst [vmem:[#allocation3 + $0x3] sm:$0x1] %v1617
  %v1619 = vsel %vm523, %v1592, -inf
  %v1620 = vsel %vm523, %v1593, -inf
  %v1621 = vmax.f32 %v1619, %v1620
  %v1622 = vrot.slane %v1621, 4
  %v1623 = vmax.f32 %v1621, %v1622
  %v1624 = vrot.slane %v1623, 2
  %v1625 = vmax.f32 %v1623, %v1624
  %v1626 = vrot.slane %v1625, 1
  %v1627 = vmax.f32 %v1625, %v1626
  %v1628 = vsel %vm523, %v1592, 0.0
  %v1629 = vsel %vm523, %v1593, 0.0
  %v1630 = vadd.f32 %v1628, %v1629
  %v1631 = vrot.slane %v1630, 4
  %v1632 = vadd.f32 %v1630, %v1631
  %v1633 = vrot.slane %v1632, 2
  %v1634 = vadd.f32 %v1632, %v1633
  %v1635 = vrot.slane %v1634, 1
  %v1636 = vadd.f32 %v1634, %v1635
  %v1637 = vmul.f32 %v1636, %v726
  %1639 = vrot.lane.b32.xlu0 %v1637, 64
  %v1640 = vpop.permute.xlu0 %1639
  %v1642 = vsel %vm523, %v1627, %v1640
  %1643 = vst [vmem:[#allocation4 + $0x3] sm:$0x1] %v1642
  %v1644 = vld [vmem:[#allocation2 + $0x100] sm:$0xff]
  %v1645 = vld [vmem:[#allocation2 + $0x108] sm:$0xff]
  %v1646 = vld [vmem:[#allocation2 + $0x110] sm:$0xff]
  %v1647 = vld [vmem:[#allocation2 + $0x118] sm:$0xff]
  %v1648 = vld [vmem:[#allocation2 + $0x120] sm:$0xff]
  %v1649 = vld [vmem:[#allocation2 + $0x128] sm:$0xff]
  %v1650 = vld [vmem:[#allocation2 + $0x130] sm:$0xff]
  %v1651 = vld [vmem:[#allocation2 + $0x138] sm:$0xff]
  %v1652 = vpack.c.bf16 %v1591, %v1590
  %v1653 = vpack.c.bf16 %v1593, %v1592
  %v1654 = vld [vmem:[%s2] sm:$0xff]
  %v1655 = vld [vmem:[%s2 + $0x8] sm:$0xff]
  %v1656 = vld [vmem:[%s2 + $0x10] sm:$0xff]
  %v1657 = vld [vmem:[%s2 + $0x18] sm:$0xff]
  %v1658 = vld [vmem:[%s2 + $0x20] sm:$0xff]
  %v1659 = vld [vmem:[%s2 + $0x28] sm:$0xff]
  %v1660 = vld [vmem:[%s2 + $0x30] sm:$0xff]
  %v1661 = vld [vmem:[%s2 + $0x38] sm:$0xff]
  %v1670 = vunpack.c.l.b16 %v1654
  %v1671 = vunpack.c.h.b16 %v1654
  %v1672 = vunpack.c.l.b16 %v1655
  %v1673 = vunpack.c.h.b16 %v1655
  %v1674 = vunpack.c.l.b16 %v1656
  %v1675 = vunpack.c.h.b16 %v1656
  %v1676 = vunpack.c.l.b16 %v1657
  %v1677 = vunpack.c.h.b16 %v1657
  %v1678 = vunpack.c.l.b16 %v1658
  %v1679 = vunpack.c.h.b16 %v1658
  %v1680 = vunpack.c.l.b16 %v1659
  %v1681 = vunpack.c.h.b16 %v1659
  %v1682 = vunpack.c.l.b16 %v1660
  %v1683 = vunpack.c.h.b16 %v1660
  %v1684 = vunpack.c.l.b16 %v1661
  %v1685 = vunpack.c.h.b16 %v1661
  %v1686 = vpack.c.b16 %v1672, %v1670
  %v1687 = vpack.c.b16 %v1673, %v1671
  %v1688 = vpack.c.b16 %v1676, %v1674
  %v1689 = vpack.c.b16 %v1677, %v1675
  %v1690 = vpack.c.b16 %v1680, %v1678
  %v1691 = vpack.c.b16 %v1681, %v1679
  %v1692 = vpack.c.b16 %v1684, %v1682
  %v1693 = vpack.c.b16 %v1685, %v1683
  %v1703 = vsel %vm523, %v1652, 0
  %v1706 = vsel %vm523, %v1653, 0
  %1708 = vmatprep.subr.bf16.mxu0 0
  %1709 = vmatpush1.bf16.msra.mxu0 0
  %1710 = vmatprep.subr.bf16.mxu0 0
  %1711 = vmatpush1.bf16.msra.mxu0 0
  %1712 = vmatprep.subr.bf16.mxu0 0
  %1713 = vmatpush1.bf16.msra.mxu0 0
  %1714 = vmatprep.subr.bf16.mxu0 0
  %1715 = vmatpush1.bf16.msra.mxu0 0
  %1716 = vmatprep.subr.bf16.mxu0 %v1693
  %1717 = vmatpush1.bf16.msra.mxu0 %v1692
  %1718 = vmatprep.subr.bf16.mxu0 %v1691
  %1719 = vmatpush1.bf16.msra.mxu0 %v1690
  %1720 = vmatprep.subr.bf16.mxu0 %v1689
  %1721 = vmatpush1.bf16.msra.mxu0 %v1688
  %1722 = vmatprep.subr.bf16.mxu0 %v1687
  %1723 = vmatpush1.bf16.msra.mxu0 %v1686
  %1724 = vmatprep.subr.bf16.mxu0 0
  %1725 = vmatpush2.bf16.msra.mxu0 0
  %1726 = vmatprep.subr.bf16.mxu0 0
  %1727 = vmatpush2.bf16.msra.mxu0 0
  %1728 = vmatprep.subr.bf16.mxu0 0
  %1729 = vmatpush2.bf16.msra.mxu0 0
  %1730 = vmatprep.subr.bf16.mxu0 0
  %1731 = vmatpush2.bf16.msra.mxu0 0
  %1732 = vmatprep.subr.bf16.mxu0 0
  %1733 = vmatpush2.bf16.msra.mxu0 0
  %1734 = vmatprep.subr.bf16.mxu0 0
  %1735 = vmatpush2.bf16.msra.mxu0 0
  %1736 = vmatprep.subr.bf16.mxu0 0
  %1737 = vmatpush2.bf16.msra.mxu0 0
  %1738 = vmatprep.subr.bf16.mxu0 0
  %1739 = vmatpush2.bf16.msra.mxu0 0
  %1740 = vmatprep.mubr.bf16.mxu0 0
  %1741 = vmatmul.mubr.bf16.gmra.mxu0 %v1703
  %v1742 = vpop.f32.mrf.mxu0
  %v1743 = vadd.f32 0.0, %v1742
  %v1744 = vpop.f32.mrf.mxu0
  %v1745 = vadd.f32 0.0, %v1744
  %v1746 = vpop.f32.mrf.mxu0
  %v1747 = vadd.f32 0.0, %v1746
  %v1748 = vpop.f32.mrf.mxu0
  %v1749 = vadd.f32 0.0, %v1748
  %1750 = vmatprep.mubr.bf16.mxu0 0
  %1751 = vmatmul.mubr.bf16.gmra.mxu0 %v1706
  %v1752 = vpop.f32.mrf.mxu0
  %v1753 = vadd.f32 0.0, %v1752
  %v1754 = vpop.f32.mrf.mxu0
  %v1755 = vadd.f32 0.0, %v1754
  %v1756 = vpop.f32.mrf.mxu0
  %v1757 = vadd.f32 0.0, %v1756
  %v1758 = vpop.f32.mrf.mxu0
  %v1759 = vadd.f32 0.0, %v1758
  %1760 = vdwg.mxu0
  %v1761 = vadd.f32 %v1644, %v1743
  %v1762 = vadd.f32 %v1645, %v1745
  %v1763 = vadd.f32 %v1646, %v1747
  %v1764 = vadd.f32 %v1647, %v1749
  %v1765 = vadd.f32 %v1648, %v1753
  %v1766 = vadd.f32 %v1649, %v1755
  %v1767 = vadd.f32 %v1650, %v1757
  %v1768 = vadd.f32 %v1651, %v1759
  %v1769 = vxor.u32 %v1761, 2147483648
  %v1770 = vxor.u32 %v1762, 2147483648
  %v1771 = vxor.u32 %v1763, 2147483648
  %v1772 = vxor.u32 %v1764, 2147483648
  %v1773 = vxor.u32 %v1765, 2147483648
  %v1774 = vxor.u32 %v1766, 2147483648
  %v1775 = vxor.u32 %v1767, 2147483648
  %v1776 = vxor.u32 %v1768, 2147483648
  %v1777 = vmul.f32 %v1769, 1.442695
  %v1778 = vpow.pop %v1777
  %v1779 = vmul.f32 %v1770, 1.442695
  %v1780 = vpow.pop %v1779
  %v1781 = vmul.f32 %v1771, 1.442695
  %v1782 = vpow.pop %v1781
  %v1783 = vmul.f32 %v1772, 1.442695
  %v1784 = vpow.pop %v1783
  %v1785 = vmul.f32 %v1773, 1.442695
  %v1786 = vpow.pop %v1785
  %v1787 = vmul.f32 %v1774, 1.442695
  %v1788 = vpow.pop %v1787
  %v1789 = vmul.f32 %v1775, 1.442695
  %v1790 = vpow.pop %v1789
  %v1791 = vmul.f32 %v1776, 1.442695
  %v1792 = vpow.pop %v1791
  %v1793 = vadd.f32 %v1778, 1.0
  %v1794 = vadd.f32 %v1780, 1.0
  %v1795 = vadd.f32 %v1782, 1.0
  %v1796 = vadd.f32 %v1784, 1.0
  %v1797 = vadd.f32 %v1786, 1.0
  %v1798 = vadd.f32 %v1788, 1.0
  %v1799 = vadd.f32 %v1790, 1.0
  %v1800 = vadd.f32 %v1792, 1.0
  %v1801 = vrcp.pop %v1793
  %v1802 = vmul.f32 1.0, %v1801
  %v1803 = vrcp.pop %v1794
  %v1804 = vmul.f32 1.0, %v1803
  %v1805 = vrcp.pop %v1795
  %v1806 = vmul.f32 1.0, %v1805
  %v1807 = vrcp.pop %v1796
  %v1808 = vmul.f32 1.0, %v1807
  %v1809 = vrcp.pop %v1797
  %v1810 = vmul.f32 1.0, %v1809
  %v1811 = vrcp.pop %v1798
  %v1812 = vmul.f32 1.0, %v1811
  %v1813 = vrcp.pop %v1799
  %v1814 = vmul.f32 1.0, %v1813
  %v1815 = vrcp.pop %v1800
  %v1816 = vmul.f32 1.0, %v1815
  %v1817 = vtanh.pop %v1762
  %v1818 = vtanh.pop %v1764
  %v1819 = vtanh.pop %v1766
  %v1820 = vtanh.pop %v1768
  %v1821 = vmul.f32 %v1802, %v1566
  %v1822 = vmul.f32 %v1806, %v1567
  %v1823 = vmul.f32 %v1810, %v1568
  %v1824 = vmul.f32 %v1814, %v1569
  %1829 = vrot.lane.b32.xlu0 %v1817, 64
  %v1830 = vpop.permute.xlu0 %1829
  %1831 = vrot.lane.b32.xlu0 %v1818, 64
  %v1832 = vpop.permute.xlu0 %1831
  %1833 = vrot.lane.b32.xlu0 %v1819, 64
  %v1834 = vpop.permute.xlu0 %1833
  %1835 = vrot.lane.b32.xlu0 %v1820, 64
  %v1836 = vpop.permute.xlu0 %1835
  %v1841 = vmul.f32 %v1802, %v1830
  %v1842 = vmul.f32 %v1806, %v1832
  %v1843 = vmul.f32 %v1810, %v1834
  %v1844 = vmul.f32 %v1814, %v1836
  %1849 = vrot.lane.b32.xlu0 %v1841, 64
  %v1850 = vpop.permute.xlu0 %1849
  %1851 = vrot.lane.b32.xlu0 %v1842, 64
  %v1852 = vpop.permute.xlu0 %1851
  %1853 = vrot.lane.b32.xlu0 %v1843, 64
  %v1854 = vpop.permute.xlu0 %1853
  %1855 = vrot.lane.b32.xlu0 %v1844, 64
  %v1856 = vpop.permute.xlu0 %1855
  %v1861 = vadd.f32 %v1821, %v1850
  %v1862 = vadd.f32 %v1822, %v1852
  %v1863 = vadd.f32 %v1823, %v1854
  %v1864 = vadd.f32 %v1824, %v1856
  %v1865 = vtanh.pop %v1861
  %v1866 = vtanh.pop %v1862
  %v1867 = vtanh.pop %v1863
  %v1868 = vtanh.pop %v1864
  %1873 = vrot.lane.b32.xlu0 %v1865, 64
  %v1874 = vpop.permute.xlu0 %1873
  %1875 = vrot.lane.b32.xlu0 %v1866, 64
  %v1876 = vpop.permute.xlu0 %1875
  %1877 = vrot.lane.b32.xlu0 %v1867, 64
  %v1878 = vpop.permute.xlu0 %1877
  %1879 = vrot.lane.b32.xlu0 %v1868, 64
  %v1880 = vpop.permute.xlu0 %1879
  %v1885 = vmul.f32 %v1804, %v1874
  %v1886 = vmul.f32 %v1808, %v1876
  %v1887 = vmul.f32 %v1812, %v1878
  %v1888 = vmul.f32 %v1816, %v1880
  %v1889 = vsel %vm523, %v1885, -inf
  %v1890 = vsel %vm523, %v1886, -inf
  %v1891 = vmax.f32 %v1889, %v1890
  %v1892 = vrot.slane %v1891, 4
  %v1893 = vmax.f32 %v1891, %v1892
  %v1894 = vrot.slane %v1893, 2
  %v1895 = vmax.f32 %v1893, %v1894
  %v1896 = vrot.slane %v1895, 1
  %v1897 = vmax.f32 %v1895, %v1896
  %v1898 = vsel %vm523, %v1885, 0.0
  %v1899 = vsel %vm523, %v1886, 0.0
  %v1900 = vadd.f32 %v1898, %v1899
  %v1901 = vrot.slane %v1900, 4
  %v1902 = vadd.f32 %v1900, %v1901
  %v1903 = vrot.slane %v1902, 2
  %v1904 = vadd.f32 %v1902, %v1903
  %v1905 = vrot.slane %v1904, 1
  %v1906 = vadd.f32 %v1904, %v1905
  %v1907 = vmul.f32 %v1906, %v726
  %1909 = vrot.lane.b32.xlu0 %v1907, 64
  %v1910 = vpop.permute.xlu0 %1909
  %v1912 = vsel %vm523, %v1897, %v1910
  %1913 = vst [vmem:[#allocation3 + $0x4] sm:$0x1] %v1912
  %v1914 = vsel %vm523, %v1887, -inf
  %v1915 = vsel %vm523, %v1888, -inf
  %v1916 = vmax.f32 %v1914, %v1915
  %v1917 = vrot.slane %v1916, 4
  %v1918 = vmax.f32 %v1916, %v1917
  %v1919 = vrot.slane %v1918, 2
  %v1920 = vmax.f32 %v1918, %v1919
  %v1921 = vrot.slane %v1920, 1
  %v1922 = vmax.f32 %v1920, %v1921
  %v1923 = vsel %vm523, %v1887, 0.0
  %v1924 = vsel %vm523, %v1888, 0.0
  %v1925 = vadd.f32 %v1923, %v1924
  %v1926 = vrot.slane %v1925, 4
  %v1927 = vadd.f32 %v1925, %v1926
  %v1928 = vrot.slane %v1927, 2
  %v1929 = vadd.f32 %v1927, %v1928
  %v1930 = vrot.slane %v1929, 1
  %v1931 = vadd.f32 %v1929, %v1930
  %v1932 = vmul.f32 %v1931, %v726
  %1934 = vrot.lane.b32.xlu0 %v1932, 64
  %v1935 = vpop.permute.xlu0 %1934
  %v1937 = vsel %vm523, %v1922, %v1935
  %1938 = vst [vmem:[#allocation4 + $0x4] sm:$0x1] %v1937
  %v1939 = vld [vmem:[#allocation2 + $0x140] sm:$0xff]
  %v1940 = vld [vmem:[#allocation2 + $0x148] sm:$0xff]
  %v1941 = vld [vmem:[#allocation2 + $0x150] sm:$0xff]
  %v1942 = vld [vmem:[#allocation2 + $0x158] sm:$0xff]
  %v1943 = vld [vmem:[#allocation2 + $0x160] sm:$0xff]
  %v1944 = vld [vmem:[#allocation2 + $0x168] sm:$0xff]
  %v1945 = vld [vmem:[#allocation2 + $0x170] sm:$0xff]
  %v1946 = vld [vmem:[#allocation2 + $0x178] sm:$0xff]
  %v1947 = vpack.c.bf16 %v1886, %v1885
  %v1948 = vpack.c.bf16 %v1888, %v1887
  %v1949 = vld [vmem:[%s2] sm:$0xff]
  %v1950 = vld [vmem:[%s2 + $0x8] sm:$0xff]
  %v1951 = vld [vmem:[%s2 + $0x10] sm:$0xff]
  %v1952 = vld [vmem:[%s2 + $0x18] sm:$0xff]
  %v1953 = vld [vmem:[%s2 + $0x20] sm:$0xff]
  %v1954 = vld [vmem:[%s2 + $0x28] sm:$0xff]
  %v1955 = vld [vmem:[%s2 + $0x30] sm:$0xff]
  %v1956 = vld [vmem:[%s2 + $0x38] sm:$0xff]
  %v1965 = vunpack.c.l.b16 %v1949
  %v1966 = vunpack.c.h.b16 %v1949
  %v1967 = vunpack.c.l.b16 %v1950
  %v1968 = vunpack.c.h.b16 %v1950
  %v1969 = vunpack.c.l.b16 %v1951
  %v1970 = vunpack.c.h.b16 %v1951
  %v1971 = vunpack.c.l.b16 %v1952
  %v1972 = vunpack.c.h.b16 %v1952
  %v1973 = vunpack.c.l.b16 %v1953
  %v1974 = vunpack.c.h.b16 %v1953
  %v1975 = vunpack.c.l.b16 %v1954
  %v1976 = vunpack.c.h.b16 %v1954
  %v1977 = vunpack.c.l.b16 %v1955
  %v1978 = vunpack.c.h.b16 %v1955
  %v1979 = vunpack.c.l.b16 %v1956
  %v1980 = vunpack.c.h.b16 %v1956
  %v1981 = vpack.c.b16 %v1967, %v1965
  %v1982 = vpack.c.b16 %v1968, %v1966
  %v1983 = vpack.c.b16 %v1971, %v1969
  %v1984 = vpack.c.b16 %v1972, %v1970
  %v1985 = vpack.c.b16 %v1975, %v1973
  %v1986 = vpack.c.b16 %v1976, %v1974
  %v1987 = vpack.c.b16 %v1979, %v1977
  %v1988 = vpack.c.b16 %v1980, %v1978
  %v1998 = vsel %vm523, %v1947, 0
  %v2001 = vsel %vm523, %v1948, 0
  %2003 = vmatprep.subr.bf16.mxu0 0
  %2004 = vmatpush1.bf16.msra.mxu0 0
  %2005 = vmatprep.subr.bf16.mxu0 0
  %2006 = vmatpush1.bf16.msra.mxu0 0
  %2007 = vmatprep.subr.bf16.mxu0 0
  %2008 = vmatpush1.bf16.msra.mxu0 0
  %2009 = vmatprep.subr.bf16.mxu0 0
  %2010 = vmatpush1.bf16.msra.mxu0 0
  %2011 = vmatprep.subr.bf16.mxu0 %v1988
  %2012 = vmatpush1.bf16.msra.mxu0 %v1987
  %2013 = vmatprep.subr.bf16.mxu0 %v1986
  %2014 = vmatpush1.bf16.msra.mxu0 %v1985
  %2015 = vmatprep.subr.bf16.mxu0 %v1984
  %2016 = vmatpush1.bf16.msra.mxu0 %v1983
  %2017 = vmatprep.subr.bf16.mxu0 %v1982
  %2018 = vmatpush1.bf16.msra.mxu0 %v1981
  %2019 = vmatprep.subr.bf16.mxu0 0
  %2020 = vmatpush2.bf16.msra.mxu0 0
  %2021 = vmatprep.subr.bf16.mxu0 0
  %2022 = vmatpush2.bf16.msra.mxu0 0
  %2023 = vmatprep.subr.bf16.mxu0 0
  %2024 = vmatpush2.bf16.msra.mxu0 0
  %2025 = vmatprep.subr.bf16.mxu0 0
  %2026 = vmatpush2.bf16.msra.mxu0 0
  %2027 = vmatprep.subr.bf16.mxu0 0
  %2028 = vmatpush2.bf16.msra.mxu0 0
  %2029 = vmatprep.subr.bf16.mxu0 0
  %2030 = vmatpush2.bf16.msra.mxu0 0
  %2031 = vmatprep.subr.bf16.mxu0 0
  %2032 = vmatpush2.bf16.msra.mxu0 0
  %2033 = vmatprep.subr.bf16.mxu0 0
  %2034 = vmatpush2.bf16.msra.mxu0 0
  %2035 = vmatprep.mubr.bf16.mxu0 0
  %2036 = vmatmul.mubr.bf16.gmra.mxu0 %v1998
  %v2037 = vpop.f32.mrf.mxu0
  %v2038 = vadd.f32 0.0, %v2037
  %v2039 = vpop.f32.mrf.mxu0
  %v2040 = vadd.f32 0.0, %v2039
  %v2041 = vpop.f32.mrf.mxu0
  %v2042 = vadd.f32 0.0, %v2041
  %v2043 = vpop.f32.mrf.mxu0
  %v2044 = vadd.f32 0.0, %v2043
  %2045 = vmatprep.mubr.bf16.mxu0 0
  %2046 = vmatmul.mubr.bf16.gmra.mxu0 %v2001
  %v2047 = vpop.f32.mrf.mxu0
  %v2048 = vadd.f32 0.0, %v2047
  %v2049 = vpop.f32.mrf.mxu0
  %v2050 = vadd.f32 0.0, %v2049
  %v2051 = vpop.f32.mrf.mxu0
  %v2052 = vadd.f32 0.0, %v2051
  %v2053 = vpop.f32.mrf.mxu0
  %v2054 = vadd.f32 0.0, %v2053
  %2055 = vdwg.mxu0
  %v2056 = vadd.f32 %v1939, %v2038
  %v2057 = vadd.f32 %v1940, %v2040
  %v2058 = vadd.f32 %v1941, %v2042
  %v2059 = vadd.f32 %v1942, %v2044
  %v2060 = vadd.f32 %v1943, %v2048
  %v2061 = vadd.f32 %v1944, %v2050
  %v2062 = vadd.f32 %v1945, %v2052
  %v2063 = vadd.f32 %v1946, %v2054
  %v2064 = vxor.u32 %v2056, 2147483648
  %v2065 = vxor.u32 %v2057, 2147483648
  %v2066 = vxor.u32 %v2058, 2147483648
  %v2067 = vxor.u32 %v2059, 2147483648
  %v2068 = vxor.u32 %v2060, 2147483648
  %v2069 = vxor.u32 %v2061, 2147483648
  %v2070 = vxor.u32 %v2062, 2147483648
  %v2071 = vxor.u32 %v2063, 2147483648
  %v2072 = vmul.f32 %v2064, 1.442695
  %v2073 = vpow.pop %v2072
  %v2074 = vmul.f32 %v2065, 1.442695
  %v2075 = vpow.pop %v2074
  %v2076 = vmul.f32 %v2066, 1.442695
  %v2077 = vpow.pop %v2076
  %v2078 = vmul.f32 %v2067, 1.442695
  %v2079 = vpow.pop %v2078
  %v2080 = vmul.f32 %v2068, 1.442695
  %v2081 = vpow.pop %v2080
  %v2082 = vmul.f32 %v2069, 1.442695
  %v2083 = vpow.pop %v2082
  %v2084 = vmul.f32 %v2070, 1.442695
  %v2085 = vpow.pop %v2084
  %v2086 = vmul.f32 %v2071, 1.442695
  %v2087 = vpow.pop %v2086
  %v2088 = vadd.f32 %v2073, 1.0
  %v2089 = vadd.f32 %v2075, 1.0
  %v2090 = vadd.f32 %v2077, 1.0
  %v2091 = vadd.f32 %v2079, 1.0
  %v2092 = vadd.f32 %v2081, 1.0
  %v2093 = vadd.f32 %v2083, 1.0
  %v2094 = vadd.f32 %v2085, 1.0
  %v2095 = vadd.f32 %v2087, 1.0
  %v2096 = vrcp.pop %v2088
  %v2097 = vmul.f32 1.0, %v2096
  %v2098 = vrcp.pop %v2089
  %v2099 = vmul.f32 1.0, %v2098
  %v2100 = vrcp.pop %v2090
  %v2101 = vmul.f32 1.0, %v2100
  %v2102 = vrcp.pop %v2091
  %v2103 = vmul.f32 1.0, %v2102
  %v2104 = vrcp.pop %v2092
  %v2105 = vmul.f32 1.0, %v2104
  %v2106 = vrcp.pop %v2093
  %v2107 = vmul.f32 1.0, %v2106
  %v2108 = vrcp.pop %v2094
  %v2109 = vmul.f32 1.0, %v2108
  %v2110 = vrcp.pop %v2095
  %v2111 = vmul.f32 1.0, %v2110
  %v2112 = vtanh.pop %v2057
  %v2113 = vtanh.pop %v2059
  %v2114 = vtanh.pop %v2061
  %v2115 = vtanh.pop %v2063
  %v2116 = vmul.f32 %v2097, %v1861
  %v2117 = vmul.f32 %v2101, %v1862
  %v2118 = vmul.f32 %v2105, %v1863
  %v2119 = vmul.f32 %v2109, %v1864
  %2124 = vrot.lane.b32.xlu0 %v2112, 64
  %v2125 = vpop.permute.xlu0 %2124
  %2126 = vrot.lane.b32.xlu0 %v2113, 64
  %v2127 = vpop.permute.xlu0 %2126
  %2128 = vrot.lane.b32.xlu0 %v2114, 64
  %v2129 = vpop.permute.xlu0 %2128
  %2130 = vrot.lane.b32.xlu0 %v2115, 64
  %v2131 = vpop.permute.xlu0 %2130
  %v2136 = vmul.f32 %v2097, %v2125
  %v2137 = vmul.f32 %v2101, %v2127
  %v2138 = vmul.f32 %v2105, %v2129
  %v2139 = vmul.f32 %v2109, %v2131
  %2144 = vrot.lane.b32.xlu0 %v2136, 64
  %v2145 = vpop.permute.xlu0 %2144
  %2146 = vrot.lane.b32.xlu0 %v2137, 64
  %v2147 = vpop.permute.xlu0 %2146
  %2148 = vrot.lane.b32.xlu0 %v2138, 64
  %v2149 = vpop.permute.xlu0 %2148
  %2150 = vrot.lane.b32.xlu0 %v2139, 64
  %v2151 = vpop.permute.xlu0 %2150
  %v2156 = vadd.f32 %v2116, %v2145
  %v2157 = vadd.f32 %v2117, %v2147
  %v2158 = vadd.f32 %v2118, %v2149
  %v2159 = vadd.f32 %v2119, %v2151
  %v2160 = vtanh.pop %v2156
  %v2161 = vtanh.pop %v2157
  %v2162 = vtanh.pop %v2158
  %v2163 = vtanh.pop %v2159
  %2168 = vrot.lane.b32.xlu0 %v2160, 64
  %v2169 = vpop.permute.xlu0 %2168
  %2170 = vrot.lane.b32.xlu0 %v2161, 64
  %v2171 = vpop.permute.xlu0 %2170
  %2172 = vrot.lane.b32.xlu0 %v2162, 64
  %v2173 = vpop.permute.xlu0 %2172
  %2174 = vrot.lane.b32.xlu0 %v2163, 64
  %v2175 = vpop.permute.xlu0 %2174
  %v2180 = vmul.f32 %v2099, %v2169
  %v2181 = vmul.f32 %v2103, %v2171
  %v2182 = vmul.f32 %v2107, %v2173
  %v2183 = vmul.f32 %v2111, %v2175
  %v2184 = vsel %vm523, %v2180, -inf
  %v2185 = vsel %vm523, %v2181, -inf
  %v2186 = vmax.f32 %v2184, %v2185
  %v2187 = vrot.slane %v2186, 4
  %v2188 = vmax.f32 %v2186, %v2187
  %v2189 = vrot.slane %v2188, 2
  %v2190 = vmax.f32 %v2188, %v2189
  %v2191 = vrot.slane %v2190, 1
  %v2192 = vmax.f32 %v2190, %v2191
  %v2193 = vsel %vm523, %v2180, 0.0
  %v2194 = vsel %vm523, %v2181, 0.0
  %v2195 = vadd.f32 %v2193, %v2194
  %v2196 = vrot.slane %v2195, 4
  %v2197 = vadd.f32 %v2195, %v2196
  %v2198 = vrot.slane %v2197, 2
  %v2199 = vadd.f32 %v2197, %v2198
  %v2200 = vrot.slane %v2199, 1
  %v2201 = vadd.f32 %v2199, %v2200
  %v2202 = vmul.f32 %v2201, %v726
  %2204 = vrot.lane.b32.xlu0 %v2202, 64
  %v2205 = vpop.permute.xlu0 %2204
  %v2207 = vsel %vm523, %v2192, %v2205
  %2208 = vst [vmem:[#allocation3 + $0x5] sm:$0x1] %v2207
  %v2209 = vsel %vm523, %v2182, -inf
  %v2210 = vsel %vm523, %v2183, -inf
  %v2211 = vmax.f32 %v2209, %v2210
  %v2212 = vrot.slane %v2211, 4
  %v2213 = vmax.f32 %v2211, %v2212
  %v2214 = vrot.slane %v2213, 2
  %v2215 = vmax.f32 %v2213, %v2214
  %v2216 = vrot.slane %v2215, 1
  %v2217 = vmax.f32 %v2215, %v2216
  %v2218 = vsel %vm523, %v2182, 0.0
  %v2219 = vsel %vm523, %v2183, 0.0
  %v2220 = vadd.f32 %v2218, %v2219
  %v2221 = vrot.slane %v2220, 4
  %v2222 = vadd.f32 %v2220, %v2221
  %v2223 = vrot.slane %v2222, 2
  %v2224 = vadd.f32 %v2222, %v2223
  %v2225 = vrot.slane %v2224, 1
  %v2226 = vadd.f32 %v2224, %v2225
  %v2227 = vmul.f32 %v2226, %v726
  %2229 = vrot.lane.b32.xlu0 %v2227, 64
  %v2230 = vpop.permute.xlu0 %2229
  %v2232 = vsel %vm523, %v2217, %v2230
  %2233 = vst [vmem:[#allocation4 + $0x5] sm:$0x1] %v2232
  %v2234 = vld [vmem:[#allocation2 + $0x180] sm:$0xff]
  %v2235 = vld [vmem:[#allocation2 + $0x188] sm:$0xff]
  %v2236 = vld [vmem:[#allocation2 + $0x190] sm:$0xff]
  %v2237 = vld [vmem:[#allocation2 + $0x198] sm:$0xff]
  %v2238 = vld [vmem:[#allocation2 + $0x1a0] sm:$0xff]
  %v2239 = vld [vmem:[#allocation2 + $0x1a8] sm:$0xff]
  %v2240 = vld [vmem:[#allocation2 + $0x1b0] sm:$0xff]
  %v2241 = vld [vmem:[#allocation2 + $0x1b8] sm:$0xff]
  %v2242 = vpack.c.bf16 %v2181, %v2180
  %v2243 = vpack.c.bf16 %v2183, %v2182
  %v2244 = vld [vmem:[%s2] sm:$0xff]
  %v2245 = vld [vmem:[%s2 + $0x8] sm:$0xff]
  %v2246 = vld [vmem:[%s2 + $0x10] sm:$0xff]
  %v2247 = vld [vmem:[%s2 + $0x18] sm:$0xff]
  %v2248 = vld [vmem:[%s2 + $0x20] sm:$0xff]
  %v2249 = vld [vmem:[%s2 + $0x28] sm:$0xff]
  %v2250 = vld [vmem:[%s2 + $0x30] sm:$0xff]
  %v2251 = vld [vmem:[%s2 + $0x38] sm:$0xff]
  %v2260 = vunpack.c.l.b16 %v2244
  %v2261 = vunpack.c.h.b16 %v2244
  %v2262 = vunpack.c.l.b16 %v2245
  %v2263 = vunpack.c.h.b16 %v2245
  %v2264 = vunpack.c.l.b16 %v2246
  %v2265 = vunpack.c.h.b16 %v2246
  %v2266 = vunpack.c.l.b16 %v2247
  %v2267 = vunpack.c.h.b16 %v2247
  %v2268 = vunpack.c.l.b16 %v2248
  %v2269 = vunpack.c.h.b16 %v2248
  %v2270 = vunpack.c.l.b16 %v2249
  %v2271 = vunpack.c.h.b16 %v2249
  %v2272 = vunpack.c.l.b16 %v2250
  %v2273 = vunpack.c.h.b16 %v2250
  %v2274 = vunpack.c.l.b16 %v2251
  %v2275 = vunpack.c.h.b16 %v2251
  %v2276 = vpack.c.b16 %v2262, %v2260
  %v2277 = vpack.c.b16 %v2263, %v2261
  %v2278 = vpack.c.b16 %v2266, %v2264
  %v2279 = vpack.c.b16 %v2267, %v2265
  %v2280 = vpack.c.b16 %v2270, %v2268
  %v2281 = vpack.c.b16 %v2271, %v2269
  %v2282 = vpack.c.b16 %v2274, %v2272
  %v2283 = vpack.c.b16 %v2275, %v2273
  %v2293 = vsel %vm523, %v2242, 0
  %v2296 = vsel %vm523, %v2243, 0
  %2298 = vmatprep.subr.bf16.mxu0 0
  %2299 = vmatpush1.bf16.msra.mxu0 0
  %2300 = vmatprep.subr.bf16.mxu0 0
  %2301 = vmatpush1.bf16.msra.mxu0 0
  %2302 = vmatprep.subr.bf16.mxu0 0
  %2303 = vmatpush1.bf16.msra.mxu0 0
  %2304 = vmatprep.subr.bf16.mxu0 0
  %2305 = vmatpush1.bf16.msra.mxu0 0
  %2306 = vmatprep.subr.bf16.mxu0 %v2283
  %2307 = vmatpush1.bf16.msra.mxu0 %v2282
  %2308 = vmatprep.subr.bf16.mxu0 %v2281
  %2309 = vmatpush1.bf16.msra.mxu0 %v2280
  %2310 = vmatprep.subr.bf16.mxu0 %v2279
  %2311 = vmatpush1.bf16.msra.mxu0 %v2278
  %2312 = vmatprep.subr.bf16.mxu0 %v2277
  %2313 = vmatpush1.bf16.msra.mxu0 %v2276
  %2314 = vmatprep.subr.bf16.mxu0 0
  %2315 = vmatpush2.bf16.msra.mxu0 0
  %2316 = vmatprep.subr.bf16.mxu0 0
  %2317 = vmatpush2.bf16.msra.mxu0 0
  %2318 = vmatprep.subr.bf16.mxu0 0
  %2319 = vmatpush2.bf16.msra.mxu0 0
  %2320 = vmatprep.subr.bf16.mxu0 0
  %2321 = vmatpush2.bf16.msra.mxu0 0
  %2322 = vmatprep.subr.bf16.mxu0 0
  %2323 = vmatpush2.bf16.msra.mxu0 0
  %2324 = vmatprep.subr.bf16.mxu0 0
  %2325 = vmatpush2.bf16.msra.mxu0 0
  %2326 = vmatprep.subr.bf16.mxu0 0
  %2327 = vmatpush2.bf16.msra.mxu0 0
  %2328 = vmatprep.subr.bf16.mxu0 0
  %2329 = vmatpush2.bf16.msra.mxu0 0
  %2330 = vmatprep.mubr.bf16.mxu0 0
  %2331 = vmatmul.mubr.bf16.gmra.mxu0 %v2293
  %v2332 = vpop.f32.mrf.mxu0
  %v2333 = vadd.f32 0.0, %v2332
  %v2334 = vpop.f32.mrf.mxu0
  %v2335 = vadd.f32 0.0, %v2334
  %v2336 = vpop.f32.mrf.mxu0
  %v2337 = vadd.f32 0.0, %v2336
  %v2338 = vpop.f32.mrf.mxu0
  %v2339 = vadd.f32 0.0, %v2338
  %2340 = vmatprep.mubr.bf16.mxu0 0
  %2341 = vmatmul.mubr.bf16.gmra.mxu0 %v2296
  %v2342 = vpop.f32.mrf.mxu0
  %v2343 = vadd.f32 0.0, %v2342
  %v2344 = vpop.f32.mrf.mxu0
  %v2345 = vadd.f32 0.0, %v2344
  %v2346 = vpop.f32.mrf.mxu0
  %v2347 = vadd.f32 0.0, %v2346
  %v2348 = vpop.f32.mrf.mxu0
  %v2349 = vadd.f32 0.0, %v2348
  %2350 = vdwg.mxu0
  %v2351 = vadd.f32 %v2234, %v2333
  %v2352 = vadd.f32 %v2235, %v2335
  %v2353 = vadd.f32 %v2236, %v2337
  %v2354 = vadd.f32 %v2237, %v2339
  %v2355 = vadd.f32 %v2238, %v2343
  %v2356 = vadd.f32 %v2239, %v2345
  %v2357 = vadd.f32 %v2240, %v2347
  %v2358 = vadd.f32 %v2241, %v2349
  %v2359 = vxor.u32 %v2351, 2147483648
  %v2360 = vxor.u32 %v2352, 2147483648
  %v2361 = vxor.u32 %v2353, 2147483648
  %v2362 = vxor.u32 %v2354, 2147483648
  %v2363 = vxor.u32 %v2355, 2147483648
  %v2364 = vxor.u32 %v2356, 2147483648
  %v2365 = vxor.u32 %v2357, 2147483648
  %v2366 = vxor.u32 %v2358, 2147483648
  %v2367 = vmul.f32 %v2359, 1.442695
  %v2368 = vpow.pop %v2367
  %v2369 = vmul.f32 %v2360, 1.442695
  %v2370 = vpow.pop %v2369
  %v2371 = vmul.f32 %v2361, 1.442695
  %v2372 = vpow.pop %v2371
  %v2373 = vmul.f32 %v2362, 1.442695
  %v2374 = vpow.pop %v2373
  %v2375 = vmul.f32 %v2363, 1.442695
  %v2376 = vpow.pop %v2375
  %v2377 = vmul.f32 %v2364, 1.442695
  %v2378 = vpow.pop %v2377
  %v2379 = vmul.f32 %v2365, 1.442695
  %v2380 = vpow.pop %v2379
  %v2381 = vmul.f32 %v2366, 1.442695
  %v2382 = vpow.pop %v2381
  %v2383 = vadd.f32 %v2368, 1.0
  %v2384 = vadd.f32 %v2370, 1.0
  %v2385 = vadd.f32 %v2372, 1.0
  %v2386 = vadd.f32 %v2374, 1.0
  %v2387 = vadd.f32 %v2376, 1.0
  %v2388 = vadd.f32 %v2378, 1.0
  %v2389 = vadd.f32 %v2380, 1.0
  %v2390 = vadd.f32 %v2382, 1.0
  %v2391 = vrcp.pop %v2383
  %v2392 = vmul.f32 1.0, %v2391
  %v2393 = vrcp.pop %v2384
  %v2394 = vmul.f32 1.0, %v2393
  %v2395 = vrcp.pop %v2385
  %v2396 = vmul.f32 1.0, %v2395
  %v2397 = vrcp.pop %v2386
  %v2398 = vmul.f32 1.0, %v2397
  %v2399 = vrcp.pop %v2387
  %v2400 = vmul.f32 1.0, %v2399
  %v2401 = vrcp.pop %v2388
  %v2402 = vmul.f32 1.0, %v2401
  %v2403 = vrcp.pop %v2389
  %v2404 = vmul.f32 1.0, %v2403
  %v2405 = vrcp.pop %v2390
  %v2406 = vmul.f32 1.0, %v2405
  %v2407 = vtanh.pop %v2352
  %v2408 = vtanh.pop %v2354
  %v2409 = vtanh.pop %v2356
  %v2410 = vtanh.pop %v2358
  %v2411 = vmul.f32 %v2392, %v2156
  %v2412 = vmul.f32 %v2396, %v2157
  %v2413 = vmul.f32 %v2400, %v2158
  %v2414 = vmul.f32 %v2404, %v2159
  %2419 = vrot.lane.b32.xlu0 %v2407, 64
  %v2420 = vpop.permute.xlu0 %2419
  %2421 = vrot.lane.b32.xlu0 %v2408, 64
  %v2422 = vpop.permute.xlu0 %2421
  %2423 = vrot.lane.b32.xlu0 %v2409, 64
  %v2424 = vpop.permute.xlu0 %2423
  %2425 = vrot.lane.b32.xlu0 %v2410, 64
  %v2426 = vpop.permute.xlu0 %2425
  %v2431 = vmul.f32 %v2392, %v2420
  %v2432 = vmul.f32 %v2396, %v2422
  %v2433 = vmul.f32 %v2400, %v2424
  %v2434 = vmul.f32 %v2404, %v2426
  %2439 = vrot.lane.b32.xlu0 %v2431, 64
  %v2440 = vpop.permute.xlu0 %2439
  %2441 = vrot.lane.b32.xlu0 %v2432, 64
  %v2442 = vpop.permute.xlu0 %2441
  %2443 = vrot.lane.b32.xlu0 %v2433, 64
  %v2444 = vpop.permute.xlu0 %2443
  %2445 = vrot.lane.b32.xlu0 %v2434, 64
  %v2446 = vpop.permute.xlu0 %2445
  %v2451 = vadd.f32 %v2411, %v2440
  %v2452 = vadd.f32 %v2412, %v2442
  %v2453 = vadd.f32 %v2413, %v2444
  %v2454 = vadd.f32 %v2414, %v2446
  %v2455 = vtanh.pop %v2451
  %v2456 = vtanh.pop %v2452
  %v2457 = vtanh.pop %v2453
  %v2458 = vtanh.pop %v2454
  %2463 = vrot.lane.b32.xlu0 %v2455, 64
  %v2464 = vpop.permute.xlu0 %2463
  %2465 = vrot.lane.b32.xlu0 %v2456, 64
  %v2466 = vpop.permute.xlu0 %2465
  %2467 = vrot.lane.b32.xlu0 %v2457, 64
  %v2468 = vpop.permute.xlu0 %2467
  %2469 = vrot.lane.b32.xlu0 %v2458, 64
  %v2470 = vpop.permute.xlu0 %2469
  %v2475 = vmul.f32 %v2394, %v2464
  %v2476 = vmul.f32 %v2398, %v2466
  %v2477 = vmul.f32 %v2402, %v2468
  %v2478 = vmul.f32 %v2406, %v2470
  %v2479 = vsel %vm523, %v2475, -inf
  %v2480 = vsel %vm523, %v2476, -inf
  %v2481 = vmax.f32 %v2479, %v2480
  %v2482 = vrot.slane %v2481, 4
  %v2483 = vmax.f32 %v2481, %v2482
  %v2484 = vrot.slane %v2483, 2
  %v2485 = vmax.f32 %v2483, %v2484
  %v2486 = vrot.slane %v2485, 1
  %v2487 = vmax.f32 %v2485, %v2486
  %v2488 = vsel %vm523, %v2475, 0.0
  %v2489 = vsel %vm523, %v2476, 0.0
  %v2490 = vadd.f32 %v2488, %v2489
  %v2491 = vrot.slane %v2490, 4
  %v2492 = vadd.f32 %v2490, %v2491
  %v2493 = vrot.slane %v2492, 2
  %v2494 = vadd.f32 %v2492, %v2493
  %v2495 = vrot.slane %v2494, 1
  %v2496 = vadd.f32 %v2494, %v2495
  %v2497 = vmul.f32 %v2496, %v726
  %2499 = vrot.lane.b32.xlu0 %v2497, 64
  %v2500 = vpop.permute.xlu0 %2499
  %v2502 = vsel %vm523, %v2487, %v2500
  %2503 = vst [vmem:[#allocation3 + $0x6] sm:$0x1] %v2502
  %v2504 = vsel %vm523, %v2477, -inf
  %v2505 = vsel %vm523, %v2478, -inf
  %v2506 = vmax.f32 %v2504, %v2505
  %v2507 = vrot.slane %v2506, 4
  %v2508 = vmax.f32 %v2506, %v2507
  %v2509 = vrot.slane %v2508, 2
  %v2510 = vmax.f32 %v2508, %v2509
  %v2511 = vrot.slane %v2510, 1
  %v2512 = vmax.f32 %v2510, %v2511
  %v2513 = vsel %vm523, %v2477, 0.0
  %v2514 = vsel %vm523, %v2478, 0.0
  %v2515 = vadd.f32 %v2513, %v2514
  %v2516 = vrot.slane %v2515, 4
  %v2517 = vadd.f32 %v2515, %v2516
  %v2518 = vrot.slane %v2517, 2
  %v2519 = vadd.f32 %v2517, %v2518
  %v2520 = vrot.slane %v2519, 1
  %v2521 = vadd.f32 %v2519, %v2520
  %v2522 = vmul.f32 %v2521, %v726
  %2524 = vrot.lane.b32.xlu0 %v2522, 64
  %v2525 = vpop.permute.xlu0 %2524
  %v2527 = vsel %vm523, %v2512, %v2525
  %2528 = vst [vmem:[#allocation4 + $0x6] sm:$0x1] %v2527
  %v2529 = vld [vmem:[#allocation2 + $0x1c0] sm:$0xff]
  %v2530 = vld [vmem:[#allocation2 + $0x1c8] sm:$0xff]
  %v2531 = vld [vmem:[#allocation2 + $0x1d0] sm:$0xff]
  %v2532 = vld [vmem:[#allocation2 + $0x1d8] sm:$0xff]
  %v2533 = vld [vmem:[#allocation2 + $0x1e0] sm:$0xff]
  %v2534 = vld [vmem:[#allocation2 + $0x1e8] sm:$0xff]
  %v2535 = vld [vmem:[#allocation2 + $0x1f0] sm:$0xff]
  %v2536 = vld [vmem:[#allocation2 + $0x1f8] sm:$0xff]
  %v2537 = vpack.c.bf16 %v2476, %v2475
  %v2538 = vpack.c.bf16 %v2478, %v2477
  %v2539 = vld [vmem:[%s2] sm:$0xff]
  %v2540 = vld [vmem:[%s2 + $0x8] sm:$0xff]
  %v2541 = vld [vmem:[%s2 + $0x10] sm:$0xff]
  %v2542 = vld [vmem:[%s2 + $0x18] sm:$0xff]
  %v2543 = vld [vmem:[%s2 + $0x20] sm:$0xff]
  %v2544 = vld [vmem:[%s2 + $0x28] sm:$0xff]
  %v2545 = vld [vmem:[%s2 + $0x30] sm:$0xff]
  %v2546 = vld [vmem:[%s2 + $0x38] sm:$0xff]
  %v2555 = vunpack.c.l.b16 %v2539
  %v2556 = vunpack.c.h.b16 %v2539
  %v2557 = vunpack.c.l.b16 %v2540
  %v2558 = vunpack.c.h.b16 %v2540
  %v2559 = vunpack.c.l.b16 %v2541
  %v2560 = vunpack.c.h.b16 %v2541
  %v2561 = vunpack.c.l.b16 %v2542
  %v2562 = vunpack.c.h.b16 %v2542
  %v2563 = vunpack.c.l.b16 %v2543
  %v2564 = vunpack.c.h.b16 %v2543
  %v2565 = vunpack.c.l.b16 %v2544
  %v2566 = vunpack.c.h.b16 %v2544
  %v2567 = vunpack.c.l.b16 %v2545
  %v2568 = vunpack.c.h.b16 %v2545
  %v2569 = vunpack.c.l.b16 %v2546
  %v2570 = vunpack.c.h.b16 %v2546
  %v2571 = vpack.c.b16 %v2557, %v2555
  %v2572 = vpack.c.b16 %v2558, %v2556
  %v2573 = vpack.c.b16 %v2561, %v2559
  %v2574 = vpack.c.b16 %v2562, %v2560
  %v2575 = vpack.c.b16 %v2565, %v2563
  %v2576 = vpack.c.b16 %v2566, %v2564
  %v2577 = vpack.c.b16 %v2569, %v2567
  %v2578 = vpack.c.b16 %v2570, %v2568
  %v2588 = vsel %vm523, %v2537, 0
  %v2591 = vsel %vm523, %v2538, 0
  %2593 = vmatprep.subr.bf16.mxu0 0
  %2594 = vmatpush1.bf16.msra.mxu0 0
  %2595 = vmatprep.subr.bf16.mxu0 0
  %2596 = vmatpush1.bf16.msra.mxu0 0
  %2597 = vmatprep.subr.bf16.mxu0 0
  %2598 = vmatpush1.bf16.msra.mxu0 0
  %2599 = vmatprep.subr.bf16.mxu0 0
  %2600 = vmatpush1.bf16.msra.mxu0 0
  %2601 = vmatprep.subr.bf16.mxu0 %v2578
  %2602 = vmatpush1.bf16.msra.mxu0 %v2577
  %2603 = vmatprep.subr.bf16.mxu0 %v2576
  %2604 = vmatpush1.bf16.msra.mxu0 %v2575
  %2605 = vmatprep.subr.bf16.mxu0 %v2574
  %2606 = vmatpush1.bf16.msra.mxu0 %v2573
  %2607 = vmatprep.subr.bf16.mxu0 %v2572
  %2608 = vmatpush1.bf16.msra.mxu0 %v2571
  %2609 = vmatprep.subr.bf16.mxu0 0
  %2610 = vmatpush2.bf16.msra.mxu0 0
  %2611 = vmatprep.subr.bf16.mxu0 0
  %2612 = vmatpush2.bf16.msra.mxu0 0
  %2613 = vmatprep.subr.bf16.mxu0 0
  %2614 = vmatpush2.bf16.msra.mxu0 0
  %2615 = vmatprep.subr.bf16.mxu0 0
  %2616 = vmatpush2.bf16.msra.mxu0 0
  %2617 = vmatprep.subr.bf16.mxu0 0
  %2618 = vmatpush2.bf16.msra.mxu0 0
  %2619 = vmatprep.subr.bf16.mxu0 0
  %2620 = vmatpush2.bf16.msra.mxu0 0
  %2621 = vmatprep.subr.bf16.mxu0 0
  %2622 = vmatpush2.bf16.msra.mxu0 0
  %2623 = vmatprep.subr.bf16.mxu0 0
  %2624 = vmatpush2.bf16.msra.mxu0 0
  %2625 = vmatprep.mubr.bf16.mxu0 0
  %2626 = vmatmul.mubr.bf16.gmra.mxu0 %v2588
  %v2627 = vpop.f32.mrf.mxu0
  %v2628 = vadd.f32 0.0, %v2627
  %v2629 = vpop.f32.mrf.mxu0
  %v2630 = vadd.f32 0.0, %v2629
  %v2631 = vpop.f32.mrf.mxu0
  %v2632 = vadd.f32 0.0, %v2631
  %v2633 = vpop.f32.mrf.mxu0
  %v2634 = vadd.f32 0.0, %v2633
  %2635 = vmatprep.mubr.bf16.mxu0 0
  %2636 = vmatmul.mubr.bf16.gmra.mxu0 %v2591
  %v2637 = vpop.f32.mrf.mxu0
  %v2638 = vadd.f32 0.0, %v2637
  %v2639 = vpop.f32.mrf.mxu0
  %v2640 = vadd.f32 0.0, %v2639
  %v2641 = vpop.f32.mrf.mxu0
  %v2642 = vadd.f32 0.0, %v2641
  %v2643 = vpop.f32.mrf.mxu0
  %v2644 = vadd.f32 0.0, %v2643
  %2645 = vdwg.mxu0
  %v2646 = vadd.f32 %v2529, %v2628
  %v2647 = vadd.f32 %v2530, %v2630
  %v2648 = vadd.f32 %v2531, %v2632
  %v2649 = vadd.f32 %v2532, %v2634
  %v2650 = vadd.f32 %v2533, %v2638
  %v2651 = vadd.f32 %v2534, %v2640
  %v2652 = vadd.f32 %v2535, %v2642
  %v2653 = vadd.f32 %v2536, %v2644
  %v2654 = vxor.u32 %v2646, 2147483648
  %v2655 = vxor.u32 %v2647, 2147483648
  %v2656 = vxor.u32 %v2648, 2147483648
  %v2657 = vxor.u32 %v2649, 2147483648
  %v2658 = vxor.u32 %v2650, 2147483648
  %v2659 = vxor.u32 %v2651, 2147483648
  %v2660 = vxor.u32 %v2652, 2147483648
  %v2661 = vxor.u32 %v2653, 2147483648
  %v2662 = vmul.f32 %v2654, 1.442695
  %v2663 = vpow.pop %v2662
  %v2664 = vmul.f32 %v2655, 1.442695
  %v2665 = vpow.pop %v2664
  %v2666 = vmul.f32 %v2656, 1.442695
  %v2667 = vpow.pop %v2666
  %v2668 = vmul.f32 %v2657, 1.442695
  %v2669 = vpow.pop %v2668
  %v2670 = vmul.f32 %v2658, 1.442695
  %v2671 = vpow.pop %v2670
  %v2672 = vmul.f32 %v2659, 1.442695
  %v2673 = vpow.pop %v2672
  %v2674 = vmul.f32 %v2660, 1.442695
  %v2675 = vpow.pop %v2674
  %v2676 = vmul.f32 %v2661, 1.442695
  %v2677 = vpow.pop %v2676
  %v2678 = vadd.f32 %v2663, 1.0
  %v2679 = vadd.f32 %v2665, 1.0
  %v2680 = vadd.f32 %v2667, 1.0
  %v2681 = vadd.f32 %v2669, 1.0
  %v2682 = vadd.f32 %v2671, 1.0
  %v2683 = vadd.f32 %v2673, 1.0
  %v2684 = vadd.f32 %v2675, 1.0
  %v2685 = vadd.f32 %v2677, 1.0
  %v2686 = vrcp.pop %v2678
  %v2687 = vmul.f32 1.0, %v2686
  %v2688 = vrcp.pop %v2679
  %v2689 = vmul.f32 1.0, %v2688
  %v2690 = vrcp.pop %v2680
  %v2691 = vmul.f32 1.0, %v2690
  %v2692 = vrcp.pop %v2681
  %v2693 = vmul.f32 1.0, %v2692
  %v2694 = vrcp.pop %v2682
  %v2695 = vmul.f32 1.0, %v2694
  %v2696 = vrcp.pop %v2683
  %v2697 = vmul.f32 1.0, %v2696
  %v2698 = vrcp.pop %v2684
  %v2699 = vmul.f32 1.0, %v2698
  %v2700 = vrcp.pop %v2685
  %v2701 = vmul.f32 1.0, %v2700
  %v2702 = vtanh.pop %v2647
  %v2703 = vtanh.pop %v2649
  %v2704 = vtanh.pop %v2651
  %v2705 = vtanh.pop %v2653
  %v2706 = vmul.f32 %v2687, %v2451
  %v2707 = vmul.f32 %v2691, %v2452
  %v2708 = vmul.f32 %v2695, %v2453
  %v2709 = vmul.f32 %v2699, %v2454
  %2714 = vrot.lane.b32.xlu0 %v2702, 64
  %v2715 = vpop.permute.xlu0 %2714
  %2716 = vrot.lane.b32.xlu0 %v2703, 64
  %v2717 = vpop.permute.xlu0 %2716
  %2718 = vrot.lane.b32.xlu0 %v2704, 64
  %v2719 = vpop.permute.xlu0 %2718
  %2720 = vrot.lane.b32.xlu0 %v2705, 64
  %v2721 = vpop.permute.xlu0 %2720
  %v2726 = vmul.f32 %v2687, %v2715
  %v2727 = vmul.f32 %v2691, %v2717
  %v2728 = vmul.f32 %v2695, %v2719
  %v2729 = vmul.f32 %v2699, %v2721
  %2734 = vrot.lane.b32.xlu0 %v2726, 64
  %v2735 = vpop.permute.xlu0 %2734
  %2736 = vrot.lane.b32.xlu0 %v2727, 64
  %v2737 = vpop.permute.xlu0 %2736
  %2738 = vrot.lane.b32.xlu0 %v2728, 64
  %v2739 = vpop.permute.xlu0 %2738
  %2740 = vrot.lane.b32.xlu0 %v2729, 64
  %v2741 = vpop.permute.xlu0 %2740
  %v2746 = vadd.f32 %v2706, %v2735
  %v2747 = vadd.f32 %v2707, %v2737
  %v2748 = vadd.f32 %v2708, %v2739
  %v2749 = vadd.f32 %v2709, %v2741
  %v2750 = vtanh.pop %v2746
  %v2751 = vtanh.pop %v2747
  %v2752 = vtanh.pop %v2748
  %v2753 = vtanh.pop %v2749
  %2758 = vrot.lane.b32.xlu0 %v2750, 64
  %v2759 = vpop.permute.xlu0 %2758
  %2760 = vrot.lane.b32.xlu0 %v2751, 64
  %v2761 = vpop.permute.xlu0 %2760
  %2762 = vrot.lane.b32.xlu0 %v2752, 64
  %v2763 = vpop.permute.xlu0 %2762
  %2764 = vrot.lane.b32.xlu0 %v2753, 64
  %v2765 = vpop.permute.xlu0 %2764
  %v2770 = vmul.f32 %v2689, %v2759
  %v2771 = vmul.f32 %v2693, %v2761
  %v2772 = vmul.f32 %v2697, %v2763
  %v2773 = vmul.f32 %v2701, %v2765
  %v2774 = vsel %vm523, %v2770, -inf
  %v2775 = vsel %vm523, %v2771, -inf
  %v2776 = vmax.f32 %v2774, %v2775
  %v2777 = vrot.slane %v2776, 4
  %v2778 = vmax.f32 %v2776, %v2777
  %v2779 = vrot.slane %v2778, 2
  %v2780 = vmax.f32 %v2778, %v2779
  %v2781 = vrot.slane %v2780, 1
  %v2782 = vmax.f32 %v2780, %v2781
  %v2783 = vsel %vm523, %v2770, 0.0
  %v2784 = vsel %vm523, %v2771, 0.0
  %v2785 = vadd.f32 %v2783, %v2784
  %v2786 = vrot.slane %v2785, 4
  %v2787 = vadd.f32 %v2785, %v2786
  %v2788 = vrot.slane %v2787, 2
  %v2789 = vadd.f32 %v2787, %v2788
  %v2790 = vrot.slane %v2789, 1
  %v2791 = vadd.f32 %v2789, %v2790
  %v2792 = vmul.f32 %v2791, %v726
  %2794 = vrot.lane.b32.xlu0 %v2792, 64
  %v2795 = vpop.permute.xlu0 %2794
  %v2797 = vsel %vm523, %v2782, %v2795
  %2798 = vst [vmem:[#allocation3 + $0x7] sm:$0x1] %v2797
  %v2799 = vsel %vm523, %v2772, -inf
  %v2800 = vsel %vm523, %v2773, -inf
  %v2801 = vmax.f32 %v2799, %v2800
  %v2802 = vrot.slane %v2801, 4
  %v2803 = vmax.f32 %v2801, %v2802
  %v2804 = vrot.slane %v2803, 2
  %v2805 = vmax.f32 %v2803, %v2804
  %v2806 = vrot.slane %v2805, 1
  %v2807 = vmax.f32 %v2805, %v2806
  %v2808 = vsel %vm523, %v2772, 0.0
  %v2809 = vsel %vm523, %v2773, 0.0
  %v2810 = vadd.f32 %v2808, %v2809
  %v2811 = vrot.slane %v2810, 4
  %v2812 = vadd.f32 %v2810, %v2811
  %v2813 = vrot.slane %v2812, 2
  %v2814 = vadd.f32 %v2812, %v2813
  %v2815 = vrot.slane %v2814, 1
  %v2816 = vadd.f32 %v2814, %v2815
  %v2817 = vmul.f32 %v2816, %v726
  %2819 = vrot.lane.b32.xlu0 %v2817, 64
  %v2820 = vpop.permute.xlu0 %2819
  %v2822 = vsel %vm523, %v2807, %v2820
  %2823 = vst [vmem:[#allocation4 + $0x7] sm:$0x1] %v2822
  %v2824 = vld [vmem:[#allocation3] sm:$0xff]
  %v2825 = vld [vmem:[#allocation4] sm:$0xff]
  %v2826 = vsub.f32 %v2824, %v2825
  %v2827 = vand.u32 2147483647, %v2826
  %v2828 = vmul.f32 %v2824, %v2825
  %v2829 = vpack.c.bf16 %v2824, %v2824
  %v2830 = vpack.c.bf16 %v2825, %v2825
  %v2831 = vpack.c.bf16 %v2827, %v2827
  %v2832 = vpack.c.bf16 %v2828, %v2828
  %v2833 = vld [vmem:[%s4] sm:$0xf]
  %v2834 = vld [vmem:[%s4 + $0x4] sm:$0xf]
  %v2835 = vld [vmem:[%s4 + $0x8] sm:$0xf]
  %v2836 = vld [vmem:[%s4 + $0xc] sm:$0xf]
  %v2837 = vld [vmem:[%s4 + $0x10] sm:$0xf]
  %v2838 = vld [vmem:[%s4 + $0x14] sm:$0xf]
  %v2839 = vld [vmem:[%s4 + $0x18] sm:$0xf]
  %v2840 = vld [vmem:[%s4 + $0x1c] sm:$0xf]
  %v2841 = vld [vmem:[%s4 + $0x20] sm:$0xf]
  %v2842 = vld [vmem:[%s4 + $0x24] sm:$0xf]
  %v2843 = vld [vmem:[%s4 + $0x28] sm:$0xf]
  %v2844 = vld [vmem:[%s4 + $0x2c] sm:$0xf]
  %v2845 = vld [vmem:[%s4 + $0x30] sm:$0xf]
  %v2846 = vld [vmem:[%s4 + $0x34] sm:$0xf]
  %v2847 = vld [vmem:[%s4 + $0x38] sm:$0xf]
  %v2848 = vld [vmem:[%s4 + $0x3c] sm:$0xf]
  %v2849 = vld [vmem:[%s4 + $0x40] sm:$0xf]
  %v2850 = vld [vmem:[%s4 + $0x44] sm:$0xf]
  %v2851 = vld [vmem:[%s4 + $0x48] sm:$0xf]
  %v2852 = vld [vmem:[%s4 + $0x4c] sm:$0xf]
  %v2853 = vld [vmem:[%s4 + $0x50] sm:$0xf]
  %v2854 = vld [vmem:[%s4 + $0x54] sm:$0xf]
  %v2855 = vld [vmem:[%s4 + $0x58] sm:$0xf]
  %v2856 = vld [vmem:[%s4 + $0x5c] sm:$0xf]
  %v2857 = vld [vmem:[%s4 + $0x60] sm:$0xf]
  %v2858 = vld [vmem:[%s4 + $0x64] sm:$0xf]
  %v2859 = vld [vmem:[%s4 + $0x68] sm:$0xf]
  %v2860 = vld [vmem:[%s4 + $0x6c] sm:$0xf]
  %v2861 = vld [vmem:[%s4 + $0x70] sm:$0xf]
  %v2862 = vld [vmem:[%s4 + $0x74] sm:$0xf]
  %v2863 = vld [vmem:[%s4 + $0x78] sm:$0xf]
  %v2864 = vld [vmem:[%s4 + $0x7c] sm:$0xf]
  %v2865 = vld [vmem:[%s4 + $0x80] sm:$0xf]
  %v2866 = vld [vmem:[%s4 + $0x84] sm:$0xf]
  %v2867 = vld [vmem:[%s4 + $0x88] sm:$0xf]
  %v2868 = vld [vmem:[%s4 + $0x8c] sm:$0xf]
  %v2869 = vld [vmem:[%s4 + $0x90] sm:$0xf]
  %v2870 = vld [vmem:[%s4 + $0x94] sm:$0xf]
  %v2871 = vld [vmem:[%s4 + $0x98] sm:$0xf]
  %v2872 = vld [vmem:[%s4 + $0x9c] sm:$0xf]
  %v2873 = vld [vmem:[%s4 + $0xa0] sm:$0xf]
  %v2874 = vld [vmem:[%s4 + $0xa4] sm:$0xf]
  %v2875 = vld [vmem:[%s4 + $0xa8] sm:$0xf]
  %v2876 = vld [vmem:[%s4 + $0xac] sm:$0xf]
  %v2877 = vld [vmem:[%s4 + $0xb0] sm:$0xf]
  %v2878 = vld [vmem:[%s4 + $0xb4] sm:$0xf]
  %v2879 = vld [vmem:[%s4 + $0xb8] sm:$0xf]
  %v2880 = vld [vmem:[%s4 + $0xbc] sm:$0xf]
  %v2881 = vld [vmem:[%s4 + $0xc0] sm:$0xf]
  %v2882 = vld [vmem:[%s4 + $0xc4] sm:$0xf]
  %v2883 = vld [vmem:[%s4 + $0xc8] sm:$0xf]
  %v2884 = vld [vmem:[%s4 + $0xcc] sm:$0xf]
  %v2885 = vld [vmem:[%s4 + $0xd0] sm:$0xf]
  %v2886 = vld [vmem:[%s4 + $0xd4] sm:$0xf]
  %v2887 = vld [vmem:[%s4 + $0xd8] sm:$0xf]
  %v2888 = vld [vmem:[%s4 + $0xdc] sm:$0xf]
  %v2889 = vld [vmem:[%s4 + $0xe0] sm:$0xf]
  %v2890 = vld [vmem:[%s4 + $0xe4] sm:$0xf]
  %v2891 = vld [vmem:[%s4 + $0xe8] sm:$0xf]
  %v2892 = vld [vmem:[%s4 + $0xec] sm:$0xf]
  %v2893 = vld [vmem:[%s4 + $0xf0] sm:$0xf]
  %v2894 = vld [vmem:[%s4 + $0xf4] sm:$0xf]
  %v2895 = vld [vmem:[%s4 + $0xf8] sm:$0xf]
  %v2896 = vld [vmem:[%s4 + $0xfc] sm:$0xf]
  %v2897 = vld [vmem:[%s5] sm:$0x1]
  %v2899 = vlaneseq
  %v2900 = vshrl.u32 %v2899, 7
  %v2901 = vsub.s32 0, %v2900
  %v2902 = vrot.slane %v2897, %v2901
  %v2968 = vunpack.c.l.b16 %v2833
  %v2969 = vunpack.c.l.b16 %v2834
  %v2970 = vunpack.c.l.b16 %v2835
  %v2971 = vunpack.c.l.b16 %v2836
  %v2972 = vunpack.c.l.b16 %v2837
  %v2973 = vunpack.c.l.b16 %v2838
  %v2974 = vunpack.c.l.b16 %v2839
  %v2975 = vunpack.c.l.b16 %v2840
  %v2976 = vunpack.c.l.b16 %v2841
  %v2977 = vunpack.c.l.b16 %v2842
  %v2978 = vunpack.c.l.b16 %v2843
  %v2979 = vunpack.c.l.b16 %v2844
  %v2980 = vunpack.c.l.b16 %v2845
  %v2981 = vunpack.c.l.b16 %v2846
  %v2982 = vunpack.c.l.b16 %v2847
  %v2983 = vunpack.c.l.b16 %v2848
  %v2984 = vunpack.c.l.b16 %v2849
  %v2985 = vunpack.c.l.b16 %v2850
  %v2986 = vunpack.c.l.b16 %v2851
  %v2987 = vunpack.c.l.b16 %v2852
  %v2988 = vunpack.c.l.b16 %v2853
  %v2989 = vunpack.c.l.b16 %v2854
  %v2990 = vunpack.c.l.b16 %v2855
  %v2991 = vunpack.c.l.b16 %v2856
  %v2992 = vunpack.c.l.b16 %v2857
  %v2993 = vunpack.c.l.b16 %v2858
  %v2994 = vunpack.c.l.b16 %v2859
  %v2995 = vunpack.c.l.b16 %v2860
  %v2996 = vunpack.c.l.b16 %v2861
  %v2997 = vunpack.c.l.b16 %v2862
  %v2998 = vunpack.c.l.b16 %v2863
  %v2999 = vunpack.c.l.b16 %v2864
  %v3000 = vunpack.c.l.b16 %v2865
  %v3001 = vunpack.c.l.b16 %v2866
  %v3002 = vunpack.c.l.b16 %v2867
  %v3003 = vunpack.c.l.b16 %v2868
  %v3004 = vunpack.c.l.b16 %v2869
  %v3005 = vunpack.c.l.b16 %v2870
  %v3006 = vunpack.c.l.b16 %v2871
  %v3007 = vunpack.c.l.b16 %v2872
  %v3008 = vunpack.c.l.b16 %v2873
  %v3009 = vunpack.c.l.b16 %v2874
  %v3010 = vunpack.c.l.b16 %v2875
  %v3011 = vunpack.c.l.b16 %v2876
  %v3012 = vunpack.c.l.b16 %v2877
  %v3013 = vunpack.c.l.b16 %v2878
  %v3014 = vunpack.c.l.b16 %v2879
  %v3015 = vunpack.c.l.b16 %v2880
  %v3016 = vunpack.c.l.b16 %v2881
  %v3017 = vunpack.c.l.b16 %v2882
  %v3018 = vunpack.c.l.b16 %v2883
  %v3019 = vunpack.c.l.b16 %v2884
  %v3020 = vunpack.c.l.b16 %v2885
  %v3021 = vunpack.c.l.b16 %v2886
  %v3022 = vunpack.c.l.b16 %v2887
  %v3023 = vunpack.c.l.b16 %v2888
  %v3024 = vunpack.c.l.b16 %v2889
  %v3025 = vunpack.c.l.b16 %v2890
  %v3026 = vunpack.c.l.b16 %v2891
  %v3027 = vunpack.c.l.b16 %v2892
  %v3028 = vunpack.c.l.b16 %v2893
  %v3029 = vunpack.c.l.b16 %v2894
  %v3030 = vunpack.c.l.b16 %v2895
  %v3031 = vunpack.c.l.b16 %v2896
  %v3032 = vpack.c.b16 %v2969, %v2968
  %v3033 = vpack.c.b16 %v2971, %v2970
  %v3034 = vpack.c.b16 %v2973, %v2972
  %v3035 = vpack.c.b16 %v2975, %v2974
  %v3036 = vpack.c.b16 %v2977, %v2976
  %v3037 = vpack.c.b16 %v2979, %v2978
  %v3038 = vpack.c.b16 %v2981, %v2980
  %v3039 = vpack.c.b16 %v2983, %v2982
  %v3040 = vpack.c.b16 %v2985, %v2984
  %v3041 = vpack.c.b16 %v2987, %v2986
  %v3042 = vpack.c.b16 %v2989, %v2988
  %v3043 = vpack.c.b16 %v2991, %v2990
  %v3044 = vpack.c.b16 %v2993, %v2992
  %v3045 = vpack.c.b16 %v2995, %v2994
  %v3046 = vpack.c.b16 %v2997, %v2996
  %v3047 = vpack.c.b16 %v2999, %v2998
  %v3048 = vpack.c.b16 %v3001, %v3000
  %v3049 = vpack.c.b16 %v3003, %v3002
  %v3050 = vpack.c.b16 %v3005, %v3004
  %v3051 = vpack.c.b16 %v3007, %v3006
  %v3052 = vpack.c.b16 %v3009, %v3008
  %v3053 = vpack.c.b16 %v3011, %v3010
  %v3054 = vpack.c.b16 %v3013, %v3012
  %v3055 = vpack.c.b16 %v3015, %v3014
  %v3056 = vpack.c.b16 %v3017, %v3016
  %v3057 = vpack.c.b16 %v3019, %v3018
  %v3058 = vpack.c.b16 %v3021, %v3020
  %v3059 = vpack.c.b16 %v3023, %v3022
  %v3060 = vpack.c.b16 %v3025, %v3024
  %v3061 = vpack.c.b16 %v3027, %v3026
  %v3062 = vpack.c.b16 %v3029, %v3028
  %v3063 = vpack.c.b16 %v3031, %v3030
  %3096 = vmatprep.subr.bf16.mxu0 0
  %3097 = vmatpush1.bf16.msra.mxu0 %v3039
  %3098 = vmatprep.subr.bf16.mxu0 0
  %3099 = vmatpush1.bf16.msra.mxu0 %v3038
  %3100 = vmatprep.subr.bf16.mxu0 0
  %3101 = vmatpush1.bf16.msra.mxu0 %v3037
  %3102 = vmatprep.subr.bf16.mxu0 0
  %3103 = vmatpush1.bf16.msra.mxu0 %v3036
  %3104 = vmatprep.subr.bf16.mxu0 0
  %3105 = vmatpush1.bf16.msra.mxu0 %v3035
  %3106 = vmatprep.subr.bf16.mxu0 0
  %3107 = vmatpush1.bf16.msra.mxu0 %v3034
  %3108 = vmatprep.subr.bf16.mxu0 0
  %3109 = vmatpush1.bf16.msra.mxu0 %v3033
  %3110 = vmatprep.subr.bf16.mxu0 0
  %3111 = vmatpush1.bf16.msra.mxu0 %v3032
  %3112 = vmatprep.subr.bf16.mxu0 0
  %3113 = vmatpush2.bf16.msra.mxu0 %v3047
  %3114 = vmatprep.subr.bf16.mxu0 0
  %3115 = vmatpush2.bf16.msra.mxu0 %v3046
  %3116 = vmatprep.subr.bf16.mxu0 0
  %3117 = vmatpush2.bf16.msra.mxu0 %v3045
  %3118 = vmatprep.subr.bf16.mxu0 0
  %3119 = vmatpush2.bf16.msra.mxu0 %v3044
  %3120 = vmatprep.subr.bf16.mxu0 0
  %3121 = vmatpush2.bf16.msra.mxu0 %v3043
  %3122 = vmatprep.subr.bf16.mxu0 0
  %3123 = vmatpush2.bf16.msra.mxu0 %v3042
  %3124 = vmatprep.subr.bf16.mxu0 0
  %3125 = vmatpush2.bf16.msra.mxu0 %v3041
  %3126 = vmatprep.subr.bf16.mxu0 0
  %3127 = vmatpush2.bf16.msra.mxu0 %v3040
  %3128 = vmatprep.mubr.bf16.mxu0 %v2830
  %3129 = vmatmul.mubr.bf16.gmra.mxu0 %v2829
  %v3130 = vpop.f32.mrf.mxu0
  %v3131 = vadd.f32 %v2902, %v3130
  %v3132 = vpop.f32.mrf.mxu0
  %v3133 = vpop.f32.mrf.mxu0
  %v3134 = vpop.f32.mrf.mxu0
  %3135 = vdwg.mxu0
  %3136 = vmatprep.subr.bf16.mxu0 0
  %3137 = vmatpush1.bf16.msra.mxu0 %v3055
  %3138 = vmatprep.subr.bf16.mxu0 0
  %3139 = vmatpush1.bf16.msra.mxu0 %v3054
  %3140 = vmatprep.subr.bf16.mxu0 0
  %3141 = vmatpush1.bf16.msra.mxu0 %v3053
  %3142 = vmatprep.subr.bf16.mxu0 0
  %3143 = vmatpush1.bf16.msra.mxu0 %v3052
  %3144 = vmatprep.subr.bf16.mxu0 0
  %3145 = vmatpush1.bf16.msra.mxu0 %v3051
  %3146 = vmatprep.subr.bf16.mxu0 0
  %3147 = vmatpush1.bf16.msra.mxu0 %v3050
  %3148 = vmatprep.subr.bf16.mxu0 0
  %3149 = vmatpush1.bf16.msra.mxu0 %v3049
  %3150 = vmatprep.subr.bf16.mxu0 0
  %3151 = vmatpush1.bf16.msra.mxu0 %v3048
  %3152 = vmatprep.subr.bf16.mxu0 0
  %3153 = vmatpush2.bf16.msra.mxu0 %v3063
  %3154 = vmatprep.subr.bf16.mxu0 0
  %3155 = vmatpush2.bf16.msra.mxu0 %v3062
  %3156 = vmatprep.subr.bf16.mxu0 0
  %3157 = vmatpush2.bf16.msra.mxu0 %v3061
  %3158 = vmatprep.subr.bf16.mxu0 0
  %3159 = vmatpush2.bf16.msra.mxu0 %v3060
  %3160 = vmatprep.subr.bf16.mxu0 0
  %3161 = vmatpush2.bf16.msra.mxu0 %v3059
  %3162 = vmatprep.subr.bf16.mxu0 0
  %3163 = vmatpush2.bf16.msra.mxu0 %v3058
  %3164 = vmatprep.subr.bf16.mxu0 0
  %3165 = vmatpush2.bf16.msra.mxu0 %v3057
  %3166 = vmatprep.subr.bf16.mxu0 0
  %3167 = vmatpush2.bf16.msra.mxu0 %v3056
  %3168 = vmatprep.mubr.bf16.mxu0 %v2832
  %3169 = vmatmul.mubr.bf16.gmra.mxu0 %v2831
  %v3170 = vpop.f32.mrf.mxu0
  %v3171 = vadd.f32 %v3131, %v3170
  %v3172 = vpop.f32.mrf.mxu0
  %v3173 = vpop.f32.mrf.mxu0
  %v3174 = vpop.f32.mrf.mxu0
  %3175 = vdwg.mxu0
  %3176 = vst [vmem:[%s6] sm:$0xff] %v3171
  // Predicated region
  $region26: #{siamese_lstm_forward.1} parent=0 // pred_check
    _
  $region27: #{siamese_lstm_forward.1} parent=0 // pred_check_branch
    %3178 = sbr.rel (0) target = $region29
  $region28: #{siamese_lstm_forward.1} parent=0 // pred_region
    _
  $region29: #{siamese_lstm_forward.1} parent=0 // pred_fallthru
    _
  // Predicated region
  $region30: #{siamese_lstm_forward.1} parent=0 // pred_check
    _
  $region31: #{siamese_lstm_forward.1} parent=0 // pred_check_branch
    %3180 = sbr.rel (0) target = $region33
  $region32: #{siamese_lstm_forward.1} parent=0 // pred_region
    _
  $region33: #{siamese_lstm_forward.1} parent=0 // pred_fallthru
    _

</llo_original>
